<compile_context>
chip_gen: v5e
topology: v5e:2x2
jax: 0.10.0
libtpu: 0.0.40
codegen_flags: <defaults>
</compile_context>

<pallas_src>
import functools

import jax
import jax.numpy as jnp
from jax.experimental import pallas as pl
from jax.experimental.pallas import tpu as pltpu


# ----------------------------------------------------------------------------
# Fused Pallas kernel: [conv3x3 SAME + bias + ReLU] x 2, one batch per grid step
# ----------------------------------------------------------------------------
def _double_conv_kernel(x_ref, w1_ref, b1_ref, w2t_ref, b2_ref, o_ref,
                        xpad1_ref, xpad2_ref, *, H, W, Cin, Cout):
    # x_ref:     (H, W, Cin)        NHWC input tile (batch dim squeezed)
    # w1_ref:    (3, 3, Cin, Cout)  conv1 weights, HWIO, BN scale folded in
    # b1_ref:    (1, Cout)          conv1 folded bias
    # w2t_ref:   (3, 3, Cout, Cout) conv2 weights, HW-(Cout,Cin), scale folded
    # b2_ref:    (Cout, 1)          conv2 folded bias
    # o_ref:     (Cout, H*W)        lane-dense output (NCHW-flat per batch)
    # xpad*_ref: VMEM scratch for the zero-padded (halo) tiles

    # ---- stage 1: conv3x3 + bias + ReLU, accumulator (H*W, Cout) ----
    xpad1_ref[...] = jnp.zeros_like(xpad1_ref)
    xpad1_ref[1:H + 1, 1:W + 1, :] = x_ref[...]
    acc1 = jnp.zeros((H * W, Cout), jnp.float32)
    for kh in range(3):                      # shift-and-matmul over 9 taps
        for kw in range(3):
            patch = xpad1_ref[kh:kh + H, kw:kw + W, :].reshape(H * W, Cin)
            acc1 = acc1 + jnp.dot(patch, w1_ref[kh, kw],
                                  preferred_element_type=jnp.float32)
    y1 = jnp.maximum(acc1 + b1_ref[...], 0.0)            # (H*W, Cout)

    # ---- stage 2: conv3x3 + bias + ReLU, accumulated transposed so the ----
    # ---- output store is lane-dense: (Cout, H*W) with H*W on lanes      ----
    xpad2_ref[...] = jnp.zeros_like(xpad2_ref)
    xpad2_ref[1:H + 1, 1:W + 1, :] = y1.reshape(H, W, Cout)
    acc2 = jnp.zeros((Cout, H * W), jnp.float32)
    for kh in range(3):
        for kw in range(3):
            patch = xpad2_ref[kh:kh + H, kw:kw + W, :].reshape(H * W, Cout)
            # w2t[kh,kw] is (Cout_out, Cout_in); contract its dim 1 with the
            # patch channel dim -> result (Cout, H*W), no explicit transpose.
            acc2 = acc2 + jax.lax.dot_general(
                w2t_ref[kh, kw], patch,
                dimension_numbers=(((1,), (1,)), ((), ())),
                preferred_element_type=jnp.float32)
    y2 = jnp.maximum(acc2 + b2_ref[...], 0.0)             # (Cout, H*W)
    o_ref[...] = y2.astype(o_ref.dtype)


def _fold_bn(w_oihw, conv_bias, gamma, beta, mean, var, eps=1e-5):
    """Fold eval-mode BatchNorm into conv weight / bias."""
    scale = gamma / jnp.sqrt(var + eps)                   # (Cout,)
    w_folded = w_oihw * scale[:, None, None, None]
    bias = (conv_bias - mean) * scale + beta
    return w_folded, bias


def double_conv_forward(x_nchw, params, eps=1e-5):
    """Equivalent of DoubleConv.forward(x) (NCHW in / NCHW out, BN eval mode)."""
    B, Cin, H, W = x_nchw.shape
    Cout = params["w1"].shape[0]

    w1f, b1 = _fold_bn(params["w1"], params["cb1"], params["g1"],
                       params["be1"], params["m1"], params["v1"], eps)
    w2f, b2 = _fold_bn(params["w2"], params["cb2"], params["g2"],
                       params["be2"], params["m2"], params["v2"], eps)
    # conv1 weights as HWIO (for patch @ w), conv2 as HW-(Cout,Cin) (for the
    # transposed-contraction dot_general).
    w1_hwio = jnp.transpose(w1f, (2, 3, 1, 0))            # (3,3,Cin,Cout)
    w2_hwoi = jnp.transpose(w2f, (2, 3, 0, 1))            # (3,3,Cout,Cout)

    x_nhwc = jnp.transpose(x_nchw, (0, 2, 3, 1))          # layout plumbing only

    kernel = functools.partial(_double_conv_kernel, H=H, W=W, Cin=Cin, Cout=Cout)
    out_flat = pl.pallas_call(
        kernel,
        out_shape=jax.ShapeDtypeStruct((B, Cout, H * W), x_nchw.dtype),
        grid=(B,),
        in_specs=[
            pl.BlockSpec((None, H, W, Cin), lambda b: (b, 0, 0, 0)),
            pl.BlockSpec((3, 3, Cin, Cout), lambda b: (0, 0, 0, 0)),
            pl.BlockSpec((1, Cout), lambda b: (0, 0)),
            pl.BlockSpec((3, 3, Cout, Cout), lambda b: (0, 0, 0, 0)),
            pl.BlockSpec((Cout, 1), lambda b: (0, 0)),
        ],
        out_specs=pl.BlockSpec((None, Cout, H * W), lambda b: (b, 0, 0)),
        scratch_shapes=[
            pltpu.VMEM((H + 2, W + 2, Cin), jnp.float32),   # padded conv1 input
            pltpu.VMEM((H + 2, W + 2, Cout), jnp.float32),  # padded conv2 input
        ],
        compiler_params=pltpu.CompilerParams(
            dimension_semantics=("parallel",)),
    )(x_nhwc, w1_hwio, b1.reshape(1, Cout), w2_hwoi, b2.reshape(Cout, 1))

    return out_flat.reshape(B, Cout, H, W)                # NCHW, free reshape


# ----------------------------------------------------------------------------
# Pure-JAX reference (explicit conv + BN + ReLU) for verification
# ----------------------------------------------------------------------------
def _ref_double_conv(x_nchw, params, eps=1e-5):
    def stage(x, w, cb, g, be, m, v):
        y = jax.lax.conv_general_dilated(
            x, w, window_strides=(1, 1), padding="SAME",
            dimension_numbers=("NCHW", "OIHW", "NCHW"),
            precision=jax.lax.Precision.HIGHEST)
        y = y + cb[None, :, None, None]
        y = (y - m[None, :, None, None]) * (
            g[None, :, None, None] / jnp.sqrt(v[None, :, None, None] + eps)
        ) + be[None, :, None, None]
        return jnp.maximum(y, 0.0)

    y = stage(x_nchw, params["w1"], params["cb1"], params["g1"],
              params["be1"], params["m1"], params["v1"])
    y = stage(y, params["w2"], params["cb2"], params["g2"],
              params["be2"], params["m2"], params["v2"])
    return y


if __name__ == "__main__":
    # DoubleConv(in_channels=8, out_channels=4), input (B, Cin, H, W)
    B, IN_CH, OUT_CH, H, W = 2, 8, 4, 16, 16

    key = jax.random.PRNGKey(0)
    keys = jax.random.split(key, 13)

    x = jax.random.normal(keys[0], (B, IN_CH, H, W), dtype=jnp.float32)

    params = dict(
        # conv1 / bn1
        w1=0.1 * jax.random.normal(keys[1], (OUT_CH, IN_CH, 3, 3), jnp.float32),
        cb1=0.05 * jax.random.normal(keys[2], (OUT_CH,), jnp.float32),
        g1=1.0 + 0.1 * jax.random.normal(keys[3], (OUT_CH,), jnp.float32),
        be1=0.1 * jax.random.normal(keys[4], (OUT_CH,), jnp.float32),
        m1=0.1 * jax.random.normal(keys[5], (OUT_CH,), jnp.float32),
        v1=0.5 + jnp.abs(jax.random.normal(keys[6], (OUT_CH,), jnp.float32)),
        # conv2 / bn2
        w2=0.1 * jax.random.normal(keys[7], (OUT_CH, OUT_CH, 3, 3), jnp.float32),
        cb2=0.05 * jax.random.normal(keys[8], (OUT_CH,), jnp.float32),
        g2=1.0 + 0.1 * jax.random.normal(keys[9], (OUT_CH,), jnp.float32),
        be2=0.1 * jax.random.normal(keys[10], (OUT_CH,), jnp.float32),
        m2=0.1 * jax.random.normal(keys[11], (OUT_CH,), jnp.float32),
        v2=0.5 + jnp.abs(jax.random.normal(keys[12], (OUT_CH,), jnp.float32)),
    )

    out = jax.block_until_ready(double_conv_forward(x, params))
    assert out.shape == (B, OUT_CH, H, W), out.shape

    ref = jax.block_until_ready(_ref_double_conv(x, params))
    assert jnp.allclose(out, ref, atol=1e-4, rtol=1e-4), \
        float(jnp.max(jnp.abs(out - ref)))

    print("KERNEL_OK")
</pallas_src>

<mosaic_0001>
module attributes {stable_mosaic.version = 11 : i64} {
  func.func @_double_conv_kernel(%arg0: i32, %arg1: memref<1x16x16x8xf32, #tpu.memory_space<vmem>>, %arg2: memref<3x3x8x4xf32, #tpu.memory_space<vmem>>, %arg3: memref<1x4xf32, #tpu.memory_space<vmem>>, %arg4: memref<3x3x4x4xf32, #tpu.memory_space<vmem>>, %arg5: memref<4x1xf32, #tpu.memory_space<vmem>>, %arg6: memref<1x4x256xf32, #tpu.memory_space<vmem>>, %arg7: memref<18x18x8xf32, #tpu.memory_space<vmem>>, %arg8: memref<18x18x4xf32, #tpu.memory_space<vmem>>) attributes {dimension_semantics = [#tpu.dimension_semantics<parallel>], iteration_bounds = array<i64: 2>, scalar_prefetch = 0 : i64, scratch_operands = 2 : i64, tpu.core_type = #tpu.core_type<tc>, window_params = [{transform_indices = @transform_0, window_bounds = array<i64: 1, 16, 16, 8>}, {pipeline_mode = #tpu.pipeline_mode<synchronous>, transform_indices = @transform_1, window_bounds = array<i64: 3, 3, 8, 4>}, {pipeline_mode = #tpu.pipeline_mode<synchronous>, transform_indices = @transform_2, window_bounds = array<i64: 1, 4>}, {pipeline_mode = #tpu.pipeline_mode<synchronous>, transform_indices = @transform_3, window_bounds = array<i64: 3, 3, 4, 4>}, {pipeline_mode = #tpu.pipeline_mode<synchronous>, transform_indices = @transform_4, window_bounds = array<i64: 4, 1>}, {transform_indices = @transform_5, window_bounds = array<i64: 1, 4, 256>}]} {
    %cst = arith.constant 0.000000e+00 : f32
    %0 = vector.broadcast %cst : f32 to vector<18x18x8xf32>
    %c0 = arith.constant 0 : index
    %c0_0 = arith.constant 0 : index
    %c0_1 = arith.constant 0 : index
    %1 = vector.load %arg7[%c0, %c0_0, %c0_1] : memref<18x18x8xf32, #tpu.memory_space<vmem>>, vector<18x18x8xf32>
    tpu.vector_store %arg7[%c0, %c0_0, %c0_1], %0 {strides = array<i32>} : memref<18x18x8xf32, #tpu.memory_space<vmem>>, vector<18x18x8xf32>,
    %c0_2 = arith.constant 0 : index
    %c0_3 = arith.constant 0 : index
    %c0_4 = arith.constant 0 : index
    %c0_5 = arith.constant 0 : index
    %2 = vector.load %arg1[%c0_2, %c0_3, %c0_4, %c0_5] : memref<1x16x16x8xf32, #tpu.memory_space<vmem>>, vector<1x16x16x8xf32>
    %3 = vector.shape_cast %2 : vector<1x16x16x8xf32> to vector<16x16x8xf32>
    %c1 = arith.constant 1 : index
    %c1_6 = arith.constant 1 : index
    %c0_7 = arith.constant 0 : index
    %4 = vector.load %arg7[%c1, %c1_6, %c0_7] : memref<18x18x8xf32, #tpu.memory_space<vmem>>, vector<16x16x8xf32>
    tpu.vector_store %arg7[%c1, %c1_6, %c0_7], %3 {strides = array<i32>} : memref<18x18x8xf32, #tpu.memory_space<vmem>>, vector<16x16x8xf32>,
    %cst_8 = arith.constant 0.000000e+00 : f32
    %5 = vector.broadcast %cst_8 : f32 to vector<256x4xf32>
    %c0_9 = arith.constant 0 : index
    %c0_10 = arith.constant 0 : index
    %c0_11 = arith.constant 0 : index
    %6 = vector.load %arg7[%c0_9, %c0_10, %c0_11] : memref<18x18x8xf32, #tpu.memory_space<vmem>>, vector<16x16x8xf32>
    %7 = vector.shape_cast %6 : vector<16x16x8xf32> to vector<256x8xf32>
    %c0_12 = arith.constant 0 : index
    %c0_13 = arith.constant 0 : index
    %c0_14 = arith.constant 0 : index
    %c0_15 = arith.constant 0 : index
    %8 = vector.load %arg2[%c0_12, %c0_13, %c0_14, %c0_15] : memref<3x3x8x4xf32, #tpu.memory_space<vmem>>, vector<1x1x8x4xf32>
    %9 = vector.shape_cast %8 : vector<1x1x8x4xf32> to vector<8x4xf32>
    %cst_16 = arith.constant dense<0.000000e+00> : vector<256x4xf32>
    %10 = tpu.matmul %7, %9, %cst_16 {dimension_numbers = #tpu.dot_dimension_numbers<[1], [0], [0], [1], [0, 0, 1, 1], [], []>} : vector<256x8xf32>, vector<8x4xf32>, vector<256x4xf32> -> vector<256x4xf32>
    %11 = arith.addf %5, %10 : vector<256x4xf32>
    %c0_17 = arith.constant 0 : index
    %c1_18 = arith.constant 1 : index
    %c0_19 = arith.constant 0 : index
    %12 = vector.load %arg7[%c0_17, %c1_18, %c0_19] : memref<18x18x8xf32, #tpu.memory_space<vmem>>, vector<16x16x8xf32>
    %13 = vector.shape_cast %12 : vector<16x16x8xf32> to vector<256x8xf32>
    %c0_20 = arith.constant 0 : index
    %c1_21 = arith.constant 1 : index
    %c0_22 = arith.constant 0 : index
    %c0_23 = arith.constant 0 : index
    %14 = vector.load %arg2[%c0_20, %c1_21, %c0_22, %c0_23] : memref<3x3x8x4xf32, #tpu.memory_space<vmem>>, vector<1x1x8x4xf32>
    %15 = vector.shape_cast %14 : vector<1x1x8x4xf32> to vector<8x4xf32>
    %cst_24 = arith.constant dense<0.000000e+00> : vector<256x4xf32>
    %16 = tpu.matmul %13, %15, %cst_24 {dimension_numbers = #tpu.dot_dimension_numbers<[1], [0], [0], [1], [0, 0, 1, 1], [], []>} : vector<256x8xf32>, vector<8x4xf32>, vector<256x4xf32> -> vector<256x4xf32>
    %17 = arith.addf %11, %16 : vector<256x4xf32>
    %c0_25 = arith.constant 0 : index
    %c2 = arith.constant 2 : index
    %c0_26 = arith.constant 0 : index
    %18 = vector.load %arg7[%c0_25, %c2, %c0_26] : memref<18x18x8xf32, #tpu.memory_space<vmem>>, vector<16x16x8xf32>
    %19 = vector.shape_cast %18 : vector<16x16x8xf32> to vector<256x8xf32>
    %c0_27 = arith.constant 0 : index
    %c2_28 = arith.constant 2 : index
    %c0_29 = arith.constant 0 : index
    %c0_30 = arith.constant 0 : index
    %20 = vector.load %arg2[%c0_27, %c2_28, %c0_29, %c0_30] : memref<3x3x8x4xf32, #tpu.memory_space<vmem>>, vector<1x1x8x4xf32>
    %21 = vector.shape_cast %20 : vector<1x1x8x4xf32> to vector<8x4xf32>
    %cst_31 = arith.constant dense<0.000000e+00> : vector<256x4xf32>
    %22 = tpu.matmul %19, %21, %cst_31 {dimension_numbers = #tpu.dot_dimension_numbers<[1], [0], [0], [1], [0, 0, 1, 1], [], []>} : vector<256x8xf32>, vector<8x4xf32>, vector<256x4xf32> -> vector<256x4xf32>
    %23 = arith.addf %17, %22 : vector<256x4xf32>
    %c1_32 = arith.constant 1 : index
    %c0_33 = arith.constant 0 : index
    %c0_34 = arith.constant 0 : index
    %24 = vector.load %arg7[%c1_32, %c0_33, %c0_34] : memref<18x18x8xf32, #tpu.memory_space<vmem>>, vector<16x16x8xf32>
    %25 = vector.shape_cast %24 : vector<16x16x8xf32> to vector<256x8xf32>
    %c1_35 = arith.constant 1 : index
    %c0_36 = arith.constant 0 : index
    %c0_37 = arith.constant 0 : index
    %c0_38 = arith.constant 0 : index
    %26 = vector.load %arg2[%c1_35, %c0_36, %c0_37, %c0_38] : memref<3x3x8x4xf32, #tpu.memory_space<vmem>>, vector<1x1x8x4xf32>
    %27 = vector.shape_cast %26 : vector<1x1x8x4xf32> to vector<8x4xf32>
    %cst_39 = arith.constant dense<0.000000e+00> : vector<256x4xf32>
    %28 = tpu.matmul %25, %27, %cst_39 {dimension_numbers = #tpu.dot_dimension_numbers<[1], [0], [0], [1], [0, 0, 1, 1], [], []>} : vector<256x8xf32>, vector<8x4xf32>, vector<256x4xf32> -> vector<256x4xf32>
    %29 = arith.addf %23, %28 : vector<256x4xf32>
    %c1_40 = arith.constant 1 : index
    %c1_41 = arith.constant 1 : index
    %c0_42 = arith.constant 0 : index
    %30 = vector.load %arg7[%c1_40, %c1_41, %c0_42] : memref<18x18x8xf32, #tpu.memory_space<vmem>>, vector<16x16x8xf32>
    %31 = vector.shape_cast %30 : vector<16x16x8xf32> to vector<256x8xf32>
    %c1_43 = arith.constant 1 : index
    %c1_44 = arith.constant 1 : index
    %c0_45 = arith.constant 0 : index
    %c0_46 = arith.constant 0 : index
    %32 = vector.load %arg2[%c1_43, %c1_44, %c0_45, %c0_46] : memref<3x3x8x4xf32, #tpu.memory_space<vmem>>, vector<1x1x8x4xf32>
    %33 = vector.shape_cast %32 : vector<1x1x8x4xf32> to vector<8x4xf32>
    %cst_47 = arith.constant dense<0.000000e+00> : vector<256x4xf32>
    %34 = tpu.matmul %31, %33, %cst_47 {dimension_numbers = #tpu.dot_dimension_numbers<[1], [0], [0], [1], [0, 0, 1, 1], [], []>} : vector<256x8xf32>, vector<8x4xf32>, vector<256x4xf32> -> vector<256x4xf32>
    %35 = arith.addf %29, %34 : vector<256x4xf32>
    %c1_48 = arith.constant 1 : index
    %c2_49 = arith.constant 2 : index
    %c0_50 = arith.constant 0 : index
    %36 = vector.load %arg7[%c1_48, %c2_49, %c0_50] : memref<18x18x8xf32, #tpu.memory_space<vmem>>, vector<16x16x8xf32>
    %37 = vector.shape_cast %36 : vector<16x16x8xf32> to vector<256x8xf32>
    %c1_51 = arith.constant 1 : index
    %c2_52 = arith.constant 2 : index
    %c0_53 = arith.constant 0 : index
    %c0_54 = arith.constant 0 : index
    %38 = vector.load %arg2[%c1_51, %c2_52, %c0_53, %c0_54] : memref<3x3x8x4xf32, #tpu.memory_space<vmem>>, vector<1x1x8x4xf32>
    %39 = vector.shape_cast %38 : vector<1x1x8x4xf32> to vector<8x4xf32>
    %cst_55 = arith.constant dense<0.000000e+00> : vector<256x4xf32>
    %40 = tpu.matmul %37, %39, %cst_55 {dimension_numbers = #tpu.dot_dimension_numbers<[1], [0], [0], [1], [0, 0, 1, 1], [], []>} : vector<256x8xf32>, vector<8x4xf32>, vector<256x4xf32> -> vector<256x4xf32>
    %41 = arith.addf %35, %40 : vector<256x4xf32>
    %c2_56 = arith.constant 2 : index
    %c0_57 = arith.constant 0 : index
    %c0_58 = arith.constant 0 : index
    %42 = vector.load %arg7[%c2_56, %c0_57, %c0_58] : memref<18x18x8xf32, #tpu.memory_space<vmem>>, vector<16x16x8xf32>
    %43 = vector.shape_cast %42 : vector<16x16x8xf32> to vector<256x8xf32>
    %c2_59 = arith.constant 2 : index
    %c0_60 = arith.constant 0 : index
    %c0_61 = arith.constant 0 : index
    %c0_62 = arith.constant 0 : index
    %44 = vector.load %arg2[%c2_59, %c0_60, %c0_61, %c0_62] : memref<3x3x8x4xf32, #tpu.memory_space<vmem>>, vector<1x1x8x4xf32>
    %45 = vector.shape_cast %44 : vector<1x1x8x4xf32> to vector<8x4xf32>
    %cst_63 = arith.constant dense<0.000000e+00> : vector<256x4xf32>
    %46 = tpu.matmul %43, %45, %cst_63 {dimension_numbers = #tpu.dot_dimension_numbers<[1], [0], [0], [1], [0, 0, 1, 1], [], []>} : vector<256x8xf32>, vector<8x4xf32>, vector<256x4xf32> -> vector<256x4xf32>
    %47 = arith.addf %41, %46 : vector<256x4xf32>
    %c2_64 = arith.constant 2 : index
    %c1_65 = arith.constant 1 : index
    %c0_66 = arith.constant 0 : index
    %48 = vector.load %arg7[%c2_64, %c1_65, %c0_66] : memref<18x18x8xf32, #tpu.memory_space<vmem>>, vector<16x16x8xf32>
    %49 = vector.shape_cast %48 : vector<16x16x8xf32> to vector<256x8xf32>
    %c2_67 = arith.constant 2 : index
    %c1_68 = arith.constant 1 : index
    %c0_69 = arith.constant 0 : index
    %c0_70 = arith.constant 0 : index
    %50 = vector.load %arg2[%c2_67, %c1_68, %c0_69, %c0_70] : memref<3x3x8x4xf32, #tpu.memory_space<vmem>>, vector<1x1x8x4xf32>
    %51 = vector.shape_cast %50 : vector<1x1x8x4xf32> to vector<8x4xf32>
    %cst_71 = arith.constant dense<0.000000e+00> : vector<256x4xf32>
    %52 = tpu.matmul %49, %51, %cst_71 {dimension_numbers = #tpu.dot_dimension_numbers<[1], [0], [0], [1], [0, 0, 1, 1], [], []>} : vector<256x8xf32>, vector<8x4xf32>, vector<256x4xf32> -> vector<256x4xf32>
    %53 = arith.addf %47, %52 : vector<256x4xf32>
    %c2_72 = arith.constant 2 : index
    %c2_73 = arith.constant 2 : index
    %c0_74 = arith.constant 0 : index
    %54 = vector.load %arg7[%c2_72, %c2_73, %c0_74] : memref<18x18x8xf32, #tpu.memory_space<vmem>>, vector<16x16x8xf32>
    %55 = vector.shape_cast %54 : vector<16x16x8xf32> to vector<256x8xf32>
    %c2_75 = arith.constant 2 : index
    %c2_76 = arith.constant 2 : index
    %c0_77 = arith.constant 0 : index
    %c0_78 = arith.constant 0 : index
    %56 = vector.load %arg2[%c2_75, %c2_76, %c0_77, %c0_78] : memref<3x3x8x4xf32, #tpu.memory_space<vmem>>, vector<1x1x8x4xf32>
    %57 = vector.shape_cast %56 : vector<1x1x8x4xf32> to vector<8x4xf32>
    %cst_79 = arith.constant dense<0.000000e+00> : vector<256x4xf32>
    %58 = tpu.matmul %55, %57, %cst_79 {dimension_numbers = #tpu.dot_dimension_numbers<[1], [0], [0], [1], [0, 0, 1, 1], [], []>} : vector<256x8xf32>, vector<8x4xf32>, vector<256x4xf32> -> vector<256x4xf32>
    %59 = arith.addf %53, %58 : vector<256x4xf32>
    %c0_80 = arith.constant 0 : index
    %c0_81 = arith.constant 0 : index
    %60 = vector.load %arg3[%c0_80, %c0_81] : memref<1x4xf32, #tpu.memory_space<vmem>>, vector<1x4xf32>
    %61 = vector.broadcast %60 : vector<1x4xf32> to vector<256x4xf32>
    %62 = arith.addf %59, %61 : vector<256x4xf32>
    %cst_82 = arith.constant 0.000000e+00 : f32
    %63 = vector.broadcast %cst_82 : f32 to vector<256x4xf32>
    %64 = arith.maximumf %62, %63 : vector<256x4xf32>
    %cst_83 = arith.constant 0.000000e+00 : f32
    %65 = vector.broadcast %cst_83 : f32 to vector<18x18x4xf32>
    %c0_84 = arith.constant 0 : index
    %c0_85 = arith.constant 0 : index
    %c0_86 = arith.constant 0 : index
    %66 = vector.load %arg8[%c0_84, %c0_85, %c0_86] : memref<18x18x4xf32, #tpu.memory_space<vmem>>, vector<18x18x4xf32>
    tpu.vector_store %arg8[%c0_84, %c0_85, %c0_86], %65 {strides = array<i32>} : memref<18x18x4xf32, #tpu.memory_space<vmem>>, vector<18x18x4xf32>,
    %67 = vector.shape_cast %64 : vector<256x4xf32> to vector<16x16x4xf32>
    %c1_87 = arith.constant 1 : index
    %c1_88 = arith.constant 1 : index
    %c0_89 = arith.constant 0 : index
    %68 = vector.load %arg8[%c1_87, %c1_88, %c0_89] : memref<18x18x4xf32, #tpu.memory_space<vmem>>, vector<16x16x4xf32>
    tpu.vector_store %arg8[%c1_87, %c1_88, %c0_89], %67 {strides = array<i32>} : memref<18x18x4xf32, #tpu.memory_space<vmem>>, vector<16x16x4xf32>,
    %cst_90 = arith.constant 0.000000e+00 : f32
    %69 = vector.broadcast %cst_90 : f32 to vector<4x256xf32>
    %c0_91 = arith.constant 0 : index
    %c0_92 = arith.constant 0 : index
    %c0_93 = arith.constant 0 : index
    %70 = vector.load %arg8[%c0_91, %c0_92, %c0_93] : memref<18x18x4xf32, #tpu.memory_space<vmem>>, vector<16x16x4xf32>
    %71 = vector.shape_cast %70 : vector<16x16x4xf32> to vector<256x4xf32>
    %c0_94 = arith.constant 0 : index
    %c0_95 = arith.constant 0 : index
    %c0_96 = arith.constant 0 : index
    %c0_97 = arith.constant 0 : index
    %72 = vector.load %arg4[%c0_94, %c0_95, %c0_96, %c0_97] : memref<3x3x4x4xf32, #tpu.memory_space<vmem>>, vector<1x1x4x4xf32>
    %73 = vector.shape_cast %72 : vector<1x1x4x4xf32> to vector<4x4xf32>
    %cst_98 = arith.constant dense<0.000000e+00> : vector<4x256xf32>
    %74 = tpu.matmul %73, %71, %cst_98 {dimension_numbers = #tpu.dot_dimension_numbers<[1], [1], [0], [0], [0, 0, 1, 0], [], []>} : vector<4x4xf32>, vector<256x4xf32>, vector<4x256xf32> -> vector<4x256xf32>
    %75 = arith.addf %69, %74 : vector<4x256xf32>
    %c0_99 = arith.constant 0 : index
    %c1_100 = arith.constant 1 : index
    %c0_101 = arith.constant 0 : index
    %76 = vector.load %arg8[%c0_99, %c1_100, %c0_101] : memref<18x18x4xf32, #tpu.memory_space<vmem>>, vector<16x16x4xf32>
    %77 = vector.shape_cast %76 : vector<16x16x4xf32> to vector<256x4xf32>
    %c0_102 = arith.constant 0 : index
    %c1_103 = arith.constant 1 : index
    %c0_104 = arith.constant 0 : index
    %c0_105 = arith.constant 0 : index
    %78 = vector.load %arg4[%c0_102, %c1_103, %c0_104, %c0_105] : memref<3x3x4x4xf32, #tpu.memory_space<vmem>>, vector<1x1x4x4xf32>
    %79 = vector.shape_cast %78 : vector<1x1x4x4xf32> to vector<4x4xf32>
    %cst_106 = arith.constant dense<0.000000e+00> : vector<4x256xf32>
    %80 = tpu.matmul %79, %77, %cst_106 {dimension_numbers = #tpu.dot_dimension_numbers<[1], [1], [0], [0], [0, 0, 1, 0], [], []>} : vector<4x4xf32>, vector<256x4xf32>, vector<4x256xf32> -> vector<4x256xf32>
    %81 = arith.addf %75, %80 : vector<4x256xf32>
    %c0_107 = arith.constant 0 : index
    %c2_108 = arith.constant 2 : index
    %c0_109 = arith.constant 0 : index
    %82 = vector.load %arg8[%c0_107, %c2_108, %c0_109] : memref<18x18x4xf32, #tpu.memory_space<vmem>>, vector<16x16x4xf32>
    %83 = vector.shape_cast %82 : vector<16x16x4xf32> to vector<256x4xf32>
    %c0_110 = arith.constant 0 : index
    %c2_111 = arith.constant 2 : index
    %c0_112 = arith.constant 0 : index
    %c0_113 = arith.constant 0 : index
    %84 = vector.load %arg4[%c0_110, %c2_111, %c0_112, %c0_113] : memref<3x3x4x4xf32, #tpu.memory_space<vmem>>, vector<1x1x4x4xf32>
    %85 = vector.shape_cast %84 : vector<1x1x4x4xf32> to vector<4x4xf32>
    %cst_114 = arith.constant dense<0.000000e+00> : vector<4x256xf32>
    %86 = tpu.matmul %85, %83, %cst_114 {dimension_numbers = #tpu.dot_dimension_numbers<[1], [1], [0], [0], [0, 0, 1, 0], [], []>} : vector<4x4xf32>, vector<256x4xf32>, vector<4x256xf32> -> vector<4x256xf32>
    %87 = arith.addf %81, %86 : vector<4x256xf32>
    %c1_115 = arith.constant 1 : index
    %c0_116 = arith.constant 0 : index
    %c0_117 = arith.constant 0 : index
    %88 = vector.load %arg8[%c1_115, %c0_116, %c0_117] : memref<18x18x4xf32, #tpu.memory_space<vmem>>, vector<16x16x4xf32>
    %89 = vector.shape_cast %88 : vector<16x16x4xf32> to vector<256x4xf32>
    %c1_118 = arith.constant 1 : index
    %c0_119 = arith.constant 0 : index
    %c0_120 = arith.constant 0 : index
    %c0_121 = arith.constant 0 : index
    %90 = vector.load %arg4[%c1_118, %c0_119, %c0_120, %c0_121] : memref<3x3x4x4xf32, #tpu.memory_space<vmem>>, vector<1x1x4x4xf32>
    %91 = vector.shape_cast %90 : vector<1x1x4x4xf32> to vector<4x4xf32>
    %cst_122 = arith.constant dense<0.000000e+00> : vector<4x256xf32>
    %92 = tpu.matmul %91, %89, %cst_122 {dimension_numbers = #tpu.dot_dimension_numbers<[1], [1], [0], [0], [0, 0, 1, 0], [], []>} : vector<4x4xf32>, vector<256x4xf32>, vector<4x256xf32> -> vector<4x256xf32>
    %93 = arith.addf %87, %92 : vector<4x256xf32>
    %c1_123 = arith.constant 1 : index
    %c1_124 = arith.constant 1 : index
    %c0_125 = arith.constant 0 : index
    %94 = vector.load %arg8[%c1_123, %c1_124, %c0_125] : memref<18x18x4xf32, #tpu.memory_space<vmem>>, vector<16x16x4xf32>
    %95 = vector.shape_cast %94 : vector<16x16x4xf32> to vector<256x4xf32>
    %c1_126 = arith.constant 1 : index
    %c1_127 = arith.constant 1 : index
    %c0_128 = arith.constant 0 : index
    %c0_129 = arith.constant 0 : index
    %96 = vector.load %arg4[%c1_126, %c1_127, %c0_128, %c0_129] : memref<3x3x4x4xf32, #tpu.memory_space<vmem>>, vector<1x1x4x4xf32>
    %97 = vector.shape_cast %96 : vector<1x1x4x4xf32> to vector<4x4xf32>
    %cst_130 = arith.constant dense<0.000000e+00> : vector<4x256xf32>
    %98 = tpu.matmul %97, %95, %cst_130 {dimension_numbers = #tpu.dot_dimension_numbers<[1], [1], [0], [0], [0, 0, 1, 0], [], []>} : vector<4x4xf32>, vector<256x4xf32>, vector<4x256xf32> -> vector<4x256xf32>
    %99 = arith.addf %93, %98 : vector<4x256xf32>
    %c1_131 = arith.constant 1 : index
    %c2_132 = arith.constant 2 : index
    %c0_133 = arith.constant 0 : index
    %100 = vector.load %arg8[%c1_131, %c2_132, %c0_133] : memref<18x18x4xf32, #tpu.memory_space<vmem>>, vector<16x16x4xf32>
    %101 = vector.shape_cast %100 : vector<16x16x4xf32> to vector<256x4xf32>
    %c1_134 = arith.constant 1 : index
    %c2_135 = arith.constant 2 : index
    %c0_136 = arith.constant 0 : index
    %c0_137 = arith.constant 0 : index
    %102 = vector.load %arg4[%c1_134, %c2_135, %c0_136, %c0_137] : memref<3x3x4x4xf32, #tpu.memory_space<vmem>>, vector<1x1x4x4xf32>
    %103 = vector.shape_cast %102 : vector<1x1x4x4xf32> to vector<4x4xf32>
    %cst_138 = arith.constant dense<0.000000e+00> : vector<4x256xf32>
    %104 = tpu.matmul %103, %101, %cst_138 {dimension_numbers = #tpu.dot_dimension_numbers<[1], [1], [0], [0], [0, 0, 1, 0], [], []>} : vector<4x4xf32>, vector<256x4xf32>, vector<4x256xf32> -> vector<4x256xf32>
    %105 = arith.addf %99, %104 : vector<4x256xf32>
    %c2_139 = arith.constant 2 : index
    %c0_140 = arith.constant 0 : index
    %c0_141 = arith.constant 0 : index
    %106 = vector.load %arg8[%c2_139, %c0_140, %c0_141] : memref<18x18x4xf32, #tpu.memory_space<vmem>>, vector<16x16x4xf32>
    %107 = vector.shape_cast %106 : vector<16x16x4xf32> to vector<256x4xf32>
    %c2_142 = arith.constant 2 : index
    %c0_143 = arith.constant 0 : index
    %c0_144 = arith.constant 0 : index
    %c0_145 = arith.constant 0 : index
    %108 = vector.load %arg4[%c2_142, %c0_143, %c0_144, %c0_145] : memref<3x3x4x4xf32, #tpu.memory_space<vmem>>, vector<1x1x4x4xf32>
    %109 = vector.shape_cast %108 : vector<1x1x4x4xf32> to vector<4x4xf32>
    %cst_146 = arith.constant dense<0.000000e+00> : vector<4x256xf32>
    %110 = tpu.matmul %109, %107, %cst_146 {dimension_numbers = #tpu.dot_dimension_numbers<[1], [1], [0], [0], [0, 0, 1, 0], [], []>} : vector<4x4xf32>, vector<256x4xf32>, vector<4x256xf32> -> vector<4x256xf32>
    %111 = arith.addf %105, %110 : vector<4x256xf32>
    %c2_147 = arith.constant 2 : index
    %c1_148 = arith.constant 1 : index
    %c0_149 = arith.constant 0 : index
    %112 = vector.load %arg8[%c2_147, %c1_148, %c0_149] : memref<18x18x4xf32, #tpu.memory_space<vmem>>, vector<16x16x4xf32>
    %113 = vector.shape_cast %112 : vector<16x16x4xf32> to vector<256x4xf32>
    %c2_150 = arith.constant 2 : index
    %c1_151 = arith.constant 1 : index
    %c0_152 = arith.constant 0 : index
    %c0_153 = arith.constant 0 : index
    %114 = vector.load %arg4[%c2_150, %c1_151, %c0_152, %c0_153] : memref<3x3x4x4xf32, #tpu.memory_space<vmem>>, vector<1x1x4x4xf32>
    %115 = vector.shape_cast %114 : vector<1x1x4x4xf32> to vector<4x4xf32>
    %cst_154 = arith.constant dense<0.000000e+00> : vector<4x256xf32>
    %116 = tpu.matmul %115, %113, %cst_154 {dimension_numbers = #tpu.dot_dimension_numbers<[1], [1], [0], [0], [0, 0, 1, 0], [], []>} : vector<4x4xf32>, vector<256x4xf32>, vector<4x256xf32> -> vector<4x256xf32>
    %117 = arith.addf %111, %116 : vector<4x256xf32>
    %c2_155 = arith.constant 2 : index
    %c2_156 = arith.constant 2 : index
    %c0_157 = arith.constant 0 : index
    %118 = vector.load %arg8[%c2_155, %c2_156, %c0_157] : memref<18x18x4xf32, #tpu.memory_space<vmem>>, vector<16x16x4xf32>
    %119 = vector.shape_cast %118 : vector<16x16x4xf32> to vector<256x4xf32>
    %c2_158 = arith.constant 2 : index
    %c2_159 = arith.constant 2 : index
    %c0_160 = arith.constant 0 : index
    %c0_161 = arith.constant 0 : index
    %120 = vector.load %arg4[%c2_158, %c2_159, %c0_160, %c0_161] : memref<3x3x4x4xf32, #tpu.memory_space<vmem>>, vector<1x1x4x4xf32>
    %121 = vector.shape_cast %120 : vector<1x1x4x4xf32> to vector<4x4xf32>
    %cst_162 = arith.constant dense<0.000000e+00> : vector<4x256xf32>
    %122 = tpu.matmul %121, %119, %cst_162 {dimension_numbers = #tpu.dot_dimension_numbers<[1], [1], [0], [0], [0, 0, 1, 0], [], []>} : vector<4x4xf32>, vector<256x4xf32>, vector<4x256xf32> -> vector<4x256xf32>
    %123 = arith.addf %117, %122 : vector<4x256xf32>
    %c0_163 = arith.constant 0 : index
    %c0_164 = arith.constant 0 : index
    %124 = vector.load %arg5[%c0_163, %c0_164] : memref<4x1xf32, #tpu.memory_space<vmem>>, vector<4x1xf32>
    %125 = vector.broadcast %124 : vector<4x1xf32> to vector<4x256xf32>
    %126 = arith.addf %123, %125 : vector<4x256xf32>
    %cst_165 = arith.constant 0.000000e+00 : f32
    %127 = vector.broadcast %cst_165 : f32 to vector<4x256xf32>
    %128 = arith.maximumf %126, %127 : vector<4x256xf32>
    %c0_166 = arith.constant 0 : index
    %c0_167 = arith.constant 0 : index
    %c0_168 = arith.constant 0 : index
    %129 = vector.load %arg6[%c0_166, %c0_167, %c0_168] : memref<1x4x256xf32, #tpu.memory_space<vmem>>, vector<1x4x256xf32>
    %130 = vector.shape_cast %129 : vector<1x4x256xf32> to vector<4x256xf32>
    %131 = vector.shape_cast %128 : vector<4x256xf32> to vector<1x4x256xf32>
    tpu.vector_store %arg6[%c0_166, %c0_167, %c0_168], %131 {strides = array<i32>} : memref<1x4x256xf32, #tpu.memory_space<vmem>>, vector<1x4x256xf32>,
    return
  }
  func.func @transform_0(%arg0: i32) -> (i32, i32, i32, i32) {
    %c0_i32 = arith.constant 0 : i32
    %c0_i32_0 = arith.constant 0 : i32
    %c0_i32_1 = arith.constant 0 : i32
    %c0_i32_2 = arith.constant 0 : i32
    return %arg0, %c0_i32, %c0_i32_0, %c0_i32_1 : i32, i32, i32, i32
  }
  func.func @transform_1(%arg0: i32) -> (i32, i32, i32, i32) {
    %c0_i32 = arith.constant 0 : i32
    %c0_i32_0 = arith.constant 0 : i32
    %c0_i32_1 = arith.constant 0 : i32
    %c0_i32_2 = arith.constant 0 : i32
    %c0_i32_3 = arith.constant 0 : i32
    return %c0_i32, %c0_i32_0, %c0_i32_1, %c0_i32_2 : i32, i32, i32, i32
  }
  func.func @transform_2(%arg0: i32) -> (i32, i32) {
    %c0_i32 = arith.constant 0 : i32
    %c0_i32_0 = arith.constant 0 : i32
    %c0_i32_1 = arith.constant 0 : i32
    return %c0_i32, %c0_i32_0 : i32, i32
  }
  func.func @transform_3(%arg0: i32) -> (i32, i32, i32, i32) {
    %c0_i32 = arith.constant 0 : i32
    %c0_i32_0 = arith.constant 0 : i32
    %c0_i32_1 = arith.constant 0 : i32
    %c0_i32_2 = arith.constant 0 : i32
    %c0_i32_3 = arith.constant 0 : i32
    return %c0_i32, %c0_i32_0, %c0_i32_1, %c0_i32_2 : i32, i32, i32, i32
  }
  func.func @transform_4(%arg0: i32) -> (i32, i32) {
    %c0_i32 = arith.constant 0 : i32
    %c0_i32_0 = arith.constant 0 : i32
    %c0_i32_1 = arith.constant 0 : i32
    return %c0_i32, %c0_i32_0 : i32, i32
  }
  func.func @transform_5(%arg0: i32) -> (i32, i32, i32) {
    %c0_i32 = arith.constant 0 : i32
    %c0_i32_0 = arith.constant 0 : i32
    %c0_i32_1 = arith.constant 0 : i32
    return %arg0, %c0_i32, %c0_i32_0 : i32, i32, i32
  }
}

</mosaic_0001>

<llo_original>
// kernel: tpu_custom_call.1
$region0: #{tpu_custom_call.1}
  #allocation0 [shape = 'u32[]', space=smem, size = 0x4, offset = 0x4, fixed_abs, tag = 'smem constant byte address 0x4 - core index']
  #allocation1 [shape = 'u32[72,128]{1,0:T(1,128)}', space=vmem, size = 0x9000, scoped, tag = 'internal scratch']
  #allocation2 [shape = 'f32[18,18,8]{2,1,0:T(8,128)}', space=vmem, size = 0x36000, scoped, tag = 'scratch operand']
  #allocation3 [shape = 'f32[18,18,4]{2,1,0:T(8,128)}', space=vmem, size = 0x36000, scoped, tag = 'scratch operand']
  %s0 = inlined_call_operand.vmem [shape: f32[2,16,16,8], index: 0, kind: input, shape index: {}]
  %s1 = inlined_call_operand.vmem [shape: f32[3,3,8,4], index: 1, kind: input, shape index: {}]
  %s2 = inlined_call_operand.vmem [shape: f32[1,4], index: 2, kind: input, shape index: {}]
  %s3 = inlined_call_operand.vmem [shape: f32[3,3,4,4], index: 3, kind: input, shape index: {}]
  %s4 = inlined_call_operand.vmem [shape: f32[4,1], index: 4, kind: input, shape index: {}]
  %s5 = inlined_call_operand.hbm [shape: f32[2,4,256], index: 5, kind: output, shape index: {}]
  %s6 = sld [smem:[#allocation0]]
  $region53: #{tpu_custom_call.1} parent=0
    _
  %s8 = ssub.s32 1, %s6
  %s9 = scalar_select 0, %s8, %s6
  $region1: #{tpu_custom_call.1} parent=0
    #allocation4 [shape = 'u8[8192]{0}', space=vmem, size = 0x2000, scoped, tag = 'output window, operand 0']
    #allocation5 [shape = 's32[2]{0}', space=sflag, size = 0x8, scoped, tag = 'scoped memory for tpu_custom_call.1']
    %10 = vsyncpa [#allocation5], 0
    %s11 = scalar_lea.sflag [#allocation5], 1
    %12 = vsyncpa %s11, 0
    loop: start=0, step=1, limit=4
    $region2: #{tpu_custom_call.1} parent=1 // loop_pre_header
      _
    $region3: #{tpu_custom_call.1} parent=1 // loop_header
      %s14 = sphi 0, %s18
      %p15 = scmp.ge.s32.totalorder %s14, 4
      %s24 = sphi 0, %s26
      %s27 = sphi 0, %s24
      %s28 = sphi 0, %s27
      %s44 = sphi 0, %s28
      %s48 = sphi 0, %s48
      %s50 = sphi 0, %s48
      %s51 = sphi 0, %s50
      %s65 = sphi 0, %s51
      %s69 = sphi 0, %s69
      %s71 = sphi 0, %s69
      %s72 = sphi 0, %s71
      %s86 = sphi 0, %s72
      %s90 = sphi 0, %s90
      %s92 = sphi 0, %s90
      %s93 = sphi 0, %s92
      %s107 = sphi 0, %s93
      %s111 = sphi 0, %s111
      %s113 = sphi 0, %s111
      %s114 = sphi 0, %s113
      %s128 = sphi 0, %s114
      %s134 = sphi 0, %s136
      %s137 = sphi 0, %s134
      %s138 = sphi 0, %s137
      %s154 = sphi 0, %s138
    $region4: #{tpu_custom_call.1} parent=1 // loop_header_branch
      %17 = sbr.rel (%p15) target = $region8
    $region5: #{tpu_custom_call.1} parent=1 // loop_body
      %s19 = ssub.s32 %s14, 1
      %s20 = ssub.s32 %s14, 2
      %s21 = sadd.s32 %s14, 1
      %s22 = ssub.s32 %s14, %s21
      %p23 = scmp.eq.s32.totalorder %s22, 0
      %s25 = sadd.s32 %s24, 1
      %s26 = scalar_select %p23, %s24, %s25
      %p29 = pneg %p23
      %p30 = scmp.eq.s32.totalorder %s14, 1
      %p31 = por %p29, %p30
      %p32 = scmp.ne.s32.totalorder %s24, %s27
      %p33 = scmp.eq.s32.totalorder %s14, 0
      %p34 = por %p32, %p33
      %p35 = scmp.ne.s32.totalorder %s24, %s27
      %p36 = scmp.eq.s32.totalorder %s19, 1
      %p37 = por %p35, %p36
      %p38 = scmp.ne.s32.totalorder %s27, %s28
      %p39 = scmp.eq.s32.totalorder %s19, 0
      %p40 = por %p38, %p39
      %p41 = scmp.ne.s32.totalorder %s27, %s28
      %p42 = scmp.eq.s32.totalorder %s20, 1
      %p43 = por %p41, %p42
      %p45 = scmp.ne.s32.totalorder %s28, %s44
      %p46 = scmp.eq.s32.totalorder %s20, 0
      %p47 = por %p45, %p46
      %s49 = sadd.s32 %s48, 1
      %p52 = scmp.eq.s32.totalorder %s14, 1
      %p53 = scmp.ne.s32.totalorder %s48, %s50
      %p54 = scmp.eq.s32.totalorder %s14, 0
      %p55 = por %p53, %p54
      %p56 = scmp.ne.s32.totalorder %s48, %s50
      %p57 = scmp.eq.s32.totalorder %s19, 1
      %p58 = por %p56, %p57
      %p59 = scmp.ne.s32.totalorder %s50, %s51
      %p60 = scmp.eq.s32.totalorder %s19, 0
      %p61 = por %p59, %p60
      %p62 = scmp.ne.s32.totalorder %s50, %s51
      %p63 = scmp.eq.s32.totalorder %s20, 1
      %p64 = por %p62, %p63
      %p66 = scmp.ne.s32.totalorder %s51, %s65
      %p67 = scmp.eq.s32.totalorder %s20, 0
      %p68 = por %p66, %p67
      %s70 = sadd.s32 %s69, 1
      %p73 = scmp.eq.s32.totalorder %s14, 1
      %p74 = scmp.ne.s32.totalorder %s69, %s71
      %p75 = scmp.eq.s32.totalorder %s14, 0
      %p76 = por %p74, %p75
      %p77 = scmp.ne.s32.totalorder %s69, %s71
      %p78 = scmp.eq.s32.totalorder %s19, 1
      %p79 = por %p77, %p78
      %p80 = scmp.ne.s32.totalorder %s71, %s72
      %p81 = scmp.eq.s32.totalorder %s19, 0
      %p82 = por %p80, %p81
      %p83 = scmp.ne.s32.totalorder %s71, %s72
      %p84 = scmp.eq.s32.totalorder %s20, 1
      %p85 = por %p83, %p84
      %p87 = scmp.ne.s32.totalorder %s72, %s86
      %p88 = scmp.eq.s32.totalorder %s20, 0
      %p89 = por %p87, %p88
      %s91 = sadd.s32 %s90, 1
      %p94 = scmp.eq.s32.totalorder %s14, 1
      %p95 = scmp.ne.s32.totalorder %s90, %s92
      %p96 = scmp.eq.s32.totalorder %s14, 0
      %p97 = por %p95, %p96
      %p98 = scmp.ne.s32.totalorder %s90, %s92
      %p99 = scmp.eq.s32.totalorder %s19, 1
      %p100 = por %p98, %p99
      %p101 = scmp.ne.s32.totalorder %s92, %s93
      %p102 = scmp.eq.s32.totalorder %s19, 0
      %p103 = por %p101, %p102
      %p104 = scmp.ne.s32.totalorder %s92, %s93
      %p105 = scmp.eq.s32.totalorder %s20, 1
      %p106 = por %p104, %p105
      %p108 = scmp.ne.s32.totalorder %s93, %s107
      %p109 = scmp.eq.s32.totalorder %s20, 0
      %p110 = por %p108, %p109
      %s112 = sadd.s32 %s111, 1
      %p115 = scmp.eq.s32.totalorder %s14, 1
      %p116 = scmp.ne.s32.totalorder %s111, %s113
      %p117 = scmp.eq.s32.totalorder %s14, 0
      %p118 = por %p116, %p117
      %p119 = scmp.ne.s32.totalorder %s111, %s113
      %p120 = scmp.eq.s32.totalorder %s19, 1
      %p121 = por %p119, %p120
      %p122 = scmp.ne.s32.totalorder %s113, %s114
      %p123 = scmp.eq.s32.totalorder %s19, 0
      %p124 = por %p122, %p123
      %p125 = scmp.ne.s32.totalorder %s113, %s114
      %p126 = scmp.eq.s32.totalorder %s20, 1
      %p127 = por %p125, %p126
      %p129 = scmp.ne.s32.totalorder %s114, %s128
      %p130 = scmp.eq.s32.totalorder %s20, 0
      %p131 = por %p129, %p130
      %s132 = ssub.s32 %s14, %s21
      %p133 = scmp.eq.s32.totalorder %s132, 0
      %s135 = sadd.s32 %s134, 1
      %s136 = scalar_select %p133, %s134, %s135
      %p139 = pneg %p133
      %p140 = scmp.eq.s32.totalorder %s14, 1
      %p141 = por %p139, %p140
      %p142 = scmp.ne.s32.totalorder %s134, %s137
      %p143 = scmp.eq.s32.totalorder %s14, 0
      %p144 = por %p142, %p143
      %p145 = scmp.ne.s32.totalorder %s134, %s137
      %p146 = scmp.eq.s32.totalorder %s19, 1
      %p147 = por %p145, %p146
      %p148 = scmp.ne.s32.totalorder %s137, %s138
      %p149 = scmp.eq.s32.totalorder %s19, 0
      %p150 = por %p148, %p149
      %p151 = scmp.ne.s32.totalorder %s137, %s138
      %p152 = scmp.eq.s32.totalorder %s20, 1
      %p153 = por %p151, %p152
      %p155 = scmp.ne.s32.totalorder %s138, %s154
      %p156 = scmp.eq.s32.totalorder %s20, 0
      %p157 = por %p155, %p156
      %p158 = scmp.le.s32.totalorder 1, %s14
      %p159 = scmp.lt.s32.totalorder %s14, 3
      %p160 = pnand %p158, %p159
      %p161 = pneg %p160
      // Predicated region
      $region9: #{tpu_custom_call.1} parent=5 // pred_check
        _
      $region10: #{tpu_custom_call.1} parent=5 // pred_check_branch
        %163 = sbr.rel (%p160) target = $region12
      $region11: #{tpu_custom_call.1} parent=5 // pred_region
        %s164 = ssub.s32 %s14, 1
        // Predicated region
        $region13: #{tpu_custom_call.1} parent=11 // pred_check
          %p165 = pneg %p61
        $region14: #{tpu_custom_call.1} parent=11 // pred_check_branch
          %167 = sbr.rel (%p165) target = $region16
        $region15: #{tpu_custom_call.1} parent=11 // pred_region
          _
        $region16: #{tpu_custom_call.1} parent=11 // pred_fallthru
          _
        // Predicated region
        $region17: #{tpu_custom_call.1} parent=11 // pred_check
          %p168 = pneg %p82
        $region18: #{tpu_custom_call.1} parent=11 // pred_check_branch
          %170 = sbr.rel (%p168) target = $region20
        $region19: #{tpu_custom_call.1} parent=11 // pred_region
          _
        $region20: #{tpu_custom_call.1} parent=11 // pred_fallthru
          _
        // Predicated region
        $region21: #{tpu_custom_call.1} parent=11 // pred_check
          %p171 = pneg %p103
        $region22: #{tpu_custom_call.1} parent=11 // pred_check_branch
          %173 = sbr.rel (%p171) target = $region24
        $region23: #{tpu_custom_call.1} parent=11 // pred_region
          _
        $region24: #{tpu_custom_call.1} parent=11 // pred_fallthru
          _
        // Predicated region
        $region25: #{tpu_custom_call.1} parent=11 // pred_check
          %p174 = pneg %p124
        $region26: #{tpu_custom_call.1} parent=11 // pred_check_branch
          %176 = sbr.rel (%p174) target = $region28
        $region27: #{tpu_custom_call.1} parent=11 // pred_region
          _
        $region28: #{tpu_custom_call.1} parent=11 // pred_fallthru
          _
      $region12: #{tpu_custom_call.1} parent=5 // pred_fallthru
        _
      %p177 = scmp.lt.s32.totalorder %s14, 2
      // Predicated region
      $region29: #{tpu_custom_call.1} parent=5 // pred_check
        %p178 = pneg %p177
      $region30: #{tpu_custom_call.1} parent=5 // pred_check_branch
        %180 = sbr.rel (%p178) target = $region32
      $region31: #{tpu_custom_call.1} parent=5 // pred_region
        // Predicated region
        $region33: #{tpu_custom_call.1} parent=31 // pred_check
          %p181 = pneg %p34
        $region34: #{tpu_custom_call.1} parent=31 // pred_check_branch
          %183 = sbr.rel (%p181) target = $region36
        $region35: #{tpu_custom_call.1} parent=31 // pred_region
          %p184 = scmp.lt.s32.totalorder %s14, 1
          %s185 = scalar_select %p184, %s14, 1
          %s186 = smul.addr %s185, 32
          %s187 = smul.addr %s186, 8
          %s188 = scalar_lea.vmem %s0, %s187
        $region36: #{tpu_custom_call.1} parent=31 // pred_fallthru
          _
      $region32: #{tpu_custom_call.1} parent=5 // pred_fallthru
        _
      %p189 = scmp.le.s32.totalorder 1, %s14
      %p190 = scmp.lt.s32.totalorder %s14, 3
      %p191 = pnand %p189, %p190
      %p192 = pneg %p191
      // Predicated region
      $region37: #{tpu_custom_call.1} parent=5 // pred_check
        _
      $region38: #{tpu_custom_call.1} parent=5 // pred_check_branch
        %194 = sbr.rel (%p191) target = $region40
      $region39: #{tpu_custom_call.1} parent=5 // pred_region
        %s195 = ssub.s32 %s14, 1
        %p196 = scmp.lt.s32.totalorder %s19, 1
        %s197 = scalar_select %p196, %s19, 1
        %s198 = smul.addr %s197, 32
        %s199 = smul.addr %s198, 8
        %s200 = scalar_lea.vmem %s0, %s199
        %p201 = pneg %p40
        %p202 = pneg %p37
        %p203 = pneg %p61
        %p204 = pneg %p58
        %p205 = pneg %p82
        %p206 = pneg %p79
        %p207 = pneg %p103
        %p208 = pneg %p100
        %p209 = pneg %p124
        %p210 = pneg %p121
        %p211 = pneg %p150
        %p212 = pneg %p147
        %s213 = sand.u32 %s137, 1
        %s214 = scalar_lea.sflag [#allocation5], %s213
        %s215 = sand.u32 %s137, 1
        %s216 = smul.addr %s215, 8
        %s217 = scalar_lea.vmem [#allocation4], %s216
        %p218 = scmp.lt.s32.totalorder %s19, 1
        %s219 = scalar_select %p218, %s19, 1
        %s220 = smul.addr %s219, 32
        %s221 = smul.addr %s220, 8
        %s222 = scalar_lea.vmem %s0, %s221
        %vm223 = vcmask 64512
        %224 = vst.msk [vmem:[#allocation2] sm:$0xff] %vm223, 0.0
        %225 = vst.msk [vmem:[#allocation2 + $0x8] sm:$0xff] %vm223, 0.0
        %vm226 = vcmask 58368
        %227 = vst.msk [vmem:[#allocation2 + $0x10] sm:$0x3] %vm226, 0.0
        %228 = vst.msk [vmem:[#allocation2 + $0x18] sm:$0xff] %vm223, 0.0
        %229 = vst.msk [vmem:[#allocation2 + $0x20] sm:$0xff] %vm223, 0.0
        %230 = vst.msk [vmem:[#allocation2 + $0x28] sm:$0x3] %vm226, 0.0
        %231 = vst.msk [vmem:[#allocation2 + $0x30] sm:$0xff] %vm223, 0.0
        %232 = vst.msk [vmem:[#allocation2 + $0x38] sm:$0xff] %vm223, 0.0
        %233 = vst.msk [vmem:[#allocation2 + $0x40] sm:$0x3] %vm226, 0.0
        %234 = vst.msk [vmem:[#allocation2 + $0x48] sm:$0xff] %vm223, 0.0
        %235 = vst.msk [vmem:[#allocation2 + $0x50] sm:$0xff] %vm223, 0.0
        %236 = vst.msk [vmem:[#allocation2 + $0x58] sm:$0x3] %vm226, 0.0
        %237 = vst.msk [vmem:[#allocation2 + $0x60] sm:$0xff] %vm223, 0.0
        %238 = vst.msk [vmem:[#allocation2 + $0x68] sm:$0xff] %vm223, 0.0
        %239 = vst.msk [vmem:[#allocation2 + $0x70] sm:$0x3] %vm226, 0.0
        %240 = vst.msk [vmem:[#allocation2 + $0x78] sm:$0xff] %vm223, 0.0
        %241 = vst.msk [vmem:[#allocation2 + $0x80] sm:$0xff] %vm223, 0.0
        %242 = vst.msk [vmem:[#allocation2 + $0x88] sm:$0x3] %vm226, 0.0
        %243 = vst.msk [vmem:[#allocation2 + $0x90] sm:$0xff] %vm223, 0.0
        %244 = vst.msk [vmem:[#allocation2 + $0x98] sm:$0xff] %vm223, 0.0
        %245 = vst.msk [vmem:[#allocation2 + $0xa0] sm:$0x3] %vm226, 0.0
        %246 = vst.msk [vmem:[#allocation2 + $0xa8] sm:$0xff] %vm223, 0.0
        %247 = vst.msk [vmem:[#allocation2 + $0xb0] sm:$0xff] %vm223, 0.0
        %248 = vst.msk [vmem:[#allocation2 + $0xb8] sm:$0x3] %vm226, 0.0
        %249 = vst.msk [vmem:[#allocation2 + $0xc0] sm:$0xff] %vm223, 0.0
        %250 = vst.msk [vmem:[#allocation2 + $0xc8] sm:$0xff] %vm223, 0.0
        %251 = vst.msk [vmem:[#allocation2 + $0xd0] sm:$0x3] %vm226, 0.0
        %252 = vst.msk [vmem:[#allocation2 + $0xd8] sm:$0xff] %vm223, 0.0
        %253 = vst.msk [vmem:[#allocation2 + $0xe0] sm:$0xff] %vm223, 0.0
        %254 = vst.msk [vmem:[#allocation2 + $0xe8] sm:$0x3] %vm226, 0.0
        %255 = vst.msk [vmem:[#allocation2 + $0xf0] sm:$0xff] %vm223, 0.0
        %256 = vst.msk [vmem:[#allocation2 + $0xf8] sm:$0xff] %vm223, 0.0
        %257 = vst.msk [vmem:[#allocation2 + $0x100] sm:$0x3] %vm226, 0.0
        %258 = vst.msk [vmem:[#allocation2 + $0x108] sm:$0xff] %vm223, 0.0
        %259 = vst.msk [vmem:[#allocation2 + $0x110] sm:$0xff] %vm223, 0.0
        %260 = vst.msk [vmem:[#allocation2 + $0x118] sm:$0x3] %vm226, 0.0
        %261 = vst.msk [vmem:[#allocation2 + $0x120] sm:$0xff] %vm223, 0.0
        %262 = vst.msk [vmem:[#allocation2 + $0x128] sm:$0xff] %vm223, 0.0
        %263 = vst.msk [vmem:[#allocation2 + $0x130] sm:$0x3] %vm226, 0.0
        %264 = vst.msk [vmem:[#allocation2 + $0x138] sm:$0xff] %vm223, 0.0
        %265 = vst.msk [vmem:[#allocation2 + $0x140] sm:$0xff] %vm223, 0.0
        %266 = vst.msk [vmem:[#allocation2 + $0x148] sm:$0x3] %vm226, 0.0
        %267 = vst.msk [vmem:[#allocation2 + $0x150] sm:$0xff] %vm223, 0.0
        %268 = vst.msk [vmem:[#allocation2 + $0x158] sm:$0xff] %vm223, 0.0
        %269 = vst.msk [vmem:[#allocation2 + $0x160] sm:$0x3] %vm226, 0.0
        %270 = vst.msk [vmem:[#allocation2 + $0x168] sm:$0xff] %vm223, 0.0
        %271 = vst.msk [vmem:[#allocation2 + $0x170] sm:$0xff] %vm223, 0.0
        %272 = vst.msk [vmem:[#allocation2 + $0x178] sm:$0x3] %vm226, 0.0
        %273 = vst.msk [vmem:[#allocation2 + $0x180] sm:$0xff] %vm223, 0.0
        %274 = vst.msk [vmem:[#allocation2 + $0x188] sm:$0xff] %vm223, 0.0
        %275 = vst.msk [vmem:[#allocation2 + $0x190] sm:$0x3] %vm226, 0.0
        %276 = vst.msk [vmem:[#allocation2 + $0x198] sm:$0xff] %vm223, 0.0
        %277 = vst.msk [vmem:[#allocation2 + $0x1a0] sm:$0xff] %vm223, 0.0
        %278 = vst.msk [vmem:[#allocation2 + $0x1a8] sm:$0x3] %vm226, 0.0
        %v279 = vld [vmem:[%s222] sm:$0xff]
        %v280 = vld [vmem:[%s222 + $0x8] sm:$0xff]
        %v281 = vld [vmem:[%s222 + $0x10] sm:$0xff]
        %v282 = vld [vmem:[%s222 + $0x18] sm:$0xff]
        %v283 = vld [vmem:[%s222 + $0x20] sm:$0xff]
        %v284 = vld [vmem:[%s222 + $0x28] sm:$0xff]
        %v285 = vld [vmem:[%s222 + $0x30] sm:$0xff]
        %v286 = vld [vmem:[%s222 + $0x38] sm:$0xff]
        %v287 = vld [vmem:[%s222 + $0x40] sm:$0xff]
        %v288 = vld [vmem:[%s222 + $0x48] sm:$0xff]
        %v289 = vld [vmem:[%s222 + $0x50] sm:$0xff]
        %v290 = vld [vmem:[%s222 + $0x58] sm:$0xff]
        %v291 = vld [vmem:[%s222 + $0x60] sm:$0xff]
        %v292 = vld [vmem:[%s222 + $0x68] sm:$0xff]
        %v293 = vld [vmem:[%s222 + $0x70] sm:$0xff]
        %v294 = vld [vmem:[%s222 + $0x78] sm:$0xff]
        %v295 = vld [vmem:[%s222 + $0x80] sm:$0xff]
        %v296 = vld [vmem:[%s222 + $0x88] sm:$0xff]
        %v297 = vld [vmem:[%s222 + $0x90] sm:$0xff]
        %v298 = vld [vmem:[%s222 + $0x98] sm:$0xff]
        %v299 = vld [vmem:[%s222 + $0xa0] sm:$0xff]
        %v300 = vld [vmem:[%s222 + $0xa8] sm:$0xff]
        %v301 = vld [vmem:[%s222 + $0xb0] sm:$0xff]
        %v302 = vld [vmem:[%s222 + $0xb8] sm:$0xff]
        %v303 = vld [vmem:[%s222 + $0xc0] sm:$0xff]
        %v304 = vld [vmem:[%s222 + $0xc8] sm:$0xff]
        %v305 = vld [vmem:[%s222 + $0xd0] sm:$0xff]
        %v306 = vld [vmem:[%s222 + $0xd8] sm:$0xff]
        %v307 = vld [vmem:[%s222 + $0xe0] sm:$0xff]
        %v308 = vld [vmem:[%s222 + $0xe8] sm:$0xff]
        %v309 = vld [vmem:[%s222 + $0xf0] sm:$0xff]
        %v310 = vld [vmem:[%s222 + $0xf8] sm:$0xff]
        %s311 = scalar_lea.vmem [#allocation2], 24
        %312 = vst.msk [vmem:[%s311 + $0x1] sm:$0xff] %vm223, %v279
        %313 = vst.msk [vmem:[%s311 + $0x9] sm:$0xff] %vm223, %v280
        %314 = vst.msk [vmem:[%s311 + $0x19] sm:$0xff] %vm223, %v281
        %315 = vst.msk [vmem:[%s311 + $0x21] sm:$0xff] %vm223, %v282
        %316 = vst.msk [vmem:[%s311 + $0x31] sm:$0xff] %vm223, %v283
        %317 = vst.msk [vmem:[%s311 + $0x39] sm:$0xff] %vm223, %v284
        %318 = vst.msk [vmem:[%s311 + $0x49] sm:$0xff] %vm223, %v285
        %319 = vst.msk [vmem:[%s311 + $0x51] sm:$0xff] %vm223, %v286
        %320 = vst.msk [vmem:[%s311 + $0x61] sm:$0xff] %vm223, %v287
        %321 = vst.msk [vmem:[%s311 + $0x69] sm:$0xff] %vm223, %v288
        %322 = vst.msk [vmem:[%s311 + $0x79] sm:$0xff] %vm223, %v289
        %323 = vst.msk [vmem:[%s311 + $0x81] sm:$0xff] %vm223, %v290
        %324 = vst.msk [vmem:[%s311 + $0x91] sm:$0xff] %vm223, %v291
        %325 = vst.msk [vmem:[%s311 + $0x99] sm:$0xff] %vm223, %v292
        %326 = vst.msk [vmem:[%s311 + $0xa9] sm:$0xff] %vm223, %v293
        %327 = vst.msk [vmem:[%s311 + $0xb1] sm:$0xff] %vm223, %v294
        %328 = vst.msk [vmem:[%s311 + $0xc1] sm:$0xff] %vm223, %v295
        %329 = vst.msk [vmem:[%s311 + $0xc9] sm:$0xff] %vm223, %v296
        %330 = vst.msk [vmem:[%s311 + $0xd9] sm:$0xff] %vm223, %v297
        %331 = vst.msk [vmem:[%s311 + $0xe1] sm:$0xff] %vm223, %v298
        %332 = vst.msk [vmem:[%s311 + $0xf1] sm:$0xff] %vm223, %v299
        %333 = vst.msk [vmem:[%s311 + $0xf9] sm:$0xff] %vm223, %v300
        %334 = vst.msk [vmem:[%s311 + $0x109] sm:$0xff] %vm223, %v301
        %335 = vst.msk [vmem:[%s311 + $0x111] sm:$0xff] %vm223, %v302
        %336 = vst.msk [vmem:[%s311 + $0x121] sm:$0xff] %vm223, %v303
        %337 = vst.msk [vmem:[%s311 + $0x129] sm:$0xff] %vm223, %v304
        %338 = vst.msk [vmem:[%s311 + $0x139] sm:$0xff] %vm223, %v305
        %339 = vst.msk [vmem:[%s311 + $0x141] sm:$0xff] %vm223, %v306
        %340 = vst.msk [vmem:[%s311 + $0x151] sm:$0xff] %vm223, %v307
        %341 = vst.msk [vmem:[%s311 + $0x159] sm:$0xff] %vm223, %v308
        %342 = vst.msk [vmem:[%s311 + $0x169] sm:$0xff] %vm223, %v309
        %343 = vst.msk [vmem:[%s311 + $0x171] sm:$0xff] %vm223, %v310
        %v344 = vld [vmem:[#allocation2] sm:$0xff]
        %v345 = vld [vmem:[#allocation2 + $0x8] sm:$0xff]
        %v346 = vld [vmem:[#allocation2 + $0x18] sm:$0xff]
        %v347 = vld [vmem:[#allocation2 + $0x20] sm:$0xff]
        %v348 = vld [vmem:[#allocation2 + $0x30] sm:$0xff]
        %v349 = vld [vmem:[#allocation2 + $0x38] sm:$0xff]
        %v350 = vld [vmem:[#allocation2 + $0x48] sm:$0xff]
        %v351 = vld [vmem:[#allocation2 + $0x50] sm:$0xff]
        %v352 = vld [vmem:[#allocation2 + $0x60] sm:$0xff]
        %v353 = vld [vmem:[#allocation2 + $0x68] sm:$0xff]
        %v354 = vld [vmem:[#allocation2 + $0x78] sm:$0xff]
        %v355 = vld [vmem:[#allocation2 + $0x80] sm:$0xff]
        %v356 = vld [vmem:[#allocation2 + $0x90] sm:$0xff]
        %v357 = vld [vmem:[#allocation2 + $0x98] sm:$0xff]
        %v358 = vld [vmem:[#allocation2 + $0xa8] sm:$0xff]
        %v359 = vld [vmem:[#allocation2 + $0xb0] sm:$0xff]
        %v360 = vld [vmem:[#allocation2 + $0xc0] sm:$0xff]
        %v361 = vld [vmem:[#allocation2 + $0xc8] sm:$0xff]
        %v362 = vld [vmem:[#allocation2 + $0xd8] sm:$0xff]
        %v363 = vld [vmem:[#allocation2 + $0xe0] sm:$0xff]
        %v364 = vld [vmem:[#allocation2 + $0xf0] sm:$0xff]
        %v365 = vld [vmem:[#allocation2 + $0xf8] sm:$0xff]
        %v366 = vld [vmem:[#allocation2 + $0x108] sm:$0xff]
        %v367 = vld [vmem:[#allocation2 + $0x110] sm:$0xff]
        %v368 = vld [vmem:[#allocation2 + $0x120] sm:$0xff]
        %v369 = vld [vmem:[#allocation2 + $0x128] sm:$0xff]
        %v370 = vld [vmem:[#allocation2 + $0x138] sm:$0xff]
        %v371 = vld [vmem:[#allocation2 + $0x140] sm:$0xff]
        %v372 = vld [vmem:[#allocation2 + $0x150] sm:$0xff]
        %v373 = vld [vmem:[#allocation2 + $0x158] sm:$0xff]
        %v374 = vld [vmem:[#allocation2 + $0x168] sm:$0xff]
        %v375 = vld [vmem:[#allocation2 + $0x170] sm:$0xff]
        %v376 = vld [vmem:[%s1] sm:$0xff]
        %v377 = vld [vmem:[#allocation2 + $0x1] sm:$0xff]
        %v378 = vld [vmem:[#allocation2 + $0x9] sm:$0xff]
        %v379 = vld [vmem:[#allocation2 + $0x19] sm:$0xff]
        %v380 = vld [vmem:[#allocation2 + $0x21] sm:$0xff]
        %v381 = vld [vmem:[#allocation2 + $0x31] sm:$0xff]
        %v382 = vld [vmem:[#allocation2 + $0x39] sm:$0xff]
        %v383 = vld [vmem:[#allocation2 + $0x49] sm:$0xff]
        %v384 = vld [vmem:[#allocation2 + $0x51] sm:$0xff]
        %v385 = vld [vmem:[#allocation2 + $0x61] sm:$0xff]
        %v386 = vld [vmem:[#allocation2 + $0x69] sm:$0xff]
        %v387 = vld [vmem:[#allocation2 + $0x79] sm:$0xff]
        %v388 = vld [vmem:[#allocation2 + $0x81] sm:$0xff]
        %v389 = vld [vmem:[#allocation2 + $0x91] sm:$0xff]
        %v390 = vld [vmem:[#allocation2 + $0x99] sm:$0xff]
        %v391 = vld [vmem:[#allocation2 + $0xa9] sm:$0xff]
        %v392 = vld [vmem:[#allocation2 + $0xb1] sm:$0xff]
        %v393 = vld [vmem:[#allocation2 + $0xc1] sm:$0xff]
        %v394 = vld [vmem:[#allocation2 + $0xc9] sm:$0xff]
        %v395 = vld [vmem:[#allocation2 + $0xd9] sm:$0xff]
        %v396 = vld [vmem:[#allocation2 + $0xe1] sm:$0xff]
        %v397 = vld [vmem:[#allocation2 + $0xf1] sm:$0xff]
        %v398 = vld [vmem:[#allocation2 + $0xf9] sm:$0xff]
        %v399 = vld [vmem:[#allocation2 + $0x109] sm:$0xff]
        %v400 = vld [vmem:[#allocation2 + $0x111] sm:$0xff]
        %v401 = vld [vmem:[#allocation2 + $0x121] sm:$0xff]
        %v402 = vld [vmem:[#allocation2 + $0x129] sm:$0xff]
        %v403 = vld [vmem:[#allocation2 + $0x139] sm:$0xff]
        %v404 = vld [vmem:[#allocation2 + $0x141] sm:$0xff]
        %v405 = vld [vmem:[#allocation2 + $0x151] sm:$0xff]
        %v406 = vld [vmem:[#allocation2 + $0x159] sm:$0xff]
        %v407 = vld [vmem:[#allocation2 + $0x169] sm:$0xff]
        %v408 = vld [vmem:[#allocation2 + $0x171] sm:$0xff]
        %s409 = scalar_lea.vmem %s1, 8
        %v410 = vld [vmem:[%s409] sm:$0xff]
        %v412 = vsel %vm223, %v377, 0
        %v415 = vsel %vm223, %v378, 0
        %v418 = vsel %vm223, %v379, 0
        %v421 = vsel %vm223, %v380, 0
        %v424 = vsel %vm223, %v381, 0
        %v427 = vsel %vm223, %v382, 0
        %v430 = vsel %vm223, %v383, 0
        %v433 = vsel %vm223, %v384, 0
        %v436 = vsel %vm223, %v385, 0
        %v439 = vsel %vm223, %v386, 0
        %v442 = vsel %vm223, %v387, 0
        %v445 = vsel %vm223, %v388, 0
        %v448 = vsel %vm223, %v389, 0
        %v451 = vsel %vm223, %v390, 0
        %v454 = vsel %vm223, %v391, 0
        %v457 = vsel %vm223, %v392, 0
        %v460 = vsel %vm223, %v393, 0
        %v463 = vsel %vm223, %v394, 0
        %v466 = vsel %vm223, %v395, 0
        %v469 = vsel %vm223, %v396, 0
        %v472 = vsel %vm223, %v397, 0
        %v475 = vsel %vm223, %v398, 0
        %v478 = vsel %vm223, %v399, 0
        %v481 = vsel %vm223, %v400, 0
        %v484 = vsel %vm223, %v401, 0
        %v487 = vsel %vm223, %v402, 0
        %v490 = vsel %vm223, %v403, 0
        %v493 = vsel %vm223, %v404, 0
        %v496 = vsel %vm223, %v405, 0
        %v499 = vsel %vm223, %v406, 0
        %v502 = vsel %vm223, %v407, 0
        %v505 = vsel %vm223, %v408, 0
        %507 = vmatpush.msra.mxu0 0.0
        %508 = vmatpush.msra.mxu0 0.0
        %509 = vmatpush.msra.mxu0 0.0
        %510 = vmatpush.msra.mxu0 0.0
        %511 = vmatpush.msra.mxu0 0.0
        %512 = vmatpush.msra.mxu0 0.0
        %513 = vmatpush.msra.mxu0 0.0
        %514 = vmatpush.msra.mxu0 0.0
        %515 = vmatpush.msra.mxu0 0.0
        %516 = vmatpush.msra.mxu0 0.0
        %517 = vmatpush.msra.mxu0 0.0
        %518 = vmatpush.msra.mxu0 0.0
        %519 = vmatpush.msra.mxu0 0.0
        %520 = vmatpush.msra.mxu0 0.0
        %521 = vmatpush.msra.mxu0 0.0
        %522 = vmatpush.msra.mxu0 %v410
        %523 = vmatmul.f32.gmra.mxu0 %v412
        %v524 = vpop.f32.mrf.mxu0
        %v525 = vadd.f32 0.0, %v524
        %526 = vmatmul.f32.gmra.mxu0 %v415
        %v527 = vpop.f32.mrf.mxu0
        %v528 = vadd.f32 0.0, %v527
        %529 = vmatmul.f32.gmra.mxu0 %v418
        %v530 = vpop.f32.mrf.mxu0
        %v531 = vadd.f32 0.0, %v530
        %532 = vmatmul.f32.gmra.mxu0 %v421
        %v533 = vpop.f32.mrf.mxu0
        %v534 = vadd.f32 0.0, %v533
        %535 = vmatmul.f32.gmra.mxu0 %v424
        %v536 = vpop.f32.mrf.mxu0
        %v537 = vadd.f32 0.0, %v536
        %538 = vmatmul.f32.gmra.mxu0 %v427
        %v539 = vpop.f32.mrf.mxu0
        %v540 = vadd.f32 0.0, %v539
        %541 = vmatmul.f32.gmra.mxu0 %v430
        %v542 = vpop.f32.mrf.mxu0
        %v543 = vadd.f32 0.0, %v542
        %544 = vmatmul.f32.gmra.mxu0 %v433
        %v545 = vpop.f32.mrf.mxu0
        %v546 = vadd.f32 0.0, %v545
        %547 = vmatmul.f32.gmra.mxu0 %v436
        %v548 = vpop.f32.mrf.mxu0
        %v549 = vadd.f32 0.0, %v548
        %550 = vmatmul.f32.gmra.mxu0 %v439
        %v551 = vpop.f32.mrf.mxu0
        %v552 = vadd.f32 0.0, %v551
        %553 = vmatmul.f32.gmra.mxu0 %v442
        %v554 = vpop.f32.mrf.mxu0
        %v555 = vadd.f32 0.0, %v554
        %556 = vmatmul.f32.gmra.mxu0 %v445
        %v557 = vpop.f32.mrf.mxu0
        %v558 = vadd.f32 0.0, %v557
        %559 = vmatmul.f32.gmra.mxu0 %v448
        %v560 = vpop.f32.mrf.mxu0
        %v561 = vadd.f32 0.0, %v560
        %562 = vmatmul.f32.gmra.mxu0 %v451
        %v563 = vpop.f32.mrf.mxu0
        %v564 = vadd.f32 0.0, %v563
        %565 = vmatmul.f32.gmra.mxu0 %v454
        %v566 = vpop.f32.mrf.mxu0
        %v567 = vadd.f32 0.0, %v566
        %568 = vmatmul.f32.gmra.mxu0 %v457
        %v569 = vpop.f32.mrf.mxu0
        %v570 = vadd.f32 0.0, %v569
        %571 = vmatmul.f32.gmra.mxu0 %v460
        %v572 = vpop.f32.mrf.mxu0
        %v573 = vadd.f32 0.0, %v572
        %574 = vmatmul.f32.gmra.mxu0 %v463
        %v575 = vpop.f32.mrf.mxu0
        %v576 = vadd.f32 0.0, %v575
        %577 = vmatmul.f32.gmra.mxu0 %v466
        %v578 = vpop.f32.mrf.mxu0
        %v579 = vadd.f32 0.0, %v578
        %580 = vmatmul.f32.gmra.mxu0 %v469
        %v581 = vpop.f32.mrf.mxu0
        %v582 = vadd.f32 0.0, %v581
        %583 = vmatmul.f32.gmra.mxu0 %v472
        %v584 = vpop.f32.mrf.mxu0
        %v585 = vadd.f32 0.0, %v584
        %586 = vmatmul.f32.gmra.mxu0 %v475
        %v587 = vpop.f32.mrf.mxu0
        %v588 = vadd.f32 0.0, %v587
        %589 = vmatmul.f32.gmra.mxu0 %v478
        %v590 = vpop.f32.mrf.mxu0
        %v591 = vadd.f32 0.0, %v590
        %592 = vmatmul.f32.gmra.mxu0 %v481
        %v593 = vpop.f32.mrf.mxu0
        %v594 = vadd.f32 0.0, %v593
        %595 = vmatmul.f32.gmra.mxu0 %v484
        %v596 = vpop.f32.mrf.mxu0
        %v597 = vadd.f32 0.0, %v596
        %598 = vmatmul.f32.gmra.mxu0 %v487
        %v599 = vpop.f32.mrf.mxu0
        %v600 = vadd.f32 0.0, %v599
        %601 = vmatmul.f32.gmra.mxu0 %v490
        %v602 = vpop.f32.mrf.mxu0
        %v603 = vadd.f32 0.0, %v602
        %604 = vmatmul.f32.gmra.mxu0 %v493
        %v605 = vpop.f32.mrf.mxu0
        %v606 = vadd.f32 0.0, %v605
        %607 = vmatmul.f32.gmra.mxu0 %v496
        %v608 = vpop.f32.mrf.mxu0
        %v609 = vadd.f32 0.0, %v608
        %610 = vmatmul.f32.gmra.mxu0 %v499
        %v611 = vpop.f32.mrf.mxu0
        %v612 = vadd.f32 0.0, %v611
        %613 = vmatmul.f32.gmra.mxu0 %v502
        %v614 = vpop.f32.mrf.mxu0
        %v615 = vadd.f32 0.0, %v614
        %616 = vmatmul.f32.gmra.mxu0 %v505
        %v617 = vpop.f32.mrf.mxu0
        %v618 = vadd.f32 0.0, %v617
        %619 = vdwg.mxu0
        %v621 = vsel %vm223, %v344, 0
        %v624 = vsel %vm223, %v345, 0
        %v627 = vsel %vm223, %v346, 0
        %v630 = vsel %vm223, %v347, 0
        %v633 = vsel %vm223, %v348, 0
        %v636 = vsel %vm223, %v349, 0
        %v639 = vsel %vm223, %v350, 0
        %v642 = vsel %vm223, %v351, 0
        %v645 = vsel %vm223, %v352, 0
        %v648 = vsel %vm223, %v353, 0
        %v651 = vsel %vm223, %v354, 0
        %v654 = vsel %vm223, %v355, 0
        %v657 = vsel %vm223, %v356, 0
        %v660 = vsel %vm223, %v357, 0
        %v663 = vsel %vm223, %v358, 0
        %v666 = vsel %vm223, %v359, 0
        %v669 = vsel %vm223, %v360, 0
        %v672 = vsel %vm223, %v361, 0
        %v675 = vsel %vm223, %v362, 0
        %v678 = vsel %vm223, %v363, 0
        %v681 = vsel %vm223, %v364, 0
        %v684 = vsel %vm223, %v365, 0
        %v687 = vsel %vm223, %v366, 0
        %v690 = vsel %vm223, %v367, 0
        %v693 = vsel %vm223, %v368, 0
        %v696 = vsel %vm223, %v369, 0
        %v699 = vsel %vm223, %v370, 0
        %v702 = vsel %vm223, %v371, 0
        %v705 = vsel %vm223, %v372, 0
        %v708 = vsel %vm223, %v373, 0
        %v711 = vsel %vm223, %v374, 0
        %v714 = vsel %vm223, %v375, 0
        %716 = vmatpush.msra.mxu0 0.0
        %717 = vmatpush.msra.mxu0 0.0
        %718 = vmatpush.msra.mxu0 0.0
        %719 = vmatpush.msra.mxu0 0.0
        %720 = vmatpush.msra.mxu0 0.0
        %721 = vmatpush.msra.mxu0 0.0
        %722 = vmatpush.msra.mxu0 0.0
        %723 = vmatpush.msra.mxu0 0.0
        %724 = vmatpush.msra.mxu0 0.0
        %725 = vmatpush.msra.mxu0 0.0
        %726 = vmatpush.msra.mxu0 0.0
        %727 = vmatpush.msra.mxu0 0.0
        %728 = vmatpush.msra.mxu0 0.0
        %729 = vmatpush.msra.mxu0 0.0
        %730 = vmatpush.msra.mxu0 0.0
        %731 = vmatpush.msra.mxu0 %v376
        %732 = vmatmul.f32.gmra.mxu0 %v621
        %v733 = vpop.f32.mrf.mxu0
        %v734 = vadd.f32 %v525, %v733
        %735 = vmatmul.f32.gmra.mxu0 %v624
        %v736 = vpop.f32.mrf.mxu0
        %v737 = vadd.f32 %v528, %v736
        %738 = vmatmul.f32.gmra.mxu0 %v627
        %v739 = vpop.f32.mrf.mxu0
        %v740 = vadd.f32 %v531, %v739
        %741 = vmatmul.f32.gmra.mxu0 %v630
        %v742 = vpop.f32.mrf.mxu0
        %v743 = vadd.f32 %v534, %v742
        %744 = vmatmul.f32.gmra.mxu0 %v633
        %v745 = vpop.f32.mrf.mxu0
        %v746 = vadd.f32 %v537, %v745
        %747 = vmatmul.f32.gmra.mxu0 %v636
        %v748 = vpop.f32.mrf.mxu0
        %v749 = vadd.f32 %v540, %v748
        %750 = vmatmul.f32.gmra.mxu0 %v639
        %v751 = vpop.f32.mrf.mxu0
        %v752 = vadd.f32 %v543, %v751
        %753 = vmatmul.f32.gmra.mxu0 %v642
        %v754 = vpop.f32.mrf.mxu0
        %v755 = vadd.f32 %v546, %v754
        %756 = vmatmul.f32.gmra.mxu0 %v645
        %v757 = vpop.f32.mrf.mxu0
        %v758 = vadd.f32 %v549, %v757
        %759 = vmatmul.f32.gmra.mxu0 %v648
        %v760 = vpop.f32.mrf.mxu0
        %v761 = vadd.f32 %v552, %v760
        %762 = vmatmul.f32.gmra.mxu0 %v651
        %v763 = vpop.f32.mrf.mxu0
        %v764 = vadd.f32 %v555, %v763
        %765 = vmatmul.f32.gmra.mxu0 %v654
        %v766 = vpop.f32.mrf.mxu0
        %v767 = vadd.f32 %v558, %v766
        %768 = vmatmul.f32.gmra.mxu0 %v657
        %v769 = vpop.f32.mrf.mxu0
        %v770 = vadd.f32 %v561, %v769
        %771 = vmatmul.f32.gmra.mxu0 %v660
        %v772 = vpop.f32.mrf.mxu0
        %v773 = vadd.f32 %v564, %v772
        %774 = vmatmul.f32.gmra.mxu0 %v663
        %v775 = vpop.f32.mrf.mxu0
        %v776 = vadd.f32 %v567, %v775
        %777 = vmatmul.f32.gmra.mxu0 %v666
        %v778 = vpop.f32.mrf.mxu0
        %v779 = vadd.f32 %v570, %v778
        %780 = vmatmul.f32.gmra.mxu0 %v669
        %v781 = vpop.f32.mrf.mxu0
        %v782 = vadd.f32 %v573, %v781
        %783 = vmatmul.f32.gmra.mxu0 %v672
        %v784 = vpop.f32.mrf.mxu0
        %v785 = vadd.f32 %v576, %v784
        %786 = vmatmul.f32.gmra.mxu0 %v675
        %v787 = vpop.f32.mrf.mxu0
        %v788 = vadd.f32 %v579, %v787
        %789 = vmatmul.f32.gmra.mxu0 %v678
        %v790 = vpop.f32.mrf.mxu0
        %v791 = vadd.f32 %v582, %v790
        %792 = vmatmul.f32.gmra.mxu0 %v681
        %v793 = vpop.f32.mrf.mxu0
        %v794 = vadd.f32 %v585, %v793
        %795 = vmatmul.f32.gmra.mxu0 %v684
        %v796 = vpop.f32.mrf.mxu0
        %v797 = vadd.f32 %v588, %v796
        %798 = vmatmul.f32.gmra.mxu0 %v687
        %v799 = vpop.f32.mrf.mxu0
        %v800 = vadd.f32 %v591, %v799
        %801 = vmatmul.f32.gmra.mxu0 %v690
        %v802 = vpop.f32.mrf.mxu0
        %v803 = vadd.f32 %v594, %v802
        %804 = vmatmul.f32.gmra.mxu0 %v693
        %v805 = vpop.f32.mrf.mxu0
        %v806 = vadd.f32 %v597, %v805
        %807 = vmatmul.f32.gmra.mxu0 %v696
        %v808 = vpop.f32.mrf.mxu0
        %v809 = vadd.f32 %v600, %v808
        %810 = vmatmul.f32.gmra.mxu0 %v699
        %v811 = vpop.f32.mrf.mxu0
        %v812 = vadd.f32 %v603, %v811
        %813 = vmatmul.f32.gmra.mxu0 %v702
        %v814 = vpop.f32.mrf.mxu0
        %v815 = vadd.f32 %v606, %v814
        %816 = vmatmul.f32.gmra.mxu0 %v705
        %v817 = vpop.f32.mrf.mxu0
        %v818 = vadd.f32 %v609, %v817
        %819 = vmatmul.f32.gmra.mxu0 %v708
        %v820 = vpop.f32.mrf.mxu0
        %v821 = vadd.f32 %v612, %v820
        %822 = vmatmul.f32.gmra.mxu0 %v711
        %v823 = vpop.f32.mrf.mxu0
        %v824 = vadd.f32 %v615, %v823
        %825 = vmatmul.f32.gmra.mxu0 %v714
        %v826 = vpop.f32.mrf.mxu0
        %v827 = vadd.f32 %v618, %v826
        %828 = vdwg.mxu0
        %v829 = vld [vmem:[#allocation2 + $0x2] sm:$0xff]
        %v830 = vld [vmem:[#allocation2 + $0xa] sm:$0xff]
        %v831 = vld [vmem:[#allocation2 + $0x1a] sm:$0xff]
        %v832 = vld [vmem:[#allocation2 + $0x22] sm:$0xff]
        %v833 = vld [vmem:[#allocation2 + $0x32] sm:$0xff]
        %v834 = vld [vmem:[#allocation2 + $0x3a] sm:$0xff]
        %v835 = vld [vmem:[#allocation2 + $0x4a] sm:$0xff]
        %v836 = vld [vmem:[#allocation2 + $0x52] sm:$0xff]
        %v837 = vld [vmem:[#allocation2 + $0x62] sm:$0xff]
        %v838 = vld [vmem:[#allocation2 + $0x6a] sm:$0xff]
        %v839 = vld [vmem:[#allocation2 + $0x7a] sm:$0xff]
        %v840 = vld [vmem:[#allocation2 + $0x82] sm:$0xff]
        %v841 = vld [vmem:[#allocation2 + $0x92] sm:$0xff]
        %v842 = vld [vmem:[#allocation2 + $0x9a] sm:$0xff]
        %v843 = vld [vmem:[#allocation2 + $0xaa] sm:$0xff]
        %v844 = vld [vmem:[#allocation2 + $0xb2] sm:$0xff]
        %v845 = vld [vmem:[#allocation2 + $0xc2] sm:$0xff]
        %v846 = vld [vmem:[#allocation2 + $0xca] sm:$0xff]
        %v847 = vld [vmem:[#allocation2 + $0xda] sm:$0xff]
        %v848 = vld [vmem:[#allocation2 + $0xe2] sm:$0xff]
        %v849 = vld [vmem:[#allocation2 + $0xf2] sm:$0xff]
        %v850 = vld [vmem:[#allocation2 + $0xfa] sm:$0xff]
        %v851 = vld [vmem:[#allocation2 + $0x10a] sm:$0xff]
        %v852 = vld [vmem:[#allocation2 + $0x112] sm:$0xff]
        %v853 = vld [vmem:[#allocation2 + $0x122] sm:$0xff]
        %v854 = vld [vmem:[#allocation2 + $0x12a] sm:$0xff]
        %v855 = vld [vmem:[#allocation2 + $0x13a] sm:$0xff]
        %v856 = vld [vmem:[#allocation2 + $0x142] sm:$0xff]
        %v857 = vld [vmem:[#allocation2 + $0x152] sm:$0xff]
        %v858 = vld [vmem:[#allocation2 + $0x15a] sm:$0xff]
        %v859 = vld [vmem:[#allocation2 + $0x16a] sm:$0xff]
        %v860 = vld [vmem:[#allocation2 + $0x172] sm:$0xff]
        %s861 = scalar_lea.vmem %s1, 16
        %v862 = vld [vmem:[%s861] sm:$0xff]
        %v864 = vsel %vm223, %v829, 0
        %v867 = vsel %vm223, %v830, 0
        %v870 = vsel %vm223, %v831, 0
        %v873 = vsel %vm223, %v832, 0
        %v876 = vsel %vm223, %v833, 0
        %v879 = vsel %vm223, %v834, 0
        %v882 = vsel %vm223, %v835, 0
        %v885 = vsel %vm223, %v836, 0
        %v888 = vsel %vm223, %v837, 0
        %v891 = vsel %vm223, %v838, 0
        %v894 = vsel %vm223, %v839, 0
        %v897 = vsel %vm223, %v840, 0
        %v900 = vsel %vm223, %v841, 0
        %v903 = vsel %vm223, %v842, 0
        %v906 = vsel %vm223, %v843, 0
        %v909 = vsel %vm223, %v844, 0
        %v912 = vsel %vm223, %v845, 0
        %v915 = vsel %vm223, %v846, 0
        %v918 = vsel %vm223, %v847, 0
        %v921 = vsel %vm223, %v848, 0
        %v924 = vsel %vm223, %v849, 0
        %v927 = vsel %vm223, %v850, 0
        %v930 = vsel %vm223, %v851, 0
        %v933 = vsel %vm223, %v852, 0
        %v936 = vsel %vm223, %v853, 0
        %v939 = vsel %vm223, %v854, 0
        %v942 = vsel %vm223, %v855, 0
        %v945 = vsel %vm223, %v856, 0
        %v948 = vsel %vm223, %v857, 0
        %v951 = vsel %vm223, %v858, 0
        %v954 = vsel %vm223, %v859, 0
        %v957 = vsel %vm223, %v860, 0
        %959 = vmatpush.msra.mxu0 0.0
        %960 = vmatpush.msra.mxu0 0.0
        %961 = vmatpush.msra.mxu0 0.0
        %962 = vmatpush.msra.mxu0 0.0
        %963 = vmatpush.msra.mxu0 0.0
        %964 = vmatpush.msra.mxu0 0.0
        %965 = vmatpush.msra.mxu0 0.0
        %966 = vmatpush.msra.mxu0 0.0
        %967 = vmatpush.msra.mxu0 0.0
        %968 = vmatpush.msra.mxu0 0.0
        %969 = vmatpush.msra.mxu0 0.0
        %970 = vmatpush.msra.mxu0 0.0
        %971 = vmatpush.msra.mxu0 0.0
        %972 = vmatpush.msra.mxu0 0.0
        %973 = vmatpush.msra.mxu0 0.0
        %974 = vmatpush.msra.mxu0 %v862
        %975 = vmatmul.f32.gmra.mxu0 %v864
        %v976 = vpop.f32.mrf.mxu0
        %v977 = vadd.f32 0.0, %v976
        %978 = vmatmul.f32.gmra.mxu0 %v867
        %v979 = vpop.f32.mrf.mxu0
        %v980 = vadd.f32 0.0, %v979
        %981 = vmatmul.f32.gmra.mxu0 %v870
        %v982 = vpop.f32.mrf.mxu0
        %v983 = vadd.f32 0.0, %v982
        %984 = vmatmul.f32.gmra.mxu0 %v873
        %v985 = vpop.f32.mrf.mxu0
        %v986 = vadd.f32 0.0, %v985
        %987 = vmatmul.f32.gmra.mxu0 %v876
        %v988 = vpop.f32.mrf.mxu0
        %v989 = vadd.f32 0.0, %v988
        %990 = vmatmul.f32.gmra.mxu0 %v879
        %v991 = vpop.f32.mrf.mxu0
        %v992 = vadd.f32 0.0, %v991
        %993 = vmatmul.f32.gmra.mxu0 %v882
        %v994 = vpop.f32.mrf.mxu0
        %v995 = vadd.f32 0.0, %v994
        %996 = vmatmul.f32.gmra.mxu0 %v885
        %v997 = vpop.f32.mrf.mxu0
        %v998 = vadd.f32 0.0, %v997
        %999 = vmatmul.f32.gmra.mxu0 %v888
        %v1000 = vpop.f32.mrf.mxu0
        %v1001 = vadd.f32 0.0, %v1000
        %1002 = vmatmul.f32.gmra.mxu0 %v891
        %v1003 = vpop.f32.mrf.mxu0
        %v1004 = vadd.f32 0.0, %v1003
        %1005 = vmatmul.f32.gmra.mxu0 %v894
        %v1006 = vpop.f32.mrf.mxu0
        %v1007 = vadd.f32 0.0, %v1006
        %1008 = vmatmul.f32.gmra.mxu0 %v897
        %v1009 = vpop.f32.mrf.mxu0
        %v1010 = vadd.f32 0.0, %v1009
        %1011 = vmatmul.f32.gmra.mxu0 %v900
        %v1012 = vpop.f32.mrf.mxu0
        %v1013 = vadd.f32 0.0, %v1012
        %1014 = vmatmul.f32.gmra.mxu0 %v903
        %v1015 = vpop.f32.mrf.mxu0
        %v1016 = vadd.f32 0.0, %v1015
        %1017 = vmatmul.f32.gmra.mxu0 %v906
        %v1018 = vpop.f32.mrf.mxu0
        %v1019 = vadd.f32 0.0, %v1018
        %1020 = vmatmul.f32.gmra.mxu0 %v909
        %v1021 = vpop.f32.mrf.mxu0
        %v1022 = vadd.f32 0.0, %v1021
        %1023 = vmatmul.f32.gmra.mxu0 %v912
        %v1024 = vpop.f32.mrf.mxu0
        %v1025 = vadd.f32 0.0, %v1024
        %1026 = vmatmul.f32.gmra.mxu0 %v915
        %v1027 = vpop.f32.mrf.mxu0
        %v1028 = vadd.f32 0.0, %v1027
        %1029 = vmatmul.f32.gmra.mxu0 %v918
        %v1030 = vpop.f32.mrf.mxu0
        %v1031 = vadd.f32 0.0, %v1030
        %1032 = vmatmul.f32.gmra.mxu0 %v921
        %v1033 = vpop.f32.mrf.mxu0
        %v1034 = vadd.f32 0.0, %v1033
        %1035 = vmatmul.f32.gmra.mxu0 %v924
        %v1036 = vpop.f32.mrf.mxu0
        %v1037 = vadd.f32 0.0, %v1036
        %1038 = vmatmul.f32.gmra.mxu0 %v927
        %v1039 = vpop.f32.mrf.mxu0
        %v1040 = vadd.f32 0.0, %v1039
        %1041 = vmatmul.f32.gmra.mxu0 %v930
        %v1042 = vpop.f32.mrf.mxu0
        %v1043 = vadd.f32 0.0, %v1042
        %1044 = vmatmul.f32.gmra.mxu0 %v933
        %v1045 = vpop.f32.mrf.mxu0
        %v1046 = vadd.f32 0.0, %v1045
        %1047 = vmatmul.f32.gmra.mxu0 %v936
        %v1048 = vpop.f32.mrf.mxu0
        %v1049 = vadd.f32 0.0, %v1048
        %1050 = vmatmul.f32.gmra.mxu0 %v939
        %v1051 = vpop.f32.mrf.mxu0
        %v1052 = vadd.f32 0.0, %v1051
        %1053 = vmatmul.f32.gmra.mxu0 %v942
        %v1054 = vpop.f32.mrf.mxu0
        %v1055 = vadd.f32 0.0, %v1054
        %1056 = vmatmul.f32.gmra.mxu0 %v945
        %v1057 = vpop.f32.mrf.mxu0
        %v1058 = vadd.f32 0.0, %v1057
        %1059 = vmatmul.f32.gmra.mxu0 %v948
        %v1060 = vpop.f32.mrf.mxu0
        %v1061 = vadd.f32 0.0, %v1060
        %1062 = vmatmul.f32.gmra.mxu0 %v951
        %v1063 = vpop.f32.mrf.mxu0
        %v1064 = vadd.f32 0.0, %v1063
        %1065 = vmatmul.f32.gmra.mxu0 %v954
        %v1066 = vpop.f32.mrf.mxu0
        %v1067 = vadd.f32 0.0, %v1066
        %1068 = vmatmul.f32.gmra.mxu0 %v957
        %v1069 = vpop.f32.mrf.mxu0
        %v1070 = vadd.f32 0.0, %v1069
        %1071 = vdwg.mxu0
        %v1072 = vadd.f32 %v734, %v977
        %v1073 = vadd.f32 %v737, %v980
        %v1074 = vadd.f32 %v740, %v983
        %v1075 = vadd.f32 %v743, %v986
        %v1076 = vadd.f32 %v746, %v989
        %v1077 = vadd.f32 %v749, %v992
        %v1078 = vadd.f32 %v752, %v995
        %v1079 = vadd.f32 %v755, %v998
        %v1080 = vadd.f32 %v758, %v1001
        %v1081 = vadd.f32 %v761, %v1004
        %v1082 = vadd.f32 %v764, %v1007
        %v1083 = vadd.f32 %v767, %v1010
        %v1084 = vadd.f32 %v770, %v1013
        %v1085 = vadd.f32 %v773, %v1016
        %v1086 = vadd.f32 %v776, %v1019
        %v1087 = vadd.f32 %v779, %v1022
        %v1088 = vadd.f32 %v782, %v1025
        %v1089 = vadd.f32 %v785, %v1028
        %v1090 = vadd.f32 %v788, %v1031
        %v1091 = vadd.f32 %v791, %v1034
        %v1092 = vadd.f32 %v794, %v1037
        %v1093 = vadd.f32 %v797, %v1040
        %v1094 = vadd.f32 %v800, %v1043
        %v1095 = vadd.f32 %v803, %v1046
        %v1096 = vadd.f32 %v806, %v1049
        %v1097 = vadd.f32 %v809, %v1052
        %v1098 = vadd.f32 %v812, %v1055
        %v1099 = vadd.f32 %v815, %v1058
        %v1100 = vadd.f32 %v818, %v1061
        %v1101 = vadd.f32 %v821, %v1064
        %v1102 = vadd.f32 %v824, %v1067
        %v1103 = vadd.f32 %v827, %v1070
        %v1104 = vld [vmem:[%s311] sm:$0xff]
        %v1105 = vld [vmem:[%s311 + $0x8] sm:$0xff]
        %v1106 = vld [vmem:[%s311 + $0x18] sm:$0xff]
        %v1107 = vld [vmem:[%s311 + $0x20] sm:$0xff]
        %v1108 = vld [vmem:[%s311 + $0x30] sm:$0xff]
        %v1109 = vld [vmem:[%s311 + $0x38] sm:$0xff]
        %v1110 = vld [vmem:[%s311 + $0x48] sm:$0xff]
        %v1111 = vld [vmem:[%s311 + $0x50] sm:$0xff]
        %v1112 = vld [vmem:[%s311 + $0x60] sm:$0xff]
        %v1113 = vld [vmem:[%s311 + $0x68] sm:$0xff]
        %v1114 = vld [vmem:[%s311 + $0x78] sm:$0xff]
        %v1115 = vld [vmem:[%s311 + $0x80] sm:$0xff]
        %v1116 = vld [vmem:[%s311 + $0x90] sm:$0xff]
        %v1117 = vld [vmem:[%s311 + $0x98] sm:$0xff]
        %v1118 = vld [vmem:[%s311 + $0xa8] sm:$0xff]
        %v1119 = vld [vmem:[%s311 + $0xb0] sm:$0xff]
        %v1120 = vld [vmem:[%s311 + $0xc0] sm:$0xff]
        %v1121 = vld [vmem:[%s311 + $0xc8] sm:$0xff]
        %v1122 = vld [vmem:[%s311 + $0xd8] sm:$0xff]
        %v1123 = vld [vmem:[%s311 + $0xe0] sm:$0xff]
        %v1124 = vld [vmem:[%s311 + $0xf0] sm:$0xff]
        %v1125 = vld [vmem:[%s311 + $0xf8] sm:$0xff]
        %v1126 = vld [vmem:[%s311 + $0x108] sm:$0xff]
        %v1127 = vld [vmem:[%s311 + $0x110] sm:$0xff]
        %v1128 = vld [vmem:[%s311 + $0x120] sm:$0xff]
        %v1129 = vld [vmem:[%s311 + $0x128] sm:$0xff]
        %v1130 = vld [vmem:[%s311 + $0x138] sm:$0xff]
        %v1131 = vld [vmem:[%s311 + $0x140] sm:$0xff]
        %v1132 = vld [vmem:[%s311 + $0x150] sm:$0xff]
        %v1133 = vld [vmem:[%s311 + $0x158] sm:$0xff]
        %v1134 = vld [vmem:[%s311 + $0x168] sm:$0xff]
        %v1135 = vld [vmem:[%s311 + $0x170] sm:$0xff]
        %s1136 = scalar_lea.vmem %s1, 24
        %v1137 = vld [vmem:[%s1136] sm:$0xff]
        %v1139 = vsel %vm223, %v1104, 0
        %v1142 = vsel %vm223, %v1105, 0
        %v1145 = vsel %vm223, %v1106, 0
        %v1148 = vsel %vm223, %v1107, 0
        %v1151 = vsel %vm223, %v1108, 0
        %v1154 = vsel %vm223, %v1109, 0
        %v1157 = vsel %vm223, %v1110, 0
        %v1160 = vsel %vm223, %v1111, 0
        %v1163 = vsel %vm223, %v1112, 0
        %v1166 = vsel %vm223, %v1113, 0
        %v1169 = vsel %vm223, %v1114, 0
        %v1172 = vsel %vm223, %v1115, 0
        %v1175 = vsel %vm223, %v1116, 0
        %v1178 = vsel %vm223, %v1117, 0
        %v1181 = vsel %vm223, %v1118, 0
        %v1184 = vsel %vm223, %v1119, 0
        %v1187 = vsel %vm223, %v1120, 0
        %v1190 = vsel %vm223, %v1121, 0
        %v1193 = vsel %vm223, %v1122, 0
        %v1196 = vsel %vm223, %v1123, 0
        %v1199 = vsel %vm223, %v1124, 0
        %v1202 = vsel %vm223, %v1125, 0
        %v1205 = vsel %vm223, %v1126, 0
        %v1208 = vsel %vm223, %v1127, 0
        %v1211 = vsel %vm223, %v1128, 0
        %v1214 = vsel %vm223, %v1129, 0
        %v1217 = vsel %vm223, %v1130, 0
        %v1220 = vsel %vm223, %v1131, 0
        %v1223 = vsel %vm223, %v1132, 0
        %v1226 = vsel %vm223, %v1133, 0
        %v1229 = vsel %vm223, %v1134, 0
        %v1232 = vsel %vm223, %v1135, 0
        %1234 = vmatpush.msra.mxu0 0.0
        %1235 = vmatpush.msra.mxu0 0.0
        %1236 = vmatpush.msra.mxu0 0.0
        %1237 = vmatpush.msra.mxu0 0.0
        %1238 = vmatpush.msra.mxu0 0.0
        %1239 = vmatpush.msra.mxu0 0.0
        %1240 = vmatpush.msra.mxu0 0.0
        %1241 = vmatpush.msra.mxu0 0.0
        %1242 = vmatpush.msra.mxu0 0.0
        %1243 = vmatpush.msra.mxu0 0.0
        %1244 = vmatpush.msra.mxu0 0.0
        %1245 = vmatpush.msra.mxu0 0.0
        %1246 = vmatpush.msra.mxu0 0.0
        %1247 = vmatpush.msra.mxu0 0.0
        %1248 = vmatpush.msra.mxu0 0.0
        %1249 = vmatpush.msra.mxu0 %v1137
        %1250 = vmatmul.f32.gmra.mxu0 %v1139
        %v1251 = vpop.f32.mrf.mxu0
        %v1252 = vadd.f32 0.0, %v1251
        %1253 = vmatmul.f32.gmra.mxu0 %v1142
        %v1254 = vpop.f32.mrf.mxu0
        %v1255 = vadd.f32 0.0, %v1254
        %1256 = vmatmul.f32.gmra.mxu0 %v1145
        %v1257 = vpop.f32.mrf.mxu0
        %v1258 = vadd.f32 0.0, %v1257
        %1259 = vmatmul.f32.gmra.mxu0 %v1148
        %v1260 = vpop.f32.mrf.mxu0
        %v1261 = vadd.f32 0.0, %v1260
        %1262 = vmatmul.f32.gmra.mxu0 %v1151
        %v1263 = vpop.f32.mrf.mxu0
        %v1264 = vadd.f32 0.0, %v1263
        %1265 = vmatmul.f32.gmra.mxu0 %v1154
        %v1266 = vpop.f32.mrf.mxu0
        %v1267 = vadd.f32 0.0, %v1266
        %1268 = vmatmul.f32.gmra.mxu0 %v1157
        %v1269 = vpop.f32.mrf.mxu0
        %v1270 = vadd.f32 0.0, %v1269
        %1271 = vmatmul.f32.gmra.mxu0 %v1160
        %v1272 = vpop.f32.mrf.mxu0
        %v1273 = vadd.f32 0.0, %v1272
        %1274 = vmatmul.f32.gmra.mxu0 %v1163
        %v1275 = vpop.f32.mrf.mxu0
        %v1276 = vadd.f32 0.0, %v1275
        %1277 = vmatmul.f32.gmra.mxu0 %v1166
        %v1278 = vpop.f32.mrf.mxu0
        %v1279 = vadd.f32 0.0, %v1278
        %1280 = vmatmul.f32.gmra.mxu0 %v1169
        %v1281 = vpop.f32.mrf.mxu0
        %v1282 = vadd.f32 0.0, %v1281
        %1283 = vmatmul.f32.gmra.mxu0 %v1172
        %v1284 = vpop.f32.mrf.mxu0
        %v1285 = vadd.f32 0.0, %v1284
        %1286 = vmatmul.f32.gmra.mxu0 %v1175
        %v1287 = vpop.f32.mrf.mxu0
        %v1288 = vadd.f32 0.0, %v1287
        %1289 = vmatmul.f32.gmra.mxu0 %v1178
        %v1290 = vpop.f32.mrf.mxu0
        %v1291 = vadd.f32 0.0, %v1290
        %1292 = vmatmul.f32.gmra.mxu0 %v1181
        %v1293 = vpop.f32.mrf.mxu0
        %v1294 = vadd.f32 0.0, %v1293
        %1295 = vmatmul.f32.gmra.mxu0 %v1184
        %v1296 = vpop.f32.mrf.mxu0
        %v1297 = vadd.f32 0.0, %v1296
        %1298 = vmatmul.f32.gmra.mxu0 %v1187
        %v1299 = vpop.f32.mrf.mxu0
        %v1300 = vadd.f32 0.0, %v1299
        %1301 = vmatmul.f32.gmra.mxu0 %v1190
        %v1302 = vpop.f32.mrf.mxu0
        %v1303 = vadd.f32 0.0, %v1302
        %1304 = vmatmul.f32.gmra.mxu0 %v1193
        %v1305 = vpop.f32.mrf.mxu0
        %v1306 = vadd.f32 0.0, %v1305
        %1307 = vmatmul.f32.gmra.mxu0 %v1196
        %v1308 = vpop.f32.mrf.mxu0
        %v1309 = vadd.f32 0.0, %v1308
        %1310 = vmatmul.f32.gmra.mxu0 %v1199
        %v1311 = vpop.f32.mrf.mxu0
        %v1312 = vadd.f32 0.0, %v1311
        %1313 = vmatmul.f32.gmra.mxu0 %v1202
        %v1314 = vpop.f32.mrf.mxu0
        %v1315 = vadd.f32 0.0, %v1314
        %1316 = vmatmul.f32.gmra.mxu0 %v1205
        %v1317 = vpop.f32.mrf.mxu0
        %v1318 = vadd.f32 0.0, %v1317
        %1319 = vmatmul.f32.gmra.mxu0 %v1208
        %v1320 = vpop.f32.mrf.mxu0
        %v1321 = vadd.f32 0.0, %v1320
        %1322 = vmatmul.f32.gmra.mxu0 %v1211
        %v1323 = vpop.f32.mrf.mxu0
        %v1324 = vadd.f32 0.0, %v1323
        %1325 = vmatmul.f32.gmra.mxu0 %v1214
        %v1326 = vpop.f32.mrf.mxu0
        %v1327 = vadd.f32 0.0, %v1326
        %1328 = vmatmul.f32.gmra.mxu0 %v1217
        %v1329 = vpop.f32.mrf.mxu0
        %v1330 = vadd.f32 0.0, %v1329
        %1331 = vmatmul.f32.gmra.mxu0 %v1220
        %v1332 = vpop.f32.mrf.mxu0
        %v1333 = vadd.f32 0.0, %v1332
        %1334 = vmatmul.f32.gmra.mxu0 %v1223
        %v1335 = vpop.f32.mrf.mxu0
        %v1336 = vadd.f32 0.0, %v1335
        %1337 = vmatmul.f32.gmra.mxu0 %v1226
        %v1338 = vpop.f32.mrf.mxu0
        %v1339 = vadd.f32 0.0, %v1338
        %1340 = vmatmul.f32.gmra.mxu0 %v1229
        %v1341 = vpop.f32.mrf.mxu0
        %v1342 = vadd.f32 0.0, %v1341
        %1343 = vmatmul.f32.gmra.mxu0 %v1232
        %v1344 = vpop.f32.mrf.mxu0
        %v1345 = vadd.f32 0.0, %v1344
        %1346 = vdwg.mxu0
        %v1347 = vadd.f32 %v1072, %v1252
        %v1348 = vadd.f32 %v1073, %v1255
        %v1349 = vadd.f32 %v1074, %v1258
        %v1350 = vadd.f32 %v1075, %v1261
        %v1351 = vadd.f32 %v1076, %v1264
        %v1352 = vadd.f32 %v1077, %v1267
        %v1353 = vadd.f32 %v1078, %v1270
        %v1354 = vadd.f32 %v1079, %v1273
        %v1355 = vadd.f32 %v1080, %v1276
        %v1356 = vadd.f32 %v1081, %v1279
        %v1357 = vadd.f32 %v1082, %v1282
        %v1358 = vadd.f32 %v1083, %v1285
        %v1359 = vadd.f32 %v1084, %v1288
        %v1360 = vadd.f32 %v1085, %v1291
        %v1361 = vadd.f32 %v1086, %v1294
        %v1362 = vadd.f32 %v1087, %v1297
        %v1363 = vadd.f32 %v1088, %v1300
        %v1364 = vadd.f32 %v1089, %v1303
        %v1365 = vadd.f32 %v1090, %v1306
        %v1366 = vadd.f32 %v1091, %v1309
        %v1367 = vadd.f32 %v1092, %v1312
        %v1368 = vadd.f32 %v1093, %v1315
        %v1369 = vadd.f32 %v1094, %v1318
        %v1370 = vadd.f32 %v1095, %v1321
        %v1371 = vadd.f32 %v1096, %v1324
        %v1372 = vadd.f32 %v1097, %v1327
        %v1373 = vadd.f32 %v1098, %v1330
        %v1374 = vadd.f32 %v1099, %v1333
        %v1375 = vadd.f32 %v1100, %v1336
        %v1376 = vadd.f32 %v1101, %v1339
        %v1377 = vadd.f32 %v1102, %v1342
        %v1378 = vadd.f32 %v1103, %v1345
        %v1379 = vld [vmem:[%s311 + $0x1] sm:$0xff]
        %v1380 = vld [vmem:[%s311 + $0x9] sm:$0xff]
        %v1381 = vld [vmem:[%s311 + $0x19] sm:$0xff]
        %v1382 = vld [vmem:[%s311 + $0x21] sm:$0xff]
        %v1383 = vld [vmem:[%s311 + $0x31] sm:$0xff]
        %v1384 = vld [vmem:[%s311 + $0x39] sm:$0xff]
        %v1385 = vld [vmem:[%s311 + $0x49] sm:$0xff]
        %v1386 = vld [vmem:[%s311 + $0x51] sm:$0xff]
        %v1387 = vld [vmem:[%s311 + $0x61] sm:$0xff]
        %v1388 = vld [vmem:[%s311 + $0x69] sm:$0xff]
        %v1389 = vld [vmem:[%s311 + $0x79] sm:$0xff]
        %v1390 = vld [vmem:[%s311 + $0x81] sm:$0xff]
        %v1391 = vld [vmem:[%s311 + $0x91] sm:$0xff]
        %v1392 = vld [vmem:[%s311 + $0x99] sm:$0xff]
        %v1393 = vld [vmem:[%s311 + $0xa9] sm:$0xff]
        %v1394 = vld [vmem:[%s311 + $0xb1] sm:$0xff]
        %v1395 = vld [vmem:[%s311 + $0xc1] sm:$0xff]
        %v1396 = vld [vmem:[%s311 + $0xc9] sm:$0xff]
        %v1397 = vld [vmem:[%s311 + $0xd9] sm:$0xff]
        %v1398 = vld [vmem:[%s311 + $0xe1] sm:$0xff]
        %v1399 = vld [vmem:[%s311 + $0xf1] sm:$0xff]
        %v1400 = vld [vmem:[%s311 + $0xf9] sm:$0xff]
        %v1401 = vld [vmem:[%s311 + $0x109] sm:$0xff]
        %v1402 = vld [vmem:[%s311 + $0x111] sm:$0xff]
        %v1403 = vld [vmem:[%s311 + $0x121] sm:$0xff]
        %v1404 = vld [vmem:[%s311 + $0x129] sm:$0xff]
        %v1405 = vld [vmem:[%s311 + $0x139] sm:$0xff]
        %v1406 = vld [vmem:[%s311 + $0x141] sm:$0xff]
        %v1407 = vld [vmem:[%s311 + $0x151] sm:$0xff]
        %v1408 = vld [vmem:[%s311 + $0x159] sm:$0xff]
        %v1409 = vld [vmem:[%s311 + $0x169] sm:$0xff]
        %v1410 = vld [vmem:[%s311 + $0x171] sm:$0xff]
        %s1411 = scalar_lea.vmem %s1, 32
        %v1412 = vld [vmem:[%s1411] sm:$0xff]
        %v1414 = vsel %vm223, %v1379, 0
        %v1417 = vsel %vm223, %v1380, 0
        %v1420 = vsel %vm223, %v1381, 0
        %v1423 = vsel %vm223, %v1382, 0
        %v1426 = vsel %vm223, %v1383, 0
        %v1429 = vsel %vm223, %v1384, 0
        %v1432 = vsel %vm223, %v1385, 0
        %v1435 = vsel %vm223, %v1386, 0
        %v1438 = vsel %vm223, %v1387, 0
        %v1441 = vsel %vm223, %v1388, 0
        %v1444 = vsel %vm223, %v1389, 0
        %v1447 = vsel %vm223, %v1390, 0
        %v1450 = vsel %vm223, %v1391, 0
        %v1453 = vsel %vm223, %v1392, 0
        %v1456 = vsel %vm223, %v1393, 0
        %v1459 = vsel %vm223, %v1394, 0
        %v1462 = vsel %vm223, %v1395, 0
        %v1465 = vsel %vm223, %v1396, 0
        %v1468 = vsel %vm223, %v1397, 0
        %v1471 = vsel %vm223, %v1398, 0
        %v1474 = vsel %vm223, %v1399, 0
        %v1477 = vsel %vm223, %v1400, 0
        %v1480 = vsel %vm223, %v1401, 0
        %v1483 = vsel %vm223, %v1402, 0
        %v1486 = vsel %vm223, %v1403, 0
        %v1489 = vsel %vm223, %v1404, 0
        %v1492 = vsel %vm223, %v1405, 0
        %v1495 = vsel %vm223, %v1406, 0
        %v1498 = vsel %vm223, %v1407, 0
        %v1501 = vsel %vm223, %v1408, 0
        %v1504 = vsel %vm223, %v1409, 0
        %v1507 = vsel %vm223, %v1410, 0
        %1509 = vmatpush.msra.mxu0 0.0
        %1510 = vmatpush.msra.mxu0 0.0
        %1511 = vmatpush.msra.mxu0 0.0
        %1512 = vmatpush.msra.mxu0 0.0
        %1513 = vmatpush.msra.mxu0 0.0
        %1514 = vmatpush.msra.mxu0 0.0
        %1515 = vmatpush.msra.mxu0 0.0
        %1516 = vmatpush.msra.mxu0 0.0
        %1517 = vmatpush.msra.mxu0 0.0
        %1518 = vmatpush.msra.mxu0 0.0
        %1519 = vmatpush.msra.mxu0 0.0
        %1520 = vmatpush.msra.mxu0 0.0
        %1521 = vmatpush.msra.mxu0 0.0
        %1522 = vmatpush.msra.mxu0 0.0
        %1523 = vmatpush.msra.mxu0 0.0
        %1524 = vmatpush.msra.mxu0 %v1412
        %1525 = vmatmul.f32.gmra.mxu0 %v1414
        %v1526 = vpop.f32.mrf.mxu0
        %v1527 = vadd.f32 0.0, %v1526
        %1528 = vmatmul.f32.gmra.mxu0 %v1417
        %v1529 = vpop.f32.mrf.mxu0
        %v1530 = vadd.f32 0.0, %v1529
        %1531 = vmatmul.f32.gmra.mxu0 %v1420
        %v1532 = vpop.f32.mrf.mxu0
        %v1533 = vadd.f32 0.0, %v1532
        %1534 = vmatmul.f32.gmra.mxu0 %v1423
        %v1535 = vpop.f32.mrf.mxu0
        %v1536 = vadd.f32 0.0, %v1535
        %1537 = vmatmul.f32.gmra.mxu0 %v1426
        %v1538 = vpop.f32.mrf.mxu0
        %v1539 = vadd.f32 0.0, %v1538
        %1540 = vmatmul.f32.gmra.mxu0 %v1429
        %v1541 = vpop.f32.mrf.mxu0
        %v1542 = vadd.f32 0.0, %v1541
        %1543 = vmatmul.f32.gmra.mxu0 %v1432
        %v1544 = vpop.f32.mrf.mxu0
        %v1545 = vadd.f32 0.0, %v1544
        %1546 = vmatmul.f32.gmra.mxu0 %v1435
        %v1547 = vpop.f32.mrf.mxu0
        %v1548 = vadd.f32 0.0, %v1547
        %1549 = vmatmul.f32.gmra.mxu0 %v1438
        %v1550 = vpop.f32.mrf.mxu0
        %v1551 = vadd.f32 0.0, %v1550
        %1552 = vmatmul.f32.gmra.mxu0 %v1441
        %v1553 = vpop.f32.mrf.mxu0
        %v1554 = vadd.f32 0.0, %v1553
        %1555 = vmatmul.f32.gmra.mxu0 %v1444
        %v1556 = vpop.f32.mrf.mxu0
        %v1557 = vadd.f32 0.0, %v1556
        %1558 = vmatmul.f32.gmra.mxu0 %v1447
        %v1559 = vpop.f32.mrf.mxu0
        %v1560 = vadd.f32 0.0, %v1559
        %1561 = vmatmul.f32.gmra.mxu0 %v1450
        %v1562 = vpop.f32.mrf.mxu0
        %v1563 = vadd.f32 0.0, %v1562
        %1564 = vmatmul.f32.gmra.mxu0 %v1453
        %v1565 = vpop.f32.mrf.mxu0
        %v1566 = vadd.f32 0.0, %v1565
        %1567 = vmatmul.f32.gmra.mxu0 %v1456
        %v1568 = vpop.f32.mrf.mxu0
        %v1569 = vadd.f32 0.0, %v1568
        %1570 = vmatmul.f32.gmra.mxu0 %v1459
        %v1571 = vpop.f32.mrf.mxu0
        %v1572 = vadd.f32 0.0, %v1571
        %1573 = vmatmul.f32.gmra.mxu0 %v1462
        %v1574 = vpop.f32.mrf.mxu0
        %v1575 = vadd.f32 0.0, %v1574
        %1576 = vmatmul.f32.gmra.mxu0 %v1465
        %v1577 = vpop.f32.mrf.mxu0
        %v1578 = vadd.f32 0.0, %v1577
        %1579 = vmatmul.f32.gmra.mxu0 %v1468
        %v1580 = vpop.f32.mrf.mxu0
        %v1581 = vadd.f32 0.0, %v1580
        %1582 = vmatmul.f32.gmra.mxu0 %v1471
        %v1583 = vpop.f32.mrf.mxu0
        %v1584 = vadd.f32 0.0, %v1583
        %1585 = vmatmul.f32.gmra.mxu0 %v1474
        %v1586 = vpop.f32.mrf.mxu0
        %v1587 = vadd.f32 0.0, %v1586
        %1588 = vmatmul.f32.gmra.mxu0 %v1477
        %v1589 = vpop.f32.mrf.mxu0
        %v1590 = vadd.f32 0.0, %v1589
        %1591 = vmatmul.f32.gmra.mxu0 %v1480
        %v1592 = vpop.f32.mrf.mxu0
        %v1593 = vadd.f32 0.0, %v1592
        %1594 = vmatmul.f32.gmra.mxu0 %v1483
        %v1595 = vpop.f32.mrf.mxu0
        %v1596 = vadd.f32 0.0, %v1595
        %1597 = vmatmul.f32.gmra.mxu0 %v1486
        %v1598 = vpop.f32.mrf.mxu0
        %v1599 = vadd.f32 0.0, %v1598
        %1600 = vmatmul.f32.gmra.mxu0 %v1489
        %v1601 = vpop.f32.mrf.mxu0
        %v1602 = vadd.f32 0.0, %v1601
        %1603 = vmatmul.f32.gmra.mxu0 %v1492
        %v1604 = vpop.f32.mrf.mxu0
        %v1605 = vadd.f32 0.0, %v1604
        %1606 = vmatmul.f32.gmra.mxu0 %v1495
        %v1607 = vpop.f32.mrf.mxu0
        %v1608 = vadd.f32 0.0, %v1607
        %1609 = vmatmul.f32.gmra.mxu0 %v1498
        %v1610 = vpop.f32.mrf.mxu0
        %v1611 = vadd.f32 0.0, %v1610
        %1612 = vmatmul.f32.gmra.mxu0 %v1501
        %v1613 = vpop.f32.mrf.mxu0
        %v1614 = vadd.f32 0.0, %v1613
        %1615 = vmatmul.f32.gmra.mxu0 %v1504
        %v1616 = vpop.f32.mrf.mxu0
        %v1617 = vadd.f32 0.0, %v1616
        %1618 = vmatmul.f32.gmra.mxu0 %v1507
        %v1619 = vpop.f32.mrf.mxu0
        %v1620 = vadd.f32 0.0, %v1619
        %1621 = vdwg.mxu0
        %v1622 = vadd.f32 %v1347, %v1527
        %v1623 = vadd.f32 %v1348, %v1530
        %v1624 = vadd.f32 %v1349, %v1533
        %v1625 = vadd.f32 %v1350, %v1536
        %v1626 = vadd.f32 %v1351, %v1539
        %v1627 = vadd.f32 %v1352, %v1542
        %v1628 = vadd.f32 %v1353, %v1545
        %v1629 = vadd.f32 %v1354, %v1548
        %v1630 = vadd.f32 %v1355, %v1551
        %v1631 = vadd.f32 %v1356, %v1554
        %v1632 = vadd.f32 %v1357, %v1557
        %v1633 = vadd.f32 %v1358, %v1560
        %v1634 = vadd.f32 %v1359, %v1563
        %v1635 = vadd.f32 %v1360, %v1566
        %v1636 = vadd.f32 %v1361, %v1569
        %v1637 = vadd.f32 %v1362, %v1572
        %v1638 = vadd.f32 %v1363, %v1575
        %v1639 = vadd.f32 %v1364, %v1578
        %v1640 = vadd.f32 %v1365, %v1581
        %v1641 = vadd.f32 %v1366, %v1584
        %v1642 = vadd.f32 %v1367, %v1587
        %v1643 = vadd.f32 %v1368, %v1590
        %v1644 = vadd.f32 %v1369, %v1593
        %v1645 = vadd.f32 %v1370, %v1596
        %v1646 = vadd.f32 %v1371, %v1599
        %v1647 = vadd.f32 %v1372, %v1602
        %v1648 = vadd.f32 %v1373, %v1605
        %v1649 = vadd.f32 %v1374, %v1608
        %v1650 = vadd.f32 %v1375, %v1611
        %v1651 = vadd.f32 %v1376, %v1614
        %v1652 = vadd.f32 %v1377, %v1617
        %v1653 = vadd.f32 %v1378, %v1620
        %v1654 = vld [vmem:[%s311 + $0x2] sm:$0xff]
        %v1655 = vld [vmem:[%s311 + $0xa] sm:$0xff]
        %v1656 = vld [vmem:[%s311 + $0x1a] sm:$0xff]
        %v1657 = vld [vmem:[%s311 + $0x22] sm:$0xff]
        %v1658 = vld [vmem:[%s311 + $0x32] sm:$0xff]
        %v1659 = vld [vmem:[%s311 + $0x3a] sm:$0xff]
        %v1660 = vld [vmem:[%s311 + $0x4a] sm:$0xff]
        %v1661 = vld [vmem:[%s311 + $0x52] sm:$0xff]
        %v1662 = vld [vmem:[%s311 + $0x62] sm:$0xff]
        %v1663 = vld [vmem:[%s311 + $0x6a] sm:$0xff]
        %v1664 = vld [vmem:[%s311 + $0x7a] sm:$0xff]
        %v1665 = vld [vmem:[%s311 + $0x82] sm:$0xff]
        %v1666 = vld [vmem:[%s311 + $0x92] sm:$0xff]
        %v1667 = vld [vmem:[%s311 + $0x9a] sm:$0xff]
        %v1668 = vld [vmem:[%s311 + $0xaa] sm:$0xff]
        %v1669 = vld [vmem:[%s311 + $0xb2] sm:$0xff]
        %v1670 = vld [vmem:[%s311 + $0xc2] sm:$0xff]
        %v1671 = vld [vmem:[%s311 + $0xca] sm:$0xff]
        %v1672 = vld [vmem:[%s311 + $0xda] sm:$0xff]
        %v1673 = vld [vmem:[%s311 + $0xe2] sm:$0xff]
        %v1674 = vld [vmem:[%s311 + $0xf2] sm:$0xff]
        %v1675 = vld [vmem:[%s311 + $0xfa] sm:$0xff]
        %v1676 = vld [vmem:[%s311 + $0x10a] sm:$0xff]
        %v1677 = vld [vmem:[%s311 + $0x112] sm:$0xff]
        %v1678 = vld [vmem:[%s311 + $0x122] sm:$0xff]
        %v1679 = vld [vmem:[%s311 + $0x12a] sm:$0xff]
        %v1680 = vld [vmem:[%s311 + $0x13a] sm:$0xff]
        %v1681 = vld [vmem:[%s311 + $0x142] sm:$0xff]
        %v1682 = vld [vmem:[%s311 + $0x152] sm:$0xff]
        %v1683 = vld [vmem:[%s311 + $0x15a] sm:$0xff]
        %v1684 = vld [vmem:[%s311 + $0x16a] sm:$0xff]
        %v1685 = vld [vmem:[%s311 + $0x172] sm:$0xff]
        %s1686 = scalar_lea.vmem %s1, 40
        %v1687 = vld [vmem:[%s1686] sm:$0xff]
        %v1689 = vsel %vm223, %v1654, 0
        %v1692 = vsel %vm223, %v1655, 0
        %v1695 = vsel %vm223, %v1656, 0
        %v1698 = vsel %vm223, %v1657, 0
        %v1701 = vsel %vm223, %v1658, 0
        %v1704 = vsel %vm223, %v1659, 0
        %v1707 = vsel %vm223, %v1660, 0
        %v1710 = vsel %vm223, %v1661, 0
        %v1713 = vsel %vm223, %v1662, 0
        %v1716 = vsel %vm223, %v1663, 0
        %v1719 = vsel %vm223, %v1664, 0
        %v1722 = vsel %vm223, %v1665, 0
        %v1725 = vsel %vm223, %v1666, 0
        %v1728 = vsel %vm223, %v1667, 0
        %v1731 = vsel %vm223, %v1668, 0
        %v1734 = vsel %vm223, %v1669, 0
        %v1737 = vsel %vm223, %v1670, 0
        %v1740 = vsel %vm223, %v1671, 0
        %v1743 = vsel %vm223, %v1672, 0
        %v1746 = vsel %vm223, %v1673, 0
        %v1749 = vsel %vm223, %v1674, 0
        %v1752 = vsel %vm223, %v1675, 0
        %v1755 = vsel %vm223, %v1676, 0
        %v1758 = vsel %vm223, %v1677, 0
        %v1761 = vsel %vm223, %v1678, 0
        %v1764 = vsel %vm223, %v1679, 0
        %v1767 = vsel %vm223, %v1680, 0
        %v1770 = vsel %vm223, %v1681, 0
        %v1773 = vsel %vm223, %v1682, 0
        %v1776 = vsel %vm223, %v1683, 0
        %v1779 = vsel %vm223, %v1684, 0
        %v1782 = vsel %vm223, %v1685, 0
        %1784 = vmatpush.msra.mxu0 0.0
        %1785 = vmatpush.msra.mxu0 0.0
        %1786 = vmatpush.msra.mxu0 0.0
        %1787 = vmatpush.msra.mxu0 0.0
        %1788 = vmatpush.msra.mxu0 0.0
        %1789 = vmatpush.msra.mxu0 0.0
        %1790 = vmatpush.msra.mxu0 0.0
        %1791 = vmatpush.msra.mxu0 0.0
        %1792 = vmatpush.msra.mxu0 0.0
        %1793 = vmatpush.msra.mxu0 0.0
        %1794 = vmatpush.msra.mxu0 0.0
        %1795 = vmatpush.msra.mxu0 0.0
        %1796 = vmatpush.msra.mxu0 0.0
        %1797 = vmatpush.msra.mxu0 0.0
        %1798 = vmatpush.msra.mxu0 0.0
        %1799 = vmatpush.msra.mxu0 %v1687
        %1800 = vmatmul.f32.gmra.mxu0 %v1689
        %v1801 = vpop.f32.mrf.mxu0
        %v1802 = vadd.f32 0.0, %v1801
        %1803 = vmatmul.f32.gmra.mxu0 %v1692
        %v1804 = vpop.f32.mrf.mxu0
        %v1805 = vadd.f32 0.0, %v1804
        %1806 = vmatmul.f32.gmra.mxu0 %v1695
        %v1807 = vpop.f32.mrf.mxu0
        %v1808 = vadd.f32 0.0, %v1807
        %1809 = vmatmul.f32.gmra.mxu0 %v1698
        %v1810 = vpop.f32.mrf.mxu0
        %v1811 = vadd.f32 0.0, %v1810
        %1812 = vmatmul.f32.gmra.mxu0 %v1701
        %v1813 = vpop.f32.mrf.mxu0
        %v1814 = vadd.f32 0.0, %v1813
        %1815 = vmatmul.f32.gmra.mxu0 %v1704
        %v1816 = vpop.f32.mrf.mxu0
        %v1817 = vadd.f32 0.0, %v1816
        %1818 = vmatmul.f32.gmra.mxu0 %v1707
        %v1819 = vpop.f32.mrf.mxu0
        %v1820 = vadd.f32 0.0, %v1819
        %1821 = vmatmul.f32.gmra.mxu0 %v1710
        %v1822 = vpop.f32.mrf.mxu0
        %v1823 = vadd.f32 0.0, %v1822
        %1824 = vmatmul.f32.gmra.mxu0 %v1713
        %v1825 = vpop.f32.mrf.mxu0
        %v1826 = vadd.f32 0.0, %v1825
        %1827 = vmatmul.f32.gmra.mxu0 %v1716
        %v1828 = vpop.f32.mrf.mxu0
        %v1829 = vadd.f32 0.0, %v1828
        %1830 = vmatmul.f32.gmra.mxu0 %v1719
        %v1831 = vpop.f32.mrf.mxu0
        %v1832 = vadd.f32 0.0, %v1831
        %1833 = vmatmul.f32.gmra.mxu0 %v1722
        %v1834 = vpop.f32.mrf.mxu0
        %v1835 = vadd.f32 0.0, %v1834
        %1836 = vmatmul.f32.gmra.mxu0 %v1725
        %v1837 = vpop.f32.mrf.mxu0
        %v1838 = vadd.f32 0.0, %v1837
        %1839 = vmatmul.f32.gmra.mxu0 %v1728
        %v1840 = vpop.f32.mrf.mxu0
        %v1841 = vadd.f32 0.0, %v1840
        %1842 = vmatmul.f32.gmra.mxu0 %v1731
        %v1843 = vpop.f32.mrf.mxu0
        %v1844 = vadd.f32 0.0, %v1843
        %1845 = vmatmul.f32.gmra.mxu0 %v1734
        %v1846 = vpop.f32.mrf.mxu0
        %v1847 = vadd.f32 0.0, %v1846
        %1848 = vmatmul.f32.gmra.mxu0 %v1737
        %v1849 = vpop.f32.mrf.mxu0
        %v1850 = vadd.f32 0.0, %v1849
        %1851 = vmatmul.f32.gmra.mxu0 %v1740
        %v1852 = vpop.f32.mrf.mxu0
        %v1853 = vadd.f32 0.0, %v1852
        %1854 = vmatmul.f32.gmra.mxu0 %v1743
        %v1855 = vpop.f32.mrf.mxu0
        %v1856 = vadd.f32 0.0, %v1855
        %1857 = vmatmul.f32.gmra.mxu0 %v1746
        %v1858 = vpop.f32.mrf.mxu0
        %v1859 = vadd.f32 0.0, %v1858
        %1860 = vmatmul.f32.gmra.mxu0 %v1749
        %v1861 = vpop.f32.mrf.mxu0
        %v1862 = vadd.f32 0.0, %v1861
        %1863 = vmatmul.f32.gmra.mxu0 %v1752
        %v1864 = vpop.f32.mrf.mxu0
        %v1865 = vadd.f32 0.0, %v1864
        %1866 = vmatmul.f32.gmra.mxu0 %v1755
        %v1867 = vpop.f32.mrf.mxu0
        %v1868 = vadd.f32 0.0, %v1867
        %1869 = vmatmul.f32.gmra.mxu0 %v1758
        %v1870 = vpop.f32.mrf.mxu0
        %v1871 = vadd.f32 0.0, %v1870
        %1872 = vmatmul.f32.gmra.mxu0 %v1761
        %v1873 = vpop.f32.mrf.mxu0
        %v1874 = vadd.f32 0.0, %v1873
        %1875 = vmatmul.f32.gmra.mxu0 %v1764
        %v1876 = vpop.f32.mrf.mxu0
        %v1877 = vadd.f32 0.0, %v1876
        %1878 = vmatmul.f32.gmra.mxu0 %v1767
        %v1879 = vpop.f32.mrf.mxu0
        %v1880 = vadd.f32 0.0, %v1879
        %1881 = vmatmul.f32.gmra.mxu0 %v1770
        %v1882 = vpop.f32.mrf.mxu0
        %v1883 = vadd.f32 0.0, %v1882
        %1884 = vmatmul.f32.gmra.mxu0 %v1773
        %v1885 = vpop.f32.mrf.mxu0
        %v1886 = vadd.f32 0.0, %v1885
        %1887 = vmatmul.f32.gmra.mxu0 %v1776
        %v1888 = vpop.f32.mrf.mxu0
        %v1889 = vadd.f32 0.0, %v1888
        %1890 = vmatmul.f32.gmra.mxu0 %v1779
        %v1891 = vpop.f32.mrf.mxu0
        %v1892 = vadd.f32 0.0, %v1891
        %1893 = vmatmul.f32.gmra.mxu0 %v1782
        %v1894 = vpop.f32.mrf.mxu0
        %v1895 = vadd.f32 0.0, %v1894
        %1896 = vdwg.mxu0
        %v1897 = vadd.f32 %v1622, %v1802
        %v1898 = vadd.f32 %v1623, %v1805
        %v1899 = vadd.f32 %v1624, %v1808
        %v1900 = vadd.f32 %v1625, %v1811
        %v1901 = vadd.f32 %v1626, %v1814
        %v1902 = vadd.f32 %v1627, %v1817
        %v1903 = vadd.f32 %v1628, %v1820
        %v1904 = vadd.f32 %v1629, %v1823
        %v1905 = vadd.f32 %v1630, %v1826
        %v1906 = vadd.f32 %v1631, %v1829
        %v1907 = vadd.f32 %v1632, %v1832
        %v1908 = vadd.f32 %v1633, %v1835
        %v1909 = vadd.f32 %v1634, %v1838
        %v1910 = vadd.f32 %v1635, %v1841
        %v1911 = vadd.f32 %v1636, %v1844
        %v1912 = vadd.f32 %v1637, %v1847
        %v1913 = vadd.f32 %v1638, %v1850
        %v1914 = vadd.f32 %v1639, %v1853
        %v1915 = vadd.f32 %v1640, %v1856
        %v1916 = vadd.f32 %v1641, %v1859
        %v1917 = vadd.f32 %v1642, %v1862
        %v1918 = vadd.f32 %v1643, %v1865
        %v1919 = vadd.f32 %v1644, %v1868
        %v1920 = vadd.f32 %v1645, %v1871
        %v1921 = vadd.f32 %v1646, %v1874
        %v1922 = vadd.f32 %v1647, %v1877
        %v1923 = vadd.f32 %v1648, %v1880
        %v1924 = vadd.f32 %v1649, %v1883
        %v1925 = vadd.f32 %v1650, %v1886
        %v1926 = vadd.f32 %v1651, %v1889
        %v1927 = vadd.f32 %v1652, %v1892
        %v1928 = vadd.f32 %v1653, %v1895
        %s1929 = scalar_lea.vmem [#allocation2], 48
        %v1930 = vld [vmem:[%s1929] sm:$0xff]
        %v1931 = vld [vmem:[%s1929 + $0x8] sm:$0xff]
        %v1932 = vld [vmem:[%s1929 + $0x18] sm:$0xff]
        %v1933 = vld [vmem:[%s1929 + $0x20] sm:$0xff]
        %v1934 = vld [vmem:[%s1929 + $0x30] sm:$0xff]
        %v1935 = vld [vmem:[%s1929 + $0x38] sm:$0xff]
        %v1936 = vld [vmem:[%s1929 + $0x48] sm:$0xff]
        %v1937 = vld [vmem:[%s1929 + $0x50] sm:$0xff]
        %v1938 = vld [vmem:[%s1929 + $0x60] sm:$0xff]
        %v1939 = vld [vmem:[%s1929 + $0x68] sm:$0xff]
        %v1940 = vld [vmem:[%s1929 + $0x78] sm:$0xff]
        %v1941 = vld [vmem:[%s1929 + $0x80] sm:$0xff]
        %v1942 = vld [vmem:[%s1929 + $0x90] sm:$0xff]
        %v1943 = vld [vmem:[%s1929 + $0x98] sm:$0xff]
        %v1944 = vld [vmem:[%s1929 + $0xa8] sm:$0xff]
        %v1945 = vld [vmem:[%s1929 + $0xb0] sm:$0xff]
        %v1946 = vld [vmem:[%s1929 + $0xc0] sm:$0xff]
        %v1947 = vld [vmem:[%s1929 + $0xc8] sm:$0xff]
        %v1948 = vld [vmem:[%s1929 + $0xd8] sm:$0xff]
        %v1949 = vld [vmem:[%s1929 + $0xe0] sm:$0xff]
        %v1950 = vld [vmem:[%s1929 + $0xf0] sm:$0xff]
        %v1951 = vld [vmem:[%s1929 + $0xf8] sm:$0xff]
        %v1952 = vld [vmem:[%s1929 + $0x108] sm:$0xff]
        %v1953 = vld [vmem:[%s1929 + $0x110] sm:$0xff]
        %v1954 = vld [vmem:[%s1929 + $0x120] sm:$0xff]
        %v1955 = vld [vmem:[%s1929 + $0x128] sm:$0xff]
        %v1956 = vld [vmem:[%s1929 + $0x138] sm:$0xff]
        %v1957 = vld [vmem:[%s1929 + $0x140] sm:$0xff]
        %v1958 = vld [vmem:[%s1929 + $0x150] sm:$0xff]
        %v1959 = vld [vmem:[%s1929 + $0x158] sm:$0xff]
        %v1960 = vld [vmem:[%s1929 + $0x168] sm:$0xff]
        %v1961 = vld [vmem:[%s1929 + $0x170] sm:$0xff]
        %s1962 = scalar_lea.vmem %s1, 48
        %v1963 = vld [vmem:[%s1962] sm:$0xff]
        %v1965 = vsel %vm223, %v1930, 0
        %v1968 = vsel %vm223, %v1931, 0
        %v1971 = vsel %vm223, %v1932, 0
        %v1974 = vsel %vm223, %v1933, 0
        %v1977 = vsel %vm223, %v1934, 0
        %v1980 = vsel %vm223, %v1935, 0
        %v1983 = vsel %vm223, %v1936, 0
        %v1986 = vsel %vm223, %v1937, 0
        %v1989 = vsel %vm223, %v1938, 0
        %v1992 = vsel %vm223, %v1939, 0
        %v1995 = vsel %vm223, %v1940, 0
        %v1998 = vsel %vm223, %v1941, 0
        %v2001 = vsel %vm223, %v1942, 0
        %v2004 = vsel %vm223, %v1943, 0
        %v2007 = vsel %vm223, %v1944, 0
        %v2010 = vsel %vm223, %v1945, 0
        %v2013 = vsel %vm223, %v1946, 0
        %v2016 = vsel %vm223, %v1947, 0
        %v2019 = vsel %vm223, %v1948, 0
        %v2022 = vsel %vm223, %v1949, 0
        %v2025 = vsel %vm223, %v1950, 0
        %v2028 = vsel %vm223, %v1951, 0
        %v2031 = vsel %vm223, %v1952, 0
        %v2034 = vsel %vm223, %v1953, 0
        %v2037 = vsel %vm223, %v1954, 0
        %v2040 = vsel %vm223, %v1955, 0
        %v2043 = vsel %vm223, %v1956, 0
        %v2046 = vsel %vm223, %v1957, 0
        %v2049 = vsel %vm223, %v1958, 0
        %v2052 = vsel %vm223, %v1959, 0
        %v2055 = vsel %vm223, %v1960, 0
        %v2058 = vsel %vm223, %v1961, 0
        %2060 = vmatpush.msra.mxu0 0.0
        %2061 = vmatpush.msra.mxu0 0.0
        %2062 = vmatpush.msra.mxu0 0.0
        %2063 = vmatpush.msra.mxu0 0.0
        %2064 = vmatpush.msra.mxu0 0.0
        %2065 = vmatpush.msra.mxu0 0.0
        %2066 = vmatpush.msra.mxu0 0.0
        %2067 = vmatpush.msra.mxu0 0.0
        %2068 = vmatpush.msra.mxu0 0.0
        %2069 = vmatpush.msra.mxu0 0.0
        %2070 = vmatpush.msra.mxu0 0.0
        %2071 = vmatpush.msra.mxu0 0.0
        %2072 = vmatpush.msra.mxu0 0.0
        %2073 = vmatpush.msra.mxu0 0.0
        %2074 = vmatpush.msra.mxu0 0.0
        %2075 = vmatpush.msra.mxu0 %v1963
        %2076 = vmatmul.f32.gmra.mxu0 %v1965
        %v2077 = vpop.f32.mrf.mxu0
        %v2078 = vadd.f32 0.0, %v2077
        %2079 = vmatmul.f32.gmra.mxu0 %v1968
        %v2080 = vpop.f32.mrf.mxu0
        %v2081 = vadd.f32 0.0, %v2080
        %2082 = vmatmul.f32.gmra.mxu0 %v1971
        %v2083 = vpop.f32.mrf.mxu0
        %v2084 = vadd.f32 0.0, %v2083
        %2085 = vmatmul.f32.gmra.mxu0 %v1974
        %v2086 = vpop.f32.mrf.mxu0
        %v2087 = vadd.f32 0.0, %v2086
        %2088 = vmatmul.f32.gmra.mxu0 %v1977
        %v2089 = vpop.f32.mrf.mxu0
        %v2090 = vadd.f32 0.0, %v2089
        %2091 = vmatmul.f32.gmra.mxu0 %v1980
        %v2092 = vpop.f32.mrf.mxu0
        %v2093 = vadd.f32 0.0, %v2092
        %2094 = vmatmul.f32.gmra.mxu0 %v1983
        %v2095 = vpop.f32.mrf.mxu0
        %v2096 = vadd.f32 0.0, %v2095
        %2097 = vmatmul.f32.gmra.mxu0 %v1986
        %v2098 = vpop.f32.mrf.mxu0
        %v2099 = vadd.f32 0.0, %v2098
        %2100 = vmatmul.f32.gmra.mxu0 %v1989
        %v2101 = vpop.f32.mrf.mxu0
        %v2102 = vadd.f32 0.0, %v2101
        %2103 = vmatmul.f32.gmra.mxu0 %v1992
        %v2104 = vpop.f32.mrf.mxu0
        %v2105 = vadd.f32 0.0, %v2104
        %2106 = vmatmul.f32.gmra.mxu0 %v1995
        %v2107 = vpop.f32.mrf.mxu0
        %v2108 = vadd.f32 0.0, %v2107
        %2109 = vmatmul.f32.gmra.mxu0 %v1998
        %v2110 = vpop.f32.mrf.mxu0
        %v2111 = vadd.f32 0.0, %v2110
        %2112 = vmatmul.f32.gmra.mxu0 %v2001
        %v2113 = vpop.f32.mrf.mxu0
        %v2114 = vadd.f32 0.0, %v2113
        %2115 = vmatmul.f32.gmra.mxu0 %v2004
        %v2116 = vpop.f32.mrf.mxu0
        %v2117 = vadd.f32 0.0, %v2116
        %2118 = vmatmul.f32.gmra.mxu0 %v2007
        %v2119 = vpop.f32.mrf.mxu0
        %v2120 = vadd.f32 0.0, %v2119
        %2121 = vmatmul.f32.gmra.mxu0 %v2010
        %v2122 = vpop.f32.mrf.mxu0
        %v2123 = vadd.f32 0.0, %v2122
        %2124 = vmatmul.f32.gmra.mxu0 %v2013
        %v2125 = vpop.f32.mrf.mxu0
        %v2126 = vadd.f32 0.0, %v2125
        %2127 = vmatmul.f32.gmra.mxu0 %v2016
        %v2128 = vpop.f32.mrf.mxu0
        %v2129 = vadd.f32 0.0, %v2128
        %2130 = vmatmul.f32.gmra.mxu0 %v2019
        %v2131 = vpop.f32.mrf.mxu0
        %v2132 = vadd.f32 0.0, %v2131
        %2133 = vmatmul.f32.gmra.mxu0 %v2022
        %v2134 = vpop.f32.mrf.mxu0
        %v2135 = vadd.f32 0.0, %v2134
        %2136 = vmatmul.f32.gmra.mxu0 %v2025
        %v2137 = vpop.f32.mrf.mxu0
        %v2138 = vadd.f32 0.0, %v2137
        %2139 = vmatmul.f32.gmra.mxu0 %v2028
        %v2140 = vpop.f32.mrf.mxu0
        %v2141 = vadd.f32 0.0, %v2140
        %2142 = vmatmul.f32.gmra.mxu0 %v2031
        %v2143 = vpop.f32.mrf.mxu0
        %v2144 = vadd.f32 0.0, %v2143
        %2145 = vmatmul.f32.gmra.mxu0 %v2034
        %v2146 = vpop.f32.mrf.mxu0
        %v2147 = vadd.f32 0.0, %v2146
        %2148 = vmatmul.f32.gmra.mxu0 %v2037
        %v2149 = vpop.f32.mrf.mxu0
        %v2150 = vadd.f32 0.0, %v2149
        %2151 = vmatmul.f32.gmra.mxu0 %v2040
        %v2152 = vpop.f32.mrf.mxu0
        %v2153 = vadd.f32 0.0, %v2152
        %2154 = vmatmul.f32.gmra.mxu0 %v2043
        %v2155 = vpop.f32.mrf.mxu0
        %v2156 = vadd.f32 0.0, %v2155
        %2157 = vmatmul.f32.gmra.mxu0 %v2046
        %v2158 = vpop.f32.mrf.mxu0
        %v2159 = vadd.f32 0.0, %v2158
        %2160 = vmatmul.f32.gmra.mxu0 %v2049
        %v2161 = vpop.f32.mrf.mxu0
        %v2162 = vadd.f32 0.0, %v2161
        %2163 = vmatmul.f32.gmra.mxu0 %v2052
        %v2164 = vpop.f32.mrf.mxu0
        %v2165 = vadd.f32 0.0, %v2164
        %2166 = vmatmul.f32.gmra.mxu0 %v2055
        %v2167 = vpop.f32.mrf.mxu0
        %v2168 = vadd.f32 0.0, %v2167
        %2169 = vmatmul.f32.gmra.mxu0 %v2058
        %v2170 = vpop.f32.mrf.mxu0
        %v2171 = vadd.f32 0.0, %v2170
        %2172 = vdwg.mxu0
        %v2173 = vadd.f32 %v1897, %v2078
        %v2174 = vadd.f32 %v1898, %v2081
        %v2175 = vadd.f32 %v1899, %v2084
        %v2176 = vadd.f32 %v1900, %v2087
        %v2177 = vadd.f32 %v1901, %v2090
        %v2178 = vadd.f32 %v1902, %v2093
        %v2179 = vadd.f32 %v1903, %v2096
        %v2180 = vadd.f32 %v1904, %v2099
        %v2181 = vadd.f32 %v1905, %v2102
        %v2182 = vadd.f32 %v1906, %v2105
        %v2183 = vadd.f32 %v1907, %v2108
        %v2184 = vadd.f32 %v1908, %v2111
        %v2185 = vadd.f32 %v1909, %v2114
        %v2186 = vadd.f32 %v1910, %v2117
        %v2187 = vadd.f32 %v1911, %v2120
        %v2188 = vadd.f32 %v1912, %v2123
        %v2189 = vadd.f32 %v1913, %v2126
        %v2190 = vadd.f32 %v1914, %v2129
        %v2191 = vadd.f32 %v1915, %v2132
        %v2192 = vadd.f32 %v1916, %v2135
        %v2193 = vadd.f32 %v1917, %v2138
        %v2194 = vadd.f32 %v1918, %v2141
        %v2195 = vadd.f32 %v1919, %v2144
        %v2196 = vadd.f32 %v1920, %v2147
        %v2197 = vadd.f32 %v1921, %v2150
        %v2198 = vadd.f32 %v1922, %v2153
        %v2199 = vadd.f32 %v1923, %v2156
        %v2200 = vadd.f32 %v1924, %v2159
        %v2201 = vadd.f32 %v1925, %v2162
        %v2202 = vadd.f32 %v1926, %v2165
        %v2203 = vadd.f32 %v1927, %v2168
        %v2204 = vadd.f32 %v1928, %v2171
        %v2205 = vld [vmem:[%s1929 + $0x1] sm:$0xff]
        %v2206 = vld [vmem:[%s1929 + $0x9] sm:$0xff]
        %v2207 = vld [vmem:[%s1929 + $0x19] sm:$0xff]
        %v2208 = vld [vmem:[%s1929 + $0x21] sm:$0xff]
        %v2209 = vld [vmem:[%s1929 + $0x31] sm:$0xff]
        %v2210 = vld [vmem:[%s1929 + $0x39] sm:$0xff]
        %v2211 = vld [vmem:[%s1929 + $0x49] sm:$0xff]
        %v2212 = vld [vmem:[%s1929 + $0x51] sm:$0xff]
        %v2213 = vld [vmem:[%s1929 + $0x61] sm:$0xff]
        %v2214 = vld [vmem:[%s1929 + $0x69] sm:$0xff]
        %v2215 = vld [vmem:[%s1929 + $0x79] sm:$0xff]
        %v2216 = vld [vmem:[%s1929 + $0x81] sm:$0xff]
        %v2217 = vld [vmem:[%s1929 + $0x91] sm:$0xff]
        %v2218 = vld [vmem:[%s1929 + $0x99] sm:$0xff]
        %v2219 = vld [vmem:[%s1929 + $0xa9] sm:$0xff]
        %v2220 = vld [vmem:[%s1929 + $0xb1] sm:$0xff]
        %v2221 = vld [vmem:[%s1929 + $0xc1] sm:$0xff]
        %v2222 = vld [vmem:[%s1929 + $0xc9] sm:$0xff]
        %v2223 = vld [vmem:[%s1929 + $0xd9] sm:$0xff]
        %v2224 = vld [vmem:[%s1929 + $0xe1] sm:$0xff]
        %v2225 = vld [vmem:[%s1929 + $0xf1] sm:$0xff]
        %v2226 = vld [vmem:[%s1929 + $0xf9] sm:$0xff]
        %v2227 = vld [vmem:[%s1929 + $0x109] sm:$0xff]
        %v2228 = vld [vmem:[%s1929 + $0x111] sm:$0xff]
        %v2229 = vld [vmem:[%s1929 + $0x121] sm:$0xff]
        %v2230 = vld [vmem:[%s1929 + $0x129] sm:$0xff]
        %v2231 = vld [vmem:[%s1929 + $0x139] sm:$0xff]
        %v2232 = vld [vmem:[%s1929 + $0x141] sm:$0xff]
        %v2233 = vld [vmem:[%s1929 + $0x151] sm:$0xff]
        %v2234 = vld [vmem:[%s1929 + $0x159] sm:$0xff]
        %v2235 = vld [vmem:[%s1929 + $0x169] sm:$0xff]
        %v2236 = vld [vmem:[%s1929 + $0x171] sm:$0xff]
        %s2237 = scalar_lea.vmem %s1, 56
        %v2238 = vld [vmem:[%s2237] sm:$0xff]
        %v2240 = vsel %vm223, %v2205, 0
        %v2243 = vsel %vm223, %v2206, 0
        %v2246 = vsel %vm223, %v2207, 0
        %v2249 = vsel %vm223, %v2208, 0
        %v2252 = vsel %vm223, %v2209, 0
        %v2255 = vsel %vm223, %v2210, 0
        %v2258 = vsel %vm223, %v2211, 0
        %v2261 = vsel %vm223, %v2212, 0
        %v2264 = vsel %vm223, %v2213, 0
        %v2267 = vsel %vm223, %v2214, 0
        %v2270 = vsel %vm223, %v2215, 0
        %v2273 = vsel %vm223, %v2216, 0
        %v2276 = vsel %vm223, %v2217, 0
        %v2279 = vsel %vm223, %v2218, 0
        %v2282 = vsel %vm223, %v2219, 0
        %v2285 = vsel %vm223, %v2220, 0
        %v2288 = vsel %vm223, %v2221, 0
        %v2291 = vsel %vm223, %v2222, 0
        %v2294 = vsel %vm223, %v2223, 0
        %v2297 = vsel %vm223, %v2224, 0
        %v2300 = vsel %vm223, %v2225, 0
        %v2303 = vsel %vm223, %v2226, 0
        %v2306 = vsel %vm223, %v2227, 0
        %v2309 = vsel %vm223, %v2228, 0
        %v2312 = vsel %vm223, %v2229, 0
        %v2315 = vsel %vm223, %v2230, 0
        %v2318 = vsel %vm223, %v2231, 0
        %v2321 = vsel %vm223, %v2232, 0
        %v2324 = vsel %vm223, %v2233, 0
        %v2327 = vsel %vm223, %v2234, 0
        %v2330 = vsel %vm223, %v2235, 0
        %v2333 = vsel %vm223, %v2236, 0
        %2335 = vmatpush.msra.mxu0 0.0
        %2336 = vmatpush.msra.mxu0 0.0
        %2337 = vmatpush.msra.mxu0 0.0
        %2338 = vmatpush.msra.mxu0 0.0
        %2339 = vmatpush.msra.mxu0 0.0
        %2340 = vmatpush.msra.mxu0 0.0
        %2341 = vmatpush.msra.mxu0 0.0
        %2342 = vmatpush.msra.mxu0 0.0
        %2343 = vmatpush.msra.mxu0 0.0
        %2344 = vmatpush.msra.mxu0 0.0
        %2345 = vmatpush.msra.mxu0 0.0
        %2346 = vmatpush.msra.mxu0 0.0
        %2347 = vmatpush.msra.mxu0 0.0
        %2348 = vmatpush.msra.mxu0 0.0
        %2349 = vmatpush.msra.mxu0 0.0
        %2350 = vmatpush.msra.mxu0 %v2238
        %2351 = vmatmul.f32.gmra.mxu0 %v2240
        %v2352 = vpop.f32.mrf.mxu0
        %v2353 = vadd.f32 0.0, %v2352
        %2354 = vmatmul.f32.gmra.mxu0 %v2243
        %v2355 = vpop.f32.mrf.mxu0
        %v2356 = vadd.f32 0.0, %v2355
        %2357 = vmatmul.f32.gmra.mxu0 %v2246
        %v2358 = vpop.f32.mrf.mxu0
        %v2359 = vadd.f32 0.0, %v2358
        %2360 = vmatmul.f32.gmra.mxu0 %v2249
        %v2361 = vpop.f32.mrf.mxu0
        %v2362 = vadd.f32 0.0, %v2361
        %2363 = vmatmul.f32.gmra.mxu0 %v2252
        %v2364 = vpop.f32.mrf.mxu0
        %v2365 = vadd.f32 0.0, %v2364
        %2366 = vmatmul.f32.gmra.mxu0 %v2255
        %v2367 = vpop.f32.mrf.mxu0
        %v2368 = vadd.f32 0.0, %v2367
        %2369 = vmatmul.f32.gmra.mxu0 %v2258
        %v2370 = vpop.f32.mrf.mxu0
        %v2371 = vadd.f32 0.0, %v2370
        %2372 = vmatmul.f32.gmra.mxu0 %v2261
        %v2373 = vpop.f32.mrf.mxu0
        %v2374 = vadd.f32 0.0, %v2373
        %2375 = vmatmul.f32.gmra.mxu0 %v2264
        %v2376 = vpop.f32.mrf.mxu0
        %v2377 = vadd.f32 0.0, %v2376
        %2378 = vmatmul.f32.gmra.mxu0 %v2267
        %v2379 = vpop.f32.mrf.mxu0
        %v2380 = vadd.f32 0.0, %v2379
        %2381 = vmatmul.f32.gmra.mxu0 %v2270
        %v2382 = vpop.f32.mrf.mxu0
        %v2383 = vadd.f32 0.0, %v2382
        %2384 = vmatmul.f32.gmra.mxu0 %v2273
        %v2385 = vpop.f32.mrf.mxu0
        %v2386 = vadd.f32 0.0, %v2385
        %2387 = vmatmul.f32.gmra.mxu0 %v2276
        %v2388 = vpop.f32.mrf.mxu0
        %v2389 = vadd.f32 0.0, %v2388
        %2390 = vmatmul.f32.gmra.mxu0 %v2279
        %v2391 = vpop.f32.mrf.mxu0
        %v2392 = vadd.f32 0.0, %v2391
        %2393 = vmatmul.f32.gmra.mxu0 %v2282
        %v2394 = vpop.f32.mrf.mxu0
        %v2395 = vadd.f32 0.0, %v2394
        %2396 = vmatmul.f32.gmra.mxu0 %v2285
        %v2397 = vpop.f32.mrf.mxu0
        %v2398 = vadd.f32 0.0, %v2397
        %2399 = vmatmul.f32.gmra.mxu0 %v2288
        %v2400 = vpop.f32.mrf.mxu0
        %v2401 = vadd.f32 0.0, %v2400
        %2402 = vmatmul.f32.gmra.mxu0 %v2291
        %v2403 = vpop.f32.mrf.mxu0
        %v2404 = vadd.f32 0.0, %v2403
        %2405 = vmatmul.f32.gmra.mxu0 %v2294
        %v2406 = vpop.f32.mrf.mxu0
        %v2407 = vadd.f32 0.0, %v2406
        %2408 = vmatmul.f32.gmra.mxu0 %v2297
        %v2409 = vpop.f32.mrf.mxu0
        %v2410 = vadd.f32 0.0, %v2409
        %2411 = vmatmul.f32.gmra.mxu0 %v2300
        %v2412 = vpop.f32.mrf.mxu0
        %v2413 = vadd.f32 0.0, %v2412
        %2414 = vmatmul.f32.gmra.mxu0 %v2303
        %v2415 = vpop.f32.mrf.mxu0
        %v2416 = vadd.f32 0.0, %v2415
        %2417 = vmatmul.f32.gmra.mxu0 %v2306
        %v2418 = vpop.f32.mrf.mxu0
        %v2419 = vadd.f32 0.0, %v2418
        %2420 = vmatmul.f32.gmra.mxu0 %v2309
        %v2421 = vpop.f32.mrf.mxu0
        %v2422 = vadd.f32 0.0, %v2421
        %2423 = vmatmul.f32.gmra.mxu0 %v2312
        %v2424 = vpop.f32.mrf.mxu0
        %v2425 = vadd.f32 0.0, %v2424
        %2426 = vmatmul.f32.gmra.mxu0 %v2315
        %v2427 = vpop.f32.mrf.mxu0
        %v2428 = vadd.f32 0.0, %v2427
        %2429 = vmatmul.f32.gmra.mxu0 %v2318
        %v2430 = vpop.f32.mrf.mxu0
        %v2431 = vadd.f32 0.0, %v2430
        %2432 = vmatmul.f32.gmra.mxu0 %v2321
        %v2433 = vpop.f32.mrf.mxu0
        %v2434 = vadd.f32 0.0, %v2433
        %2435 = vmatmul.f32.gmra.mxu0 %v2324
        %v2436 = vpop.f32.mrf.mxu0
        %v2437 = vadd.f32 0.0, %v2436
        %2438 = vmatmul.f32.gmra.mxu0 %v2327
        %v2439 = vpop.f32.mrf.mxu0
        %v2440 = vadd.f32 0.0, %v2439
        %2441 = vmatmul.f32.gmra.mxu0 %v2330
        %v2442 = vpop.f32.mrf.mxu0
        %v2443 = vadd.f32 0.0, %v2442
        %2444 = vmatmul.f32.gmra.mxu0 %v2333
        %v2445 = vpop.f32.mrf.mxu0
        %v2446 = vadd.f32 0.0, %v2445
        %2447 = vdwg.mxu0
        %v2448 = vadd.f32 %v2173, %v2353
        %v2449 = vadd.f32 %v2174, %v2356
        %v2450 = vadd.f32 %v2175, %v2359
        %v2451 = vadd.f32 %v2176, %v2362
        %v2452 = vadd.f32 %v2177, %v2365
        %v2453 = vadd.f32 %v2178, %v2368
        %v2454 = vadd.f32 %v2179, %v2371
        %v2455 = vadd.f32 %v2180, %v2374
        %v2456 = vadd.f32 %v2181, %v2377
        %v2457 = vadd.f32 %v2182, %v2380
        %v2458 = vadd.f32 %v2183, %v2383
        %v2459 = vadd.f32 %v2184, %v2386
        %v2460 = vadd.f32 %v2185, %v2389
        %v2461 = vadd.f32 %v2186, %v2392
        %v2462 = vadd.f32 %v2187, %v2395
        %v2463 = vadd.f32 %v2188, %v2398
        %v2464 = vadd.f32 %v2189, %v2401
        %v2465 = vadd.f32 %v2190, %v2404
        %v2466 = vadd.f32 %v2191, %v2407
        %v2467 = vadd.f32 %v2192, %v2410
        %v2468 = vadd.f32 %v2193, %v2413
        %v2469 = vadd.f32 %v2194, %v2416
        %v2470 = vadd.f32 %v2195, %v2419
        %v2471 = vadd.f32 %v2196, %v2422
        %v2472 = vadd.f32 %v2197, %v2425
        %v2473 = vadd.f32 %v2198, %v2428
        %v2474 = vadd.f32 %v2199, %v2431
        %v2475 = vadd.f32 %v2200, %v2434
        %v2476 = vadd.f32 %v2201, %v2437
        %v2477 = vadd.f32 %v2202, %v2440
        %v2478 = vadd.f32 %v2203, %v2443
        %v2479 = vadd.f32 %v2204, %v2446
        %v2480 = vld [vmem:[%s1929 + $0x2] sm:$0xff]
        %v2481 = vld [vmem:[%s1929 + $0xa] sm:$0xff]
        %v2482 = vld [vmem:[%s1929 + $0x1a] sm:$0xff]
        %v2483 = vld [vmem:[%s1929 + $0x22] sm:$0xff]
        %v2484 = vld [vmem:[%s1929 + $0x32] sm:$0xff]
        %v2485 = vld [vmem:[%s1929 + $0x3a] sm:$0xff]
        %v2486 = vld [vmem:[%s1929 + $0x4a] sm:$0xff]
        %v2487 = vld [vmem:[%s1929 + $0x52] sm:$0xff]
        %v2488 = vld [vmem:[%s1929 + $0x62] sm:$0xff]
        %v2489 = vld [vmem:[%s1929 + $0x6a] sm:$0xff]
        %v2490 = vld [vmem:[%s1929 + $0x7a] sm:$0xff]
        %v2491 = vld [vmem:[%s1929 + $0x82] sm:$0xff]
        %v2492 = vld [vmem:[%s1929 + $0x92] sm:$0xff]
        %v2493 = vld [vmem:[%s1929 + $0x9a] sm:$0xff]
        %v2494 = vld [vmem:[%s1929 + $0xaa] sm:$0xff]
        %v2495 = vld [vmem:[%s1929 + $0xb2] sm:$0xff]
        %v2496 = vld [vmem:[%s1929 + $0xc2] sm:$0xff]
        %v2497 = vld [vmem:[%s1929 + $0xca] sm:$0xff]
        %v2498 = vld [vmem:[%s1929 + $0xda] sm:$0xff]
        %v2499 = vld [vmem:[%s1929 + $0xe2] sm:$0xff]
        %v2500 = vld [vmem:[%s1929 + $0xf2] sm:$0xff]
        %v2501 = vld [vmem:[%s1929 + $0xfa] sm:$0xff]
        %v2502 = vld [vmem:[%s1929 + $0x10a] sm:$0xff]
        %v2503 = vld [vmem:[%s1929 + $0x112] sm:$0xff]
        %v2504 = vld [vmem:[%s1929 + $0x122] sm:$0xff]
        %v2505 = vld [vmem:[%s1929 + $0x12a] sm:$0xff]
        %v2506 = vld [vmem:[%s1929 + $0x13a] sm:$0xff]
        %v2507 = vld [vmem:[%s1929 + $0x142] sm:$0xff]
        %v2508 = vld [vmem:[%s1929 + $0x152] sm:$0xff]
        %v2509 = vld [vmem:[%s1929 + $0x15a] sm:$0xff]
        %v2510 = vld [vmem:[%s1929 + $0x16a] sm:$0xff]
        %v2511 = vld [vmem:[%s1929 + $0x172] sm:$0xff]
        %s2512 = scalar_lea.vmem %s1, 64
        %v2513 = vld [vmem:[%s2512] sm:$0xff]
        %v2515 = vsel %vm223, %v2480, 0
        %v2518 = vsel %vm223, %v2481, 0
        %v2521 = vsel %vm223, %v2482, 0
        %v2524 = vsel %vm223, %v2483, 0
        %v2527 = vsel %vm223, %v2484, 0
        %v2530 = vsel %vm223, %v2485, 0
        %v2533 = vsel %vm223, %v2486, 0
        %v2536 = vsel %vm223, %v2487, 0
        %v2539 = vsel %vm223, %v2488, 0
        %v2542 = vsel %vm223, %v2489, 0
        %v2545 = vsel %vm223, %v2490, 0
        %v2548 = vsel %vm223, %v2491, 0
        %v2551 = vsel %vm223, %v2492, 0
        %v2554 = vsel %vm223, %v2493, 0
        %v2557 = vsel %vm223, %v2494, 0
        %v2560 = vsel %vm223, %v2495, 0
        %v2563 = vsel %vm223, %v2496, 0
        %v2566 = vsel %vm223, %v2497, 0
        %v2569 = vsel %vm223, %v2498, 0
        %v2572 = vsel %vm223, %v2499, 0
        %v2575 = vsel %vm223, %v2500, 0
        %v2578 = vsel %vm223, %v2501, 0
        %v2581 = vsel %vm223, %v2502, 0
        %v2584 = vsel %vm223, %v2503, 0
        %v2587 = vsel %vm223, %v2504, 0
        %v2590 = vsel %vm223, %v2505, 0
        %v2593 = vsel %vm223, %v2506, 0
        %v2596 = vsel %vm223, %v2507, 0
        %v2599 = vsel %vm223, %v2508, 0
        %v2602 = vsel %vm223, %v2509, 0
        %v2605 = vsel %vm223, %v2510, 0
        %v2608 = vsel %vm223, %v2511, 0
        %2610 = vmatpush.msra.mxu0 0.0
        %2611 = vmatpush.msra.mxu0 0.0
        %2612 = vmatpush.msra.mxu0 0.0
        %2613 = vmatpush.msra.mxu0 0.0
        %2614 = vmatpush.msra.mxu0 0.0
        %2615 = vmatpush.msra.mxu0 0.0
        %2616 = vmatpush.msra.mxu0 0.0
        %2617 = vmatpush.msra.mxu0 0.0
        %2618 = vmatpush.msra.mxu0 0.0
        %2619 = vmatpush.msra.mxu0 0.0
        %2620 = vmatpush.msra.mxu0 0.0
        %2621 = vmatpush.msra.mxu0 0.0
        %2622 = vmatpush.msra.mxu0 0.0
        %2623 = vmatpush.msra.mxu0 0.0
        %2624 = vmatpush.msra.mxu0 0.0
        %2625 = vmatpush.msra.mxu0 %v2513
        %2626 = vmatmul.f32.gmra.mxu0 %v2515
        %v2627 = vpop.f32.mrf.mxu0
        %v2628 = vadd.f32 0.0, %v2627
        %2629 = vmatmul.f32.gmra.mxu0 %v2518
        %v2630 = vpop.f32.mrf.mxu0
        %v2631 = vadd.f32 0.0, %v2630
        %2632 = vmatmul.f32.gmra.mxu0 %v2521
        %v2633 = vpop.f32.mrf.mxu0
        %v2634 = vadd.f32 0.0, %v2633
        %2635 = vmatmul.f32.gmra.mxu0 %v2524
        %v2636 = vpop.f32.mrf.mxu0
        %v2637 = vadd.f32 0.0, %v2636
        %2638 = vmatmul.f32.gmra.mxu0 %v2527
        %v2639 = vpop.f32.mrf.mxu0
        %v2640 = vadd.f32 0.0, %v2639
        %2641 = vmatmul.f32.gmra.mxu0 %v2530
        %v2642 = vpop.f32.mrf.mxu0
        %v2643 = vadd.f32 0.0, %v2642
        %2644 = vmatmul.f32.gmra.mxu0 %v2533
        %v2645 = vpop.f32.mrf.mxu0
        %v2646 = vadd.f32 0.0, %v2645
        %2647 = vmatmul.f32.gmra.mxu0 %v2536
        %v2648 = vpop.f32.mrf.mxu0
        %v2649 = vadd.f32 0.0, %v2648
        %2650 = vmatmul.f32.gmra.mxu0 %v2539
        %v2651 = vpop.f32.mrf.mxu0
        %v2652 = vadd.f32 0.0, %v2651
        %2653 = vmatmul.f32.gmra.mxu0 %v2542
        %v2654 = vpop.f32.mrf.mxu0
        %v2655 = vadd.f32 0.0, %v2654
        %2656 = vmatmul.f32.gmra.mxu0 %v2545
        %v2657 = vpop.f32.mrf.mxu0
        %v2658 = vadd.f32 0.0, %v2657
        %2659 = vmatmul.f32.gmra.mxu0 %v2548
        %v2660 = vpop.f32.mrf.mxu0
        %v2661 = vadd.f32 0.0, %v2660
        %2662 = vmatmul.f32.gmra.mxu0 %v2551
        %v2663 = vpop.f32.mrf.mxu0
        %v2664 = vadd.f32 0.0, %v2663
        %2665 = vmatmul.f32.gmra.mxu0 %v2554
        %v2666 = vpop.f32.mrf.mxu0
        %v2667 = vadd.f32 0.0, %v2666
        %2668 = vmatmul.f32.gmra.mxu0 %v2557
        %v2669 = vpop.f32.mrf.mxu0
        %v2670 = vadd.f32 0.0, %v2669
        %2671 = vmatmul.f32.gmra.mxu0 %v2560
        %v2672 = vpop.f32.mrf.mxu0
        %v2673 = vadd.f32 0.0, %v2672
        %2674 = vmatmul.f32.gmra.mxu0 %v2563
        %v2675 = vpop.f32.mrf.mxu0
        %v2676 = vadd.f32 0.0, %v2675
        %2677 = vmatmul.f32.gmra.mxu0 %v2566
        %v2678 = vpop.f32.mrf.mxu0
        %v2679 = vadd.f32 0.0, %v2678
        %2680 = vmatmul.f32.gmra.mxu0 %v2569
        %v2681 = vpop.f32.mrf.mxu0
        %v2682 = vadd.f32 0.0, %v2681
        %2683 = vmatmul.f32.gmra.mxu0 %v2572
        %v2684 = vpop.f32.mrf.mxu0
        %v2685 = vadd.f32 0.0, %v2684
        %2686 = vmatmul.f32.gmra.mxu0 %v2575
        %v2687 = vpop.f32.mrf.mxu0
        %v2688 = vadd.f32 0.0, %v2687
        %2689 = vmatmul.f32.gmra.mxu0 %v2578
        %v2690 = vpop.f32.mrf.mxu0
        %v2691 = vadd.f32 0.0, %v2690
        %2692 = vmatmul.f32.gmra.mxu0 %v2581
        %v2693 = vpop.f32.mrf.mxu0
        %v2694 = vadd.f32 0.0, %v2693
        %2695 = vmatmul.f32.gmra.mxu0 %v2584
        %v2696 = vpop.f32.mrf.mxu0
        %v2697 = vadd.f32 0.0, %v2696
        %2698 = vmatmul.f32.gmra.mxu0 %v2587
        %v2699 = vpop.f32.mrf.mxu0
        %v2700 = vadd.f32 0.0, %v2699
        %2701 = vmatmul.f32.gmra.mxu0 %v2590
        %v2702 = vpop.f32.mrf.mxu0
        %v2703 = vadd.f32 0.0, %v2702
        %2704 = vmatmul.f32.gmra.mxu0 %v2593
        %v2705 = vpop.f32.mrf.mxu0
        %v2706 = vadd.f32 0.0, %v2705
        %2707 = vmatmul.f32.gmra.mxu0 %v2596
        %v2708 = vpop.f32.mrf.mxu0
        %v2709 = vadd.f32 0.0, %v2708
        %2710 = vmatmul.f32.gmra.mxu0 %v2599
        %v2711 = vpop.f32.mrf.mxu0
        %v2712 = vadd.f32 0.0, %v2711
        %2713 = vmatmul.f32.gmra.mxu0 %v2602
        %v2714 = vpop.f32.mrf.mxu0
        %v2715 = vadd.f32 0.0, %v2714
        %2716 = vmatmul.f32.gmra.mxu0 %v2605
        %v2717 = vpop.f32.mrf.mxu0
        %v2718 = vadd.f32 0.0, %v2717
        %2719 = vmatmul.f32.gmra.mxu0 %v2608
        %v2720 = vpop.f32.mrf.mxu0
        %v2721 = vadd.f32 0.0, %v2720
        %2722 = vdwg.mxu0
        %v2723 = vadd.f32 %v2448, %v2628
        %v2724 = vadd.f32 %v2449, %v2631
        %v2725 = vadd.f32 %v2450, %v2634
        %v2726 = vadd.f32 %v2451, %v2637
        %v2727 = vadd.f32 %v2452, %v2640
        %v2728 = vadd.f32 %v2453, %v2643
        %v2729 = vadd.f32 %v2454, %v2646
        %v2730 = vadd.f32 %v2455, %v2649
        %v2731 = vadd.f32 %v2456, %v2652
        %v2732 = vadd.f32 %v2457, %v2655
        %v2733 = vadd.f32 %v2458, %v2658
        %v2734 = vadd.f32 %v2459, %v2661
        %v2735 = vadd.f32 %v2460, %v2664
        %v2736 = vadd.f32 %v2461, %v2667
        %v2737 = vadd.f32 %v2462, %v2670
        %v2738 = vadd.f32 %v2463, %v2673
        %v2739 = vadd.f32 %v2464, %v2676
        %v2740 = vadd.f32 %v2465, %v2679
        %v2741 = vadd.f32 %v2466, %v2682
        %v2742 = vadd.f32 %v2467, %v2685
        %v2743 = vadd.f32 %v2468, %v2688
        %v2744 = vadd.f32 %v2469, %v2691
        %v2745 = vadd.f32 %v2470, %v2694
        %v2746 = vadd.f32 %v2471, %v2697
        %v2747 = vadd.f32 %v2472, %v2700
        %v2748 = vadd.f32 %v2473, %v2703
        %v2749 = vadd.f32 %v2474, %v2706
        %v2750 = vadd.f32 %v2475, %v2709
        %v2751 = vadd.f32 %v2476, %v2712
        %v2752 = vadd.f32 %v2477, %v2715
        %v2753 = vadd.f32 %v2478, %v2718
        %v2754 = vadd.f32 %v2479, %v2721
        %v2755 = vld [vmem:[%s2] sm:$0x1]
        %v2757 = vperm.slane %v2755, 0
        %v2759 = vadd.f32 %v2723, %v2757
        %v2760 = vadd.f32 %v2724, %v2757
        %v2761 = vadd.f32 %v2725, %v2757
        %v2762 = vadd.f32 %v2726, %v2757
        %v2763 = vadd.f32 %v2727, %v2757
        %v2764 = vadd.f32 %v2728, %v2757
        %v2765 = vadd.f32 %v2729, %v2757
        %v2766 = vadd.f32 %v2730, %v2757
        %v2767 = vadd.f32 %v2731, %v2757
        %v2768 = vadd.f32 %v2732, %v2757
        %v2769 = vadd.f32 %v2733, %v2757
        %v2770 = vadd.f32 %v2734, %v2757
        %v2771 = vadd.f32 %v2735, %v2757
        %v2772 = vadd.f32 %v2736, %v2757
        %v2773 = vadd.f32 %v2737, %v2757
        %v2774 = vadd.f32 %v2738, %v2757
        %v2775 = vadd.f32 %v2739, %v2757
        %v2776 = vadd.f32 %v2740, %v2757
        %v2777 = vadd.f32 %v2741, %v2757
        %v2778 = vadd.f32 %v2742, %v2757
        %v2779 = vadd.f32 %v2743, %v2757
        %v2780 = vadd.f32 %v2744, %v2757
        %v2781 = vadd.f32 %v2745, %v2757
        %v2782 = vadd.f32 %v2746, %v2757
        %v2783 = vadd.f32 %v2747, %v2757
        %v2784 = vadd.f32 %v2748, %v2757
        %v2785 = vadd.f32 %v2749, %v2757
        %v2786 = vadd.f32 %v2750, %v2757
        %v2787 = vadd.f32 %v2751, %v2757
        %v2788 = vadd.f32 %v2752, %v2757
        %v2789 = vadd.f32 %v2753, %v2757
        %v2790 = vadd.f32 %v2754, %v2757
        %v2791 = vmax.f32 %v2759, 0.0
        %v2792 = vmax.f32 %v2760, 0.0
        %v2793 = vmax.f32 %v2761, 0.0
        %v2794 = vmax.f32 %v2762, 0.0
        %v2795 = vmax.f32 %v2763, 0.0
        %v2796 = vmax.f32 %v2764, 0.0
        %v2797 = vmax.f32 %v2765, 0.0
        %v2798 = vmax.f32 %v2766, 0.0
        %v2799 = vmax.f32 %v2767, 0.0
        %v2800 = vmax.f32 %v2768, 0.0
        %v2801 = vmax.f32 %v2769, 0.0
        %v2802 = vmax.f32 %v2770, 0.0
        %v2803 = vmax.f32 %v2771, 0.0
        %v2804 = vmax.f32 %v2772, 0.0
        %v2805 = vmax.f32 %v2773, 0.0
        %v2806 = vmax.f32 %v2774, 0.0
        %v2807 = vmax.f32 %v2775, 0.0
        %v2808 = vmax.f32 %v2776, 0.0
        %v2809 = vmax.f32 %v2777, 0.0
        %v2810 = vmax.f32 %v2778, 0.0
        %v2811 = vmax.f32 %v2779, 0.0
        %v2812 = vmax.f32 %v2780, 0.0
        %v2813 = vmax.f32 %v2781, 0.0
        %v2814 = vmax.f32 %v2782, 0.0
        %v2815 = vmax.f32 %v2783, 0.0
        %v2816 = vmax.f32 %v2784, 0.0
        %v2817 = vmax.f32 %v2785, 0.0
        %v2818 = vmax.f32 %v2786, 0.0
        %v2819 = vmax.f32 %v2787, 0.0
        %v2820 = vmax.f32 %v2788, 0.0
        %v2821 = vmax.f32 %v2789, 0.0
        %v2822 = vmax.f32 %v2790, 0.0
        %vm2823 = vcmask 31744
        %2824 = vst.msk [vmem:[#allocation3] sm:$0xff] %vm2823, 0.0
        %2825 = vst.msk [vmem:[#allocation3 + $0x8] sm:$0xff] %vm2823, 0.0
        %vm2826 = vcmask 25600
        %2827 = vst.msk [vmem:[#allocation3 + $0x10] sm:$0x3] %vm2826, 0.0
        %2828 = vst.msk [vmem:[#allocation3 + $0x18] sm:$0xff] %vm2823, 0.0
        %2829 = vst.msk [vmem:[#allocation3 + $0x20] sm:$0xff] %vm2823, 0.0
        %2830 = vst.msk [vmem:[#allocation3 + $0x28] sm:$0x3] %vm2826, 0.0
        %2831 = vst.msk [vmem:[#allocation3 + $0x30] sm:$0xff] %vm2823, 0.0
        %2832 = vst.msk [vmem:[#allocation3 + $0x38] sm:$0xff] %vm2823, 0.0
        %2833 = vst.msk [vmem:[#allocation3 + $0x40] sm:$0x3] %vm2826, 0.0
        %2834 = vst.msk [vmem:[#allocation3 + $0x48] sm:$0xff] %vm2823, 0.0
        %2835 = vst.msk [vmem:[#allocation3 + $0x50] sm:$0xff] %vm2823, 0.0
        %2836 = vst.msk [vmem:[#allocation3 + $0x58] sm:$0x3] %vm2826, 0.0
        %2837 = vst.msk [vmem:[#allocation3 + $0x60] sm:$0xff] %vm2823, 0.0
        %2838 = vst.msk [vmem:[#allocation3 + $0x68] sm:$0xff] %vm2823, 0.0
        %2839 = vst.msk [vmem:[#allocation3 + $0x70] sm:$0x3] %vm2826, 0.0
        %2840 = vst.msk [vmem:[#allocation3 + $0x78] sm:$0xff] %vm2823, 0.0
        %2841 = vst.msk [vmem:[#allocation3 + $0x80] sm:$0xff] %vm2823, 0.0
        %2842 = vst.msk [vmem:[#allocation3 + $0x88] sm:$0x3] %vm2826, 0.0
        %2843 = vst.msk [vmem:[#allocation3 + $0x90] sm:$0xff] %vm2823, 0.0
        %2844 = vst.msk [vmem:[#allocation3 + $0x98] sm:$0xff] %vm2823, 0.0
        %2845 = vst.msk [vmem:[#allocation3 + $0xa0] sm:$0x3] %vm2826, 0.0
        %2846 = vst.msk [vmem:[#allocation3 + $0xa8] sm:$0xff] %vm2823, 0.0
        %2847 = vst.msk [vmem:[#allocation3 + $0xb0] sm:$0xff] %vm2823, 0.0
        %2848 = vst.msk [vmem:[#allocation3 + $0xb8] sm:$0x3] %vm2826, 0.0
        %2849 = vst.msk [vmem:[#allocation3 + $0xc0] sm:$0xff] %vm2823, 0.0
        %2850 = vst.msk [vmem:[#allocation3 + $0xc8] sm:$0xff] %vm2823, 0.0
        %2851 = vst.msk [vmem:[#allocation3 + $0xd0] sm:$0x3] %vm2826, 0.0
        %2852 = vst.msk [vmem:[#allocation3 + $0xd8] sm:$0xff] %vm2823, 0.0
        %2853 = vst.msk [vmem:[#allocation3 + $0xe0] sm:$0xff] %vm2823, 0.0
        %2854 = vst.msk [vmem:[#allocation3 + $0xe8] sm:$0x3] %vm2826, 0.0
        %2855 = vst.msk [vmem:[#allocation3 + $0xf0] sm:$0xff] %vm2823, 0.0
        %2856 = vst.msk [vmem:[#allocation3 + $0xf8] sm:$0xff] %vm2823, 0.0
        %2857 = vst.msk [vmem:[#allocation3 + $0x100] sm:$0x3] %vm2826, 0.0
        %2858 = vst.msk [vmem:[#allocation3 + $0x108] sm:$0xff] %vm2823, 0.0
        %2859 = vst.msk [vmem:[#allocation3 + $0x110] sm:$0xff] %vm2823, 0.0
        %2860 = vst.msk [vmem:[#allocation3 + $0x118] sm:$0x3] %vm2826, 0.0
        %2861 = vst.msk [vmem:[#allocation3 + $0x120] sm:$0xff] %vm2823, 0.0
        %2862 = vst.msk [vmem:[#allocation3 + $0x128] sm:$0xff] %vm2823, 0.0
        %2863 = vst.msk [vmem:[#allocation3 + $0x130] sm:$0x3] %vm2826, 0.0
        %2864 = vst.msk [vmem:[#allocation3 + $0x138] sm:$0xff] %vm2823, 0.0
        %2865 = vst.msk [vmem:[#allocation3 + $0x140] sm:$0xff] %vm2823, 0.0
        %2866 = vst.msk [vmem:[#allocation3 + $0x148] sm:$0x3] %vm2826, 0.0
        %2867 = vst.msk [vmem:[#allocation3 + $0x150] sm:$0xff] %vm2823, 0.0
        %2868 = vst.msk [vmem:[#allocation3 + $0x158] sm:$0xff] %vm2823, 0.0
        %2869 = vst.msk [vmem:[#allocation3 + $0x160] sm:$0x3] %vm2826, 0.0
        %2870 = vst.msk [vmem:[#allocation3 + $0x168] sm:$0xff] %vm2823, 0.0
        %2871 = vst.msk [vmem:[#allocation3 + $0x170] sm:$0xff] %vm2823, 0.0
        %2872 = vst.msk [vmem:[#allocation3 + $0x178] sm:$0x3] %vm2826, 0.0
        %2873 = vst.msk [vmem:[#allocation3 + $0x180] sm:$0xff] %vm2823, 0.0
        %2874 = vst.msk [vmem:[#allocation3 + $0x188] sm:$0xff] %vm2823, 0.0
        %2875 = vst.msk [vmem:[#allocation3 + $0x190] sm:$0x3] %vm2826, 0.0
        %2876 = vst.msk [vmem:[#allocation3 + $0x198] sm:$0xff] %vm2823, 0.0
        %2877 = vst.msk [vmem:[#allocation3 + $0x1a0] sm:$0xff] %vm2823, 0.0
        %2878 = vst.msk [vmem:[#allocation3 + $0x1a8] sm:$0x3] %vm2826, 0.0
        %s2879 = scalar_lea.vmem [#allocation3], 24
        %2880 = vst.msk [vmem:[%s2879 + $0x1] sm:$0xff] %vm2823, %v2791
        %2881 = vst.msk [vmem:[%s2879 + $0x9] sm:$0xff] %vm2823, %v2792
        %2882 = vst.msk [vmem:[%s2879 + $0x19] sm:$0xff] %vm2823, %v2793
        %2883 = vst.msk [vmem:[%s2879 + $0x21] sm:$0xff] %vm2823, %v2794
        %2884 = vst.msk [vmem:[%s2879 + $0x31] sm:$0xff] %vm2823, %v2795
        %2885 = vst.msk [vmem:[%s2879 + $0x39] sm:$0xff] %vm2823, %v2796
        %2886 = vst.msk [vmem:[%s2879 + $0x49] sm:$0xff] %vm2823, %v2797
        %2887 = vst.msk [vmem:[%s2879 + $0x51] sm:$0xff] %vm2823, %v2798
        %2888 = vst.msk [vmem:[%s2879 + $0x61] sm:$0xff] %vm2823, %v2799
        %2889 = vst.msk [vmem:[%s2879 + $0x69] sm:$0xff] %vm2823, %v2800
        %2890 = vst.msk [vmem:[%s2879 + $0x79] sm:$0xff] %vm2823, %v2801
        %2891 = vst.msk [vmem:[%s2879 + $0x81] sm:$0xff] %vm2823, %v2802
        %2892 = vst.msk [vmem:[%s2879 + $0x91] sm:$0xff] %vm2823, %v2803
        %2893 = vst.msk [vmem:[%s2879 + $0x99] sm:$0xff] %vm2823, %v2804
        %2894 = vst.msk [vmem:[%s2879 + $0xa9] sm:$0xff] %vm2823, %v2805
        %2895 = vst.msk [vmem:[%s2879 + $0xb1] sm:$0xff] %vm2823, %v2806
        %2896 = vst.msk [vmem:[%s2879 + $0xc1] sm:$0xff] %vm2823, %v2807
        %2897 = vst.msk [vmem:[%s2879 + $0xc9] sm:$0xff] %vm2823, %v2808
        %2898 = vst.msk [vmem:[%s2879 + $0xd9] sm:$0xff] %vm2823, %v2809
        %2899 = vst.msk [vmem:[%s2879 + $0xe1] sm:$0xff] %vm2823, %v2810
        %2900 = vst.msk [vmem:[%s2879 + $0xf1] sm:$0xff] %vm2823, %v2811
        %2901 = vst.msk [vmem:[%s2879 + $0xf9] sm:$0xff] %vm2823, %v2812
        %2902 = vst.msk [vmem:[%s2879 + $0x109] sm:$0xff] %vm2823, %v2813
        %2903 = vst.msk [vmem:[%s2879 + $0x111] sm:$0xff] %vm2823, %v2814
        %2904 = vst.msk [vmem:[%s2879 + $0x121] sm:$0xff] %vm2823, %v2815
        %2905 = vst.msk [vmem:[%s2879 + $0x129] sm:$0xff] %vm2823, %v2816
        %2906 = vst.msk [vmem:[%s2879 + $0x139] sm:$0xff] %vm2823, %v2817
        %2907 = vst.msk [vmem:[%s2879 + $0x141] sm:$0xff] %vm2823, %v2818
        %2908 = vst.msk [vmem:[%s2879 + $0x151] sm:$0xff] %vm2823, %v2819
        %2909 = vst.msk [vmem:[%s2879 + $0x159] sm:$0xff] %vm2823, %v2820
        %2910 = vst.msk [vmem:[%s2879 + $0x169] sm:$0xff] %vm2823, %v2821
        %2911 = vst.msk [vmem:[%s2879 + $0x171] sm:$0xff] %vm2823, %v2822
        %v2912 = vld [vmem:[#allocation3] sm:$0xff]
        %v2913 = vld [vmem:[#allocation3 + $0x8] sm:$0xff]
        %v2914 = vld [vmem:[#allocation3 + $0x18] sm:$0xff]
        %v2915 = vld [vmem:[#allocation3 + $0x20] sm:$0xff]
        %v2916 = vld [vmem:[#allocation3 + $0x30] sm:$0xff]
        %v2917 = vld [vmem:[#allocation3 + $0x38] sm:$0xff]
        %v2918 = vld [vmem:[#allocation3 + $0x48] sm:$0xff]
        %v2919 = vld [vmem:[#allocation3 + $0x50] sm:$0xff]
        %v2920 = vld [vmem:[#allocation3 + $0x60] sm:$0xff]
        %v2921 = vld [vmem:[#allocation3 + $0x68] sm:$0xff]
        %v2922 = vld [vmem:[#allocation3 + $0x78] sm:$0xff]
        %v2923 = vld [vmem:[#allocation3 + $0x80] sm:$0xff]
        %v2924 = vld [vmem:[#allocation3 + $0x90] sm:$0xff]
        %v2925 = vld [vmem:[#allocation3 + $0x98] sm:$0xff]
        %v2926 = vld [vmem:[#allocation3 + $0xa8] sm:$0xff]
        %v2927 = vld [vmem:[#allocation3 + $0xb0] sm:$0xff]
        %v2928 = vld [vmem:[#allocation3 + $0xc0] sm:$0xff]
        %v2929 = vld [vmem:[#allocation3 + $0xc8] sm:$0xff]
        %v2930 = vld [vmem:[#allocation3 + $0xd8] sm:$0xff]
        %v2931 = vld [vmem:[#allocation3 + $0xe0] sm:$0xff]
        %v2932 = vld [vmem:[#allocation3 + $0xf0] sm:$0xff]
        %v2933 = vld [vmem:[#allocation3 + $0xf8] sm:$0xff]
        %v2934 = vld [vmem:[#allocation3 + $0x108] sm:$0xff]
        %v2935 = vld [vmem:[#allocation3 + $0x110] sm:$0xff]
        %v2936 = vld [vmem:[#allocation3 + $0x120] sm:$0xff]
        %v2937 = vld [vmem:[#allocation3 + $0x128] sm:$0xff]
        %v2938 = vld [vmem:[#allocation3 + $0x138] sm:$0xff]
        %v2939 = vld [vmem:[#allocation3 + $0x140] sm:$0xff]
        %v2940 = vld [vmem:[#allocation3 + $0x150] sm:$0xff]
        %v2941 = vld [vmem:[#allocation3 + $0x158] sm:$0xff]
        %v2942 = vld [vmem:[#allocation3 + $0x168] sm:$0xff]
        %v2943 = vld [vmem:[#allocation3 + $0x170] sm:$0xff]
        %v2944 = vld [vmem:[%s3] sm:$0xf]
        %v2945 = vld [vmem:[#allocation3 + $0x1] sm:$0xff]
        %v2946 = vld [vmem:[#allocation3 + $0x9] sm:$0xff]
        %v2947 = vld [vmem:[#allocation3 + $0x19] sm:$0xff]
        %v2948 = vld [vmem:[#allocation3 + $0x21] sm:$0xff]
        %v2949 = vld [vmem:[#allocation3 + $0x31] sm:$0xff]
        %v2950 = vld [vmem:[#allocation3 + $0x39] sm:$0xff]
        %v2951 = vld [vmem:[#allocation3 + $0x49] sm:$0xff]
        %v2952 = vld [vmem:[#allocation3 + $0x51] sm:$0xff]
        %v2953 = vld [vmem:[#allocation3 + $0x61] sm:$0xff]
        %v2954 = vld [vmem:[#allocation3 + $0x69] sm:$0xff]
        %v2955 = vld [vmem:[#allocation3 + $0x79] sm:$0xff]
        %v2956 = vld [vmem:[#allocation3 + $0x81] sm:$0xff]
        %v2957 = vld [vmem:[#allocation3 + $0x91] sm:$0xff]
        %v2958 = vld [vmem:[#allocation3 + $0x99] sm:$0xff]
        %v2959 = vld [vmem:[#allocation3 + $0xa9] sm:$0xff]
        %v2960 = vld [vmem:[#allocation3 + $0xb1] sm:$0xff]
        %v2961 = vld [vmem:[#allocation3 + $0xc1] sm:$0xff]
        %v2962 = vld [vmem:[#allocation3 + $0xc9] sm:$0xff]
        %v2963 = vld [vmem:[#allocation3 + $0xd9] sm:$0xff]
        %v2964 = vld [vmem:[#allocation3 + $0xe1] sm:$0xff]
        %v2965 = vld [vmem:[#allocation3 + $0xf1] sm:$0xff]
        %v2966 = vld [vmem:[#allocation3 + $0xf9] sm:$0xff]
        %v2967 = vld [vmem:[#allocation3 + $0x109] sm:$0xff]
        %v2968 = vld [vmem:[#allocation3 + $0x111] sm:$0xff]
        %v2969 = vld [vmem:[#allocation3 + $0x121] sm:$0xff]
        %v2970 = vld [vmem:[#allocation3 + $0x129] sm:$0xff]
        %v2971 = vld [vmem:[#allocation3 + $0x139] sm:$0xff]
        %v2972 = vld [vmem:[#allocation3 + $0x141] sm:$0xff]
        %v2973 = vld [vmem:[#allocation3 + $0x151] sm:$0xff]
        %v2974 = vld [vmem:[#allocation3 + $0x159] sm:$0xff]
        %v2975 = vld [vmem:[#allocation3 + $0x169] sm:$0xff]
        %v2976 = vld [vmem:[#allocation3 + $0x171] sm:$0xff]
        %s2977 = scalar_lea.vmem %s3, 4
        %v2978 = vld [vmem:[%s2977] sm:$0xf]
        %v2980 = vsel %vm2823, %v2978, 0
        %v2983 = vsel %vm2823, %v2945, 0
        %v2986 = vsel %vm2823, %v2946, 0
        %v2989 = vsel %vm2823, %v2947, 0
        %v2992 = vsel %vm2823, %v2948, 0
        %v2995 = vsel %vm2823, %v2949, 0
        %v2998 = vsel %vm2823, %v2950, 0
        %v3001 = vsel %vm2823, %v2951, 0
        %v3004 = vsel %vm2823, %v2952, 0
        %v3007 = vsel %vm2823, %v2953, 0
        %v3010 = vsel %vm2823, %v2954, 0
        %v3013 = vsel %vm2823, %v2955, 0
        %v3016 = vsel %vm2823, %v2956, 0
        %v3019 = vsel %vm2823, %v2957, 0
        %v3022 = vsel %vm2823, %v2958, 0
        %v3025 = vsel %vm2823, %v2959, 0
        %v3028 = vsel %vm2823, %v2960, 0
        %v3031 = vsel %vm2823, %v2961, 0
        %v3034 = vsel %vm2823, %v2962, 0
        %v3037 = vsel %vm2823, %v2963, 0
        %v3040 = vsel %vm2823, %v2964, 0
        %v3043 = vsel %vm2823, %v2965, 0
        %v3046 = vsel %vm2823, %v2966, 0
        %v3049 = vsel %vm2823, %v2967, 0
        %v3052 = vsel %vm2823, %v2968, 0
        %v3055 = vsel %vm2823, %v2969, 0
        %v3058 = vsel %vm2823, %v2970, 0
        %v3061 = vsel %vm2823, %v2971, 0
        %v3064 = vsel %vm2823, %v2972, 0
        %v3067 = vsel %vm2823, %v2973, 0
        %v3070 = vsel %vm2823, %v2974, 0
        %v3073 = vsel %vm2823, %v2975, 0
        %v3076 = vsel %vm2823, %v2976, 0
        %3078 = vmatpush.xpose.msra.mxu0 %v3028
        %3079 = vmatpush.xpose.msra.mxu0 %v3025
        %3080 = vmatpush.xpose.msra.mxu0 %v3022
        %3081 = vmatpush.xpose.msra.mxu0 %v3019
        %3082 = vmatpush.xpose.msra.mxu0 %v3016
        %3083 = vmatpush.xpose.msra.mxu0 %v3013
        %3084 = vmatpush.xpose.msra.mxu0 %v3010
        %3085 = vmatpush.xpose.msra.mxu0 %v3007
        %3086 = vmatpush.xpose.msra.mxu0 %v3004
        %3087 = vmatpush.xpose.msra.mxu0 %v3001
        %3088 = vmatpush.xpose.msra.mxu0 %v2998
        %3089 = vmatpush.xpose.msra.mxu0 %v2995
        %3090 = vmatpush.xpose.msra.mxu0 %v2992
        %3091 = vmatpush.xpose.msra.mxu0 %v2989
        %3092 = vmatpush.xpose.msra.mxu0 %v2986
        %3093 = vmatpush.xpose.msra.mxu0 %v2983
        %3094 = vmatmul.f32.gmra.mxu0 %v2980
        %v3095 = vpop.f32.mrf.mxu0
        %v3096 = vadd.f32 0.0, %v3095
        %3097 = vdwg.mxu0
        %3098 = vmatpush.xpose.msra.mxu0 %v3076
        %3099 = vmatpush.xpose.msra.mxu0 %v3073
        %3100 = vmatpush.xpose.msra.mxu0 %v3070
        %3101 = vmatpush.xpose.msra.mxu0 %v3067
        %3102 = vmatpush.xpose.msra.mxu0 %v3064
        %3103 = vmatpush.xpose.msra.mxu0 %v3061
        %3104 = vmatpush.xpose.msra.mxu0 %v3058
        %3105 = vmatpush.xpose.msra.mxu0 %v3055
        %3106 = vmatpush.xpose.msra.mxu0 %v3052
        %3107 = vmatpush.xpose.msra.mxu0 %v3049
        %3108 = vmatpush.xpose.msra.mxu0 %v3046
        %3109 = vmatpush.xpose.msra.mxu0 %v3043
        %3110 = vmatpush.xpose.msra.mxu0 %v3040
        %3111 = vmatpush.xpose.msra.mxu0 %v3037
        %3112 = vmatpush.xpose.msra.mxu0 %v3034
        %3113 = vmatpush.xpose.msra.mxu0 %v3031
        %3114 = vmatmul.f32.gmra.mxu0 %v2980
        %v3115 = vpop.f32.mrf.mxu0
        %v3116 = vadd.f32 0.0, %v3115
        %3117 = vdwg.mxu0
        %v3119 = vsel %vm2823, %v2944, 0
        %v3122 = vsel %vm2823, %v2912, 0
        %v3125 = vsel %vm2823, %v2913, 0
        %v3128 = vsel %vm2823, %v2914, 0
        %v3131 = vsel %vm2823, %v2915, 0
        %v3134 = vsel %vm2823, %v2916, 0
        %v3137 = vsel %vm2823, %v2917, 0
        %v3140 = vsel %vm2823, %v2918, 0
        %v3143 = vsel %vm2823, %v2919, 0
        %v3146 = vsel %vm2823, %v2920, 0
        %v3149 = vsel %vm2823, %v2921, 0
        %v3152 = vsel %vm2823, %v2922, 0
        %v3155 = vsel %vm2823, %v2923, 0
        %v3158 = vsel %vm2823, %v2924, 0
        %v3161 = vsel %vm2823, %v2925, 0
        %v3164 = vsel %vm2823, %v2926, 0
        %v3167 = vsel %vm2823, %v2927, 0
        %v3170 = vsel %vm2823, %v2928, 0
        %v3173 = vsel %vm2823, %v2929, 0
        %v3176 = vsel %vm2823, %v2930, 0
        %v3179 = vsel %vm2823, %v2931, 0
        %v3182 = vsel %vm2823, %v2932, 0
        %v3185 = vsel %vm2823, %v2933, 0
        %v3188 = vsel %vm2823, %v2934, 0
        %v3191 = vsel %vm2823, %v2935, 0
        %v3194 = vsel %vm2823, %v2936, 0
        %v3197 = vsel %vm2823, %v2937, 0
        %v3200 = vsel %vm2823, %v2938, 0
        %v3203 = vsel %vm2823, %v2939, 0
        %v3206 = vsel %vm2823, %v2940, 0
        %v3209 = vsel %vm2823, %v2941, 0
        %v3212 = vsel %vm2823, %v2942, 0
        %v3215 = vsel %vm2823, %v2943, 0
        %3217 = vmatpush.xpose.msra.mxu0 %v3167
        %3218 = vmatpush.xpose.msra.mxu0 %v3164
        %3219 = vmatpush.xpose.msra.mxu0 %v3161
        %3220 = vmatpush.xpose.msra.mxu0 %v3158
        %3221 = vmatpush.xpose.msra.mxu0 %v3155
        %3222 = vmatpush.xpose.msra.mxu0 %v3152
        %3223 = vmatpush.xpose.msra.mxu0 %v3149
        %3224 = vmatpush.xpose.msra.mxu0 %v3146
        %3225 = vmatpush.xpose.msra.mxu0 %v3143
        %3226 = vmatpush.xpose.msra.mxu0 %v3140
        %3227 = vmatpush.xpose.msra.mxu0 %v3137
        %3228 = vmatpush.xpose.msra.mxu0 %v3134
        %3229 = vmatpush.xpose.msra.mxu0 %v3131
        %3230 = vmatpush.xpose.msra.mxu0 %v3128
        %3231 = vmatpush.xpose.msra.mxu0 %v3125
        %3232 = vmatpush.xpose.msra.mxu0 %v3122
        %3233 = vmatmul.f32.gmra.mxu0 %v3119
        %v3234 = vpop.f32.mrf.mxu0
        %v3235 = vadd.f32 %v3096, %v3234
        %3236 = vdwg.mxu0
        %3237 = vmatpush.xpose.msra.mxu0 %v3215
        %3238 = vmatpush.xpose.msra.mxu0 %v3212
        %3239 = vmatpush.xpose.msra.mxu0 %v3209
        %3240 = vmatpush.xpose.msra.mxu0 %v3206
        %3241 = vmatpush.xpose.msra.mxu0 %v3203
        %3242 = vmatpush.xpose.msra.mxu0 %v3200
        %3243 = vmatpush.xpose.msra.mxu0 %v3197
        %3244 = vmatpush.xpose.msra.mxu0 %v3194
        %3245 = vmatpush.xpose.msra.mxu0 %v3191
        %3246 = vmatpush.xpose.msra.mxu0 %v3188
        %3247 = vmatpush.xpose.msra.mxu0 %v3185
        %3248 = vmatpush.xpose.msra.mxu0 %v3182
        %3249 = vmatpush.xpose.msra.mxu0 %v3179
        %3250 = vmatpush.xpose.msra.mxu0 %v3176
        %3251 = vmatpush.xpose.msra.mxu0 %v3173
        %3252 = vmatpush.xpose.msra.mxu0 %v3170
        %3253 = vmatmul.f32.gmra.mxu0 %v3119
        %v3254 = vpop.f32.mrf.mxu0
        %v3255 = vadd.f32 %v3116, %v3254
        %3256 = vdwg.mxu0
        %v3257 = vld [vmem:[#allocation3 + $0x2] sm:$0xff]
        %v3258 = vld [vmem:[#allocation3 + $0xa] sm:$0xff]
        %v3259 = vld [vmem:[#allocation3 + $0x1a] sm:$0xff]
        %v3260 = vld [vmem:[#allocation3 + $0x22] sm:$0xff]
        %v3261 = vld [vmem:[#allocation3 + $0x32] sm:$0xff]
        %v3262 = vld [vmem:[#allocation3 + $0x3a] sm:$0xff]
        %v3263 = vld [vmem:[#allocation3 + $0x4a] sm:$0xff]
        %v3264 = vld [vmem:[#allocation3 + $0x52] sm:$0xff]
        %v3265 = vld [vmem:[#allocation3 + $0x62] sm:$0xff]
        %v3266 = vld [vmem:[#allocation3 + $0x6a] sm:$0xff]
        %v3267 = vld [vmem:[#allocation3 + $0x7a] sm:$0xff]
        %v3268 = vld [vmem:[#allocation3 + $0x82] sm:$0xff]
        %v3269 = vld [vmem:[#allocation3 + $0x92] sm:$0xff]
        %v3270 = vld [vmem:[#allocation3 + $0x9a] sm:$0xff]
        %v3271 = vld [vmem:[#allocation3 + $0xaa] sm:$0xff]
        %v3272 = vld [vmem:[#allocation3 + $0xb2] sm:$0xff]
        %v3273 = vld [vmem:[#allocation3 + $0xc2] sm:$0xff]
        %v3274 = vld [vmem:[#allocation3 + $0xca] sm:$0xff]
        %v3275 = vld [vmem:[#allocation3 + $0xda] sm:$0xff]
        %v3276 = vld [vmem:[#allocation3 + $0xe2] sm:$0xff]
        %v3277 = vld [vmem:[#allocation3 + $0xf2] sm:$0xff]
        %v3278 = vld [vmem:[#allocation3 + $0xfa] sm:$0xff]
        %v3279 = vld [vmem:[#allocation3 + $0x10a] sm:$0xff]
        %v3280 = vld [vmem:[#allocation3 + $0x112] sm:$0xff]
        %v3281 = vld [vmem:[#allocation3 + $0x122] sm:$0xff]
        %v3282 = vld [vmem:[#allocation3 + $0x12a] sm:$0xff]
        %v3283 = vld [vmem:[#allocation3 + $0x13a] sm:$0xff]
        %v3284 = vld [vmem:[#allocation3 + $0x142] sm:$0xff]
        %v3285 = vld [vmem:[#allocation3 + $0x152] sm:$0xff]
        %v3286 = vld [vmem:[#allocation3 + $0x15a] sm:$0xff]
        %v3287 = vld [vmem:[#allocation3 + $0x16a] sm:$0xff]
        %v3288 = vld [vmem:[#allocation3 + $0x172] sm:$0xff]
        %s3289 = scalar_lea.vmem %s3, 8
        %v3290 = vld [vmem:[%s3289] sm:$0xf]
        %v3292 = vsel %vm2823, %v3290, 0
        %v3295 = vsel %vm2823, %v3257, 0
        %v3298 = vsel %vm2823, %v3258, 0
        %v3301 = vsel %vm2823, %v3259, 0
        %v3304 = vsel %vm2823, %v3260, 0
        %v3307 = vsel %vm2823, %v3261, 0
        %v3310 = vsel %vm2823, %v3262, 0
        %v3313 = vsel %vm2823, %v3263, 0
        %v3316 = vsel %vm2823, %v3264, 0
        %v3319 = vsel %vm2823, %v3265, 0
        %v3322 = vsel %vm2823, %v3266, 0
        %v3325 = vsel %vm2823, %v3267, 0
        %v3328 = vsel %vm2823, %v3268, 0
        %v3331 = vsel %vm2823, %v3269, 0
        %v3334 = vsel %vm2823, %v3270, 0
        %v3337 = vsel %vm2823, %v3271, 0
        %v3340 = vsel %vm2823, %v3272, 0
        %v3343 = vsel %vm2823, %v3273, 0
        %v3346 = vsel %vm2823, %v3274, 0
        %v3349 = vsel %vm2823, %v3275, 0
        %v3352 = vsel %vm2823, %v3276, 0
        %v3355 = vsel %vm2823, %v3277, 0
        %v3358 = vsel %vm2823, %v3278, 0
        %v3361 = vsel %vm2823, %v3279, 0
        %v3364 = vsel %vm2823, %v3280, 0
        %v3367 = vsel %vm2823, %v3281, 0
        %v3370 = vsel %vm2823, %v3282, 0
        %v3373 = vsel %vm2823, %v3283, 0
        %v3376 = vsel %vm2823, %v3284, 0
        %v3379 = vsel %vm2823, %v3285, 0
        %v3382 = vsel %vm2823, %v3286, 0
        %v3385 = vsel %vm2823, %v3287, 0
        %v3388 = vsel %vm2823, %v3288, 0
        %3390 = vmatpush.xpose.msra.mxu0 %v3340
        %3391 = vmatpush.xpose.msra.mxu0 %v3337
        %3392 = vmatpush.xpose.msra.mxu0 %v3334
        %3393 = vmatpush.xpose.msra.mxu0 %v3331
        %3394 = vmatpush.xpose.msra.mxu0 %v3328
        %3395 = vmatpush.xpose.msra.mxu0 %v3325
        %3396 = vmatpush.xpose.msra.mxu0 %v3322
        %3397 = vmatpush.xpose.msra.mxu0 %v3319
        %3398 = vmatpush.xpose.msra.mxu0 %v3316
        %3399 = vmatpush.xpose.msra.mxu0 %v3313
        %3400 = vmatpush.xpose.msra.mxu0 %v3310
        %3401 = vmatpush.xpose.msra.mxu0 %v3307
        %3402 = vmatpush.xpose.msra.mxu0 %v3304
        %3403 = vmatpush.xpose.msra.mxu0 %v3301
        %3404 = vmatpush.xpose.msra.mxu0 %v3298
        %3405 = vmatpush.xpose.msra.mxu0 %v3295
        %3406 = vmatmul.f32.gmra.mxu0 %v3292
        %v3407 = vpop.f32.mrf.mxu0
        %v3408 = vadd.f32 0.0, %v3407
        %3409 = vdwg.mxu0
        %3410 = vmatpush.xpose.msra.mxu0 %v3388
        %3411 = vmatpush.xpose.msra.mxu0 %v3385
        %3412 = vmatpush.xpose.msra.mxu0 %v3382
        %3413 = vmatpush.xpose.msra.mxu0 %v3379
        %3414 = vmatpush.xpose.msra.mxu0 %v3376
        %3415 = vmatpush.xpose.msra.mxu0 %v3373
        %3416 = vmatpush.xpose.msra.mxu0 %v3370
        %3417 = vmatpush.xpose.msra.mxu0 %v3367
        %3418 = vmatpush.xpose.msra.mxu0 %v3364
        %3419 = vmatpush.xpose.msra.mxu0 %v3361
        %3420 = vmatpush.xpose.msra.mxu0 %v3358
        %3421 = vmatpush.xpose.msra.mxu0 %v3355
        %3422 = vmatpush.xpose.msra.mxu0 %v3352
        %3423 = vmatpush.xpose.msra.mxu0 %v3349
        %3424 = vmatpush.xpose.msra.mxu0 %v3346
        %3425 = vmatpush.xpose.msra.mxu0 %v3343
        %3426 = vmatmul.f32.gmra.mxu0 %v3292
        %v3427 = vpop.f32.mrf.mxu0
        %v3428 = vadd.f32 0.0, %v3427
        %3429 = vdwg.mxu0
        %v3430 = vadd.f32 %v3235, %v3408
        %v3431 = vadd.f32 %v3255, %v3428
        %v3432 = vld [vmem:[%s2879] sm:$0xff]
        %v3433 = vld [vmem:[%s2879 + $0x8] sm:$0xff]
        %v3434 = vld [vmem:[%s2879 + $0x18] sm:$0xff]
        %v3435 = vld [vmem:[%s2879 + $0x20] sm:$0xff]
        %v3436 = vld [vmem:[%s2879 + $0x30] sm:$0xff]
        %v3437 = vld [vmem:[%s2879 + $0x38] sm:$0xff]
        %v3438 = vld [vmem:[%s2879 + $0x48] sm:$0xff]
        %v3439 = vld [vmem:[%s2879 + $0x50] sm:$0xff]
        %v3440 = vld [vmem:[%s2879 + $0x60] sm:$0xff]
        %v3441 = vld [vmem:[%s2879 + $0x68] sm:$0xff]
        %v3442 = vld [vmem:[%s2879 + $0x78] sm:$0xff]
        %v3443 = vld [vmem:[%s2879 + $0x80] sm:$0xff]
        %v3444 = vld [vmem:[%s2879 + $0x90] sm:$0xff]
        %v3445 = vld [vmem:[%s2879 + $0x98] sm:$0xff]
        %v3446 = vld [vmem:[%s2879 + $0xa8] sm:$0xff]
        %v3447 = vld [vmem:[%s2879 + $0xb0] sm:$0xff]
        %v3448 = vld [vmem:[%s2879 + $0xc0] sm:$0xff]
        %v3449 = vld [vmem:[%s2879 + $0xc8] sm:$0xff]
        %v3450 = vld [vmem:[%s2879 + $0xd8] sm:$0xff]
        %v3451 = vld [vmem:[%s2879 + $0xe0] sm:$0xff]
        %v3452 = vld [vmem:[%s2879 + $0xf0] sm:$0xff]
        %v3453 = vld [vmem:[%s2879 + $0xf8] sm:$0xff]
        %v3454 = vld [vmem:[%s2879 + $0x108] sm:$0xff]
        %v3455 = vld [vmem:[%s2879 + $0x110] sm:$0xff]
        %v3456 = vld [vmem:[%s2879 + $0x120] sm:$0xff]
        %v3457 = vld [vmem:[%s2879 + $0x128] sm:$0xff]
        %v3458 = vld [vmem:[%s2879 + $0x138] sm:$0xff]
        %v3459 = vld [vmem:[%s2879 + $0x140] sm:$0xff]
        %v3460 = vld [vmem:[%s2879 + $0x150] sm:$0xff]
        %v3461 = vld [vmem:[%s2879 + $0x158] sm:$0xff]
        %v3462 = vld [vmem:[%s2879 + $0x168] sm:$0xff]
        %v3463 = vld [vmem:[%s2879 + $0x170] sm:$0xff]
        %s3464 = scalar_lea.vmem %s3, 12
        %v3465 = vld [vmem:[%s3464] sm:$0xf]
        %v3467 = vsel %vm2823, %v3465, 0
        %v3470 = vsel %vm2823, %v3432, 0
        %v3473 = vsel %vm2823, %v3433, 0
        %v3476 = vsel %vm2823, %v3434, 0
        %v3479 = vsel %vm2823, %v3435, 0
        %v3482 = vsel %vm2823, %v3436, 0
        %v3485 = vsel %vm2823, %v3437, 0
        %v3488 = vsel %vm2823, %v3438, 0
        %v3491 = vsel %vm2823, %v3439, 0
        %v3494 = vsel %vm2823, %v3440, 0
        %v3497 = vsel %vm2823, %v3441, 0
        %v3500 = vsel %vm2823, %v3442, 0
        %v3503 = vsel %vm2823, %v3443, 0
        %v3506 = vsel %vm2823, %v3444, 0
        %v3509 = vsel %vm2823, %v3445, 0
        %v3512 = vsel %vm2823, %v3446, 0
        %v3515 = vsel %vm2823, %v3447, 0
        %v3518 = vsel %vm2823, %v3448, 0
        %v3521 = vsel %vm2823, %v3449, 0
        %v3524 = vsel %vm2823, %v3450, 0
        %v3527 = vsel %vm2823, %v3451, 0
        %v3530 = vsel %vm2823, %v3452, 0
        %v3533 = vsel %vm2823, %v3453, 0
        %v3536 = vsel %vm2823, %v3454, 0
        %v3539 = vsel %vm2823, %v3455, 0
        %v3542 = vsel %vm2823, %v3456, 0
        %v3545 = vsel %vm2823, %v3457, 0
        %v3548 = vsel %vm2823, %v3458, 0
        %v3551 = vsel %vm2823, %v3459, 0
        %v3554 = vsel %vm2823, %v3460, 0
        %v3557 = vsel %vm2823, %v3461, 0
        %v3560 = vsel %vm2823, %v3462, 0
        %v3563 = vsel %vm2823, %v3463, 0
        %3565 = vmatpush.xpose.msra.mxu0 %v3515
        %3566 = vmatpush.xpose.msra.mxu0 %v3512
        %3567 = vmatpush.xpose.msra.mxu0 %v3509
        %3568 = vmatpush.xpose.msra.mxu0 %v3506
        %3569 = vmatpush.xpose.msra.mxu0 %v3503
        %3570 = vmatpush.xpose.msra.mxu0 %v3500
        %3571 = vmatpush.xpose.msra.mxu0 %v3497
        %3572 = vmatpush.xpose.msra.mxu0 %v3494
        %3573 = vmatpush.xpose.msra.mxu0 %v3491
        %3574 = vmatpush.xpose.msra.mxu0 %v3488
        %3575 = vmatpush.xpose.msra.mxu0 %v3485
        %3576 = vmatpush.xpose.msra.mxu0 %v3482
        %3577 = vmatpush.xpose.msra.mxu0 %v3479
        %3578 = vmatpush.xpose.msra.mxu0 %v3476
        %3579 = vmatpush.xpose.msra.mxu0 %v3473
        %3580 = vmatpush.xpose.msra.mxu0 %v3470
        %3581 = vmatmul.f32.gmra.mxu0 %v3467
        %v3582 = vpop.f32.mrf.mxu0
        %v3583 = vadd.f32 0.0, %v3582
        %3584 = vdwg.mxu0
        %3585 = vmatpush.xpose.msra.mxu0 %v3563
        %3586 = vmatpush.xpose.msra.mxu0 %v3560
        %3587 = vmatpush.xpose.msra.mxu0 %v3557
        %3588 = vmatpush.xpose.msra.mxu0 %v3554
        %3589 = vmatpush.xpose.msra.mxu0 %v3551
        %3590 = vmatpush.xpose.msra.mxu0 %v3548
        %3591 = vmatpush.xpose.msra.mxu0 %v3545
        %3592 = vmatpush.xpose.msra.mxu0 %v3542
        %3593 = vmatpush.xpose.msra.mxu0 %v3539
        %3594 = vmatpush.xpose.msra.mxu0 %v3536
        %3595 = vmatpush.xpose.msra.mxu0 %v3533
        %3596 = vmatpush.xpose.msra.mxu0 %v3530
        %3597 = vmatpush.xpose.msra.mxu0 %v3527
        %3598 = vmatpush.xpose.msra.mxu0 %v3524
        %3599 = vmatpush.xpose.msra.mxu0 %v3521
        %3600 = vmatpush.xpose.msra.mxu0 %v3518
        %3601 = vmatmul.f32.gmra.mxu0 %v3467
        %v3602 = vpop.f32.mrf.mxu0
        %v3603 = vadd.f32 0.0, %v3602
        %3604 = vdwg.mxu0
        %v3605 = vadd.f32 %v3430, %v3583
        %v3606 = vadd.f32 %v3431, %v3603
        %v3607 = vld [vmem:[%s2879 + $0x1] sm:$0xff]
        %v3608 = vld [vmem:[%s2879 + $0x9] sm:$0xff]
        %v3609 = vld [vmem:[%s2879 + $0x19] sm:$0xff]
        %v3610 = vld [vmem:[%s2879 + $0x21] sm:$0xff]
        %v3611 = vld [vmem:[%s2879 + $0x31] sm:$0xff]
        %v3612 = vld [vmem:[%s2879 + $0x39] sm:$0xff]
        %v3613 = vld [vmem:[%s2879 + $0x49] sm:$0xff]
        %v3614 = vld [vmem:[%s2879 + $0x51] sm:$0xff]
        %v3615 = vld [vmem:[%s2879 + $0x61] sm:$0xff]
        %v3616 = vld [vmem:[%s2879 + $0x69] sm:$0xff]
        %v3617 = vld [vmem:[%s2879 + $0x79] sm:$0xff]
        %v3618 = vld [vmem:[%s2879 + $0x81] sm:$0xff]
        %v3619 = vld [vmem:[%s2879 + $0x91] sm:$0xff]
        %v3620 = vld [vmem:[%s2879 + $0x99] sm:$0xff]
        %v3621 = vld [vmem:[%s2879 + $0xa9] sm:$0xff]
        %v3622 = vld [vmem:[%s2879 + $0xb1] sm:$0xff]
        %v3623 = vld [vmem:[%s2879 + $0xc1] sm:$0xff]
        %v3624 = vld [vmem:[%s2879 + $0xc9] sm:$0xff]
        %v3625 = vld [vmem:[%s2879 + $0xd9] sm:$0xff]
        %v3626 = vld [vmem:[%s2879 + $0xe1] sm:$0xff]
        %v3627 = vld [vmem:[%s2879 + $0xf1] sm:$0xff]
        %v3628 = vld [vmem:[%s2879 + $0xf9] sm:$0xff]
        %v3629 = vld [vmem:[%s2879 + $0x109] sm:$0xff]
        %v3630 = vld [vmem:[%s2879 + $0x111] sm:$0xff]
        %v3631 = vld [vmem:[%s2879 + $0x121] sm:$0xff]
        %v3632 = vld [vmem:[%s2879 + $0x129] sm:$0xff]
        %v3633 = vld [vmem:[%s2879 + $0x139] sm:$0xff]
        %v3634 = vld [vmem:[%s2879 + $0x141] sm:$0xff]
        %v3635 = vld [vmem:[%s2879 + $0x151] sm:$0xff]
        %v3636 = vld [vmem:[%s2879 + $0x159] sm:$0xff]
        %v3637 = vld [vmem:[%s2879 + $0x169] sm:$0xff]
        %v3638 = vld [vmem:[%s2879 + $0x171] sm:$0xff]
        %s3639 = scalar_lea.vmem %s3, 16
        %v3640 = vld [vmem:[%s3639] sm:$0xf]
        %v3642 = vsel %vm2823, %v3640, 0
        %v3645 = vsel %vm2823, %v3607, 0
        %v3648 = vsel %vm2823, %v3608, 0
        %v3651 = vsel %vm2823, %v3609, 0
        %v3654 = vsel %vm2823, %v3610, 0
        %v3657 = vsel %vm2823, %v3611, 0
        %v3660 = vsel %vm2823, %v3612, 0
        %v3663 = vsel %vm2823, %v3613, 0
        %v3666 = vsel %vm2823, %v3614, 0
        %v3669 = vsel %vm2823, %v3615, 0
        %v3672 = vsel %vm2823, %v3616, 0
        %v3675 = vsel %vm2823, %v3617, 0
        %v3678 = vsel %vm2823, %v3618, 0
        %v3681 = vsel %vm2823, %v3619, 0
        %v3684 = vsel %vm2823, %v3620, 0
        %v3687 = vsel %vm2823, %v3621, 0
        %v3690 = vsel %vm2823, %v3622, 0
        %v3693 = vsel %vm2823, %v3623, 0
        %v3696 = vsel %vm2823, %v3624, 0
        %v3699 = vsel %vm2823, %v3625, 0
        %v3702 = vsel %vm2823, %v3626, 0
        %v3705 = vsel %vm2823, %v3627, 0
        %v3708 = vsel %vm2823, %v3628, 0
        %v3711 = vsel %vm2823, %v3629, 0
        %v3714 = vsel %vm2823, %v3630, 0
        %v3717 = vsel %vm2823, %v3631, 0
        %v3720 = vsel %vm2823, %v3632, 0
        %v3723 = vsel %vm2823, %v3633, 0
        %v3726 = vsel %vm2823, %v3634, 0
        %v3729 = vsel %vm2823, %v3635, 0
        %v3732 = vsel %vm2823, %v3636, 0
        %v3735 = vsel %vm2823, %v3637, 0
        %v3738 = vsel %vm2823, %v3638, 0
        %3740 = vmatpush.xpose.msra.mxu0 %v3690
        %3741 = vmatpush.xpose.msra.mxu0 %v3687
        %3742 = vmatpush.xpose.msra.mxu0 %v3684
        %3743 = vmatpush.xpose.msra.mxu0 %v3681
        %3744 = vmatpush.xpose.msra.mxu0 %v3678
        %3745 = vmatpush.xpose.msra.mxu0 %v3675
        %3746 = vmatpush.xpose.msra.mxu0 %v3672
        %3747 = vmatpush.xpose.msra.mxu0 %v3669
        %3748 = vmatpush.xpose.msra.mxu0 %v3666
        %3749 = vmatpush.xpose.msra.mxu0 %v3663
        %3750 = vmatpush.xpose.msra.mxu0 %v3660
        %3751 = vmatpush.xpose.msra.mxu0 %v3657
        %3752 = vmatpush.xpose.msra.mxu0 %v3654
        %3753 = vmatpush.xpose.msra.mxu0 %v3651
        %3754 = vmatpush.xpose.msra.mxu0 %v3648
        %3755 = vmatpush.xpose.msra.mxu0 %v3645
        %3756 = vmatmul.f32.gmra.mxu0 %v3642
        %v3757 = vpop.f32.mrf.mxu0
        %v3758 = vadd.f32 0.0, %v3757
        %3759 = vdwg.mxu0
        %3760 = vmatpush.xpose.msra.mxu0 %v3738
        %3761 = vmatpush.xpose.msra.mxu0 %v3735
        %3762 = vmatpush.xpose.msra.mxu0 %v3732
        %3763 = vmatpush.xpose.msra.mxu0 %v3729
        %3764 = vmatpush.xpose.msra.mxu0 %v3726
        %3765 = vmatpush.xpose.msra.mxu0 %v3723
        %3766 = vmatpush.xpose.msra.mxu0 %v3720
        %3767 = vmatpush.xpose.msra.mxu0 %v3717
        %3768 = vmatpush.xpose.msra.mxu0 %v3714
        %3769 = vmatpush.xpose.msra.mxu0 %v3711
        %3770 = vmatpush.xpose.msra.mxu0 %v3708
        %3771 = vmatpush.xpose.msra.mxu0 %v3705
        %3772 = vmatpush.xpose.msra.mxu0 %v3702
        %3773 = vmatpush.xpose.msra.mxu0 %v3699
        %3774 = vmatpush.xpose.msra.mxu0 %v3696
        %3775 = vmatpush.xpose.msra.mxu0 %v3693
        %3776 = vmatmul.f32.gmra.mxu0 %v3642
        %v3777 = vpop.f32.mrf.mxu0
        %v3778 = vadd.f32 0.0, %v3777
        %3779 = vdwg.mxu0
        %v3780 = vadd.f32 %v3605, %v3758
        %v3781 = vadd.f32 %v3606, %v3778
        %v3782 = vld [vmem:[%s2879 + $0x2] sm:$0xff]
        %v3783 = vld [vmem:[%s2879 + $0xa] sm:$0xff]
        %v3784 = vld [vmem:[%s2879 + $0x1a] sm:$0xff]
        %v3785 = vld [vmem:[%s2879 + $0x22] sm:$0xff]
        %v3786 = vld [vmem:[%s2879 + $0x32] sm:$0xff]
        %v3787 = vld [vmem:[%s2879 + $0x3a] sm:$0xff]
        %v3788 = vld [vmem:[%s2879 + $0x4a] sm:$0xff]
        %v3789 = vld [vmem:[%s2879 + $0x52] sm:$0xff]
        %v3790 = vld [vmem:[%s2879 + $0x62] sm:$0xff]
        %v3791 = vld [vmem:[%s2879 + $0x6a] sm:$0xff]
        %v3792 = vld [vmem:[%s2879 + $0x7a] sm:$0xff]
        %v3793 = vld [vmem:[%s2879 + $0x82] sm:$0xff]
        %v3794 = vld [vmem:[%s2879 + $0x92] sm:$0xff]
        %v3795 = vld [vmem:[%s2879 + $0x9a] sm:$0xff]
        %v3796 = vld [vmem:[%s2879 + $0xaa] sm:$0xff]
        %v3797 = vld [vmem:[%s2879 + $0xb2] sm:$0xff]
        %v3798 = vld [vmem:[%s2879 + $0xc2] sm:$0xff]
        %v3799 = vld [vmem:[%s2879 + $0xca] sm:$0xff]
        %v3800 = vld [vmem:[%s2879 + $0xda] sm:$0xff]
        %v3801 = vld [vmem:[%s2879 + $0xe2] sm:$0xff]
        %v3802 = vld [vmem:[%s2879 + $0xf2] sm:$0xff]
        %v3803 = vld [vmem:[%s2879 + $0xfa] sm:$0xff]
        %v3804 = vld [vmem:[%s2879 + $0x10a] sm:$0xff]
        %v3805 = vld [vmem:[%s2879 + $0x112] sm:$0xff]
        %v3806 = vld [vmem:[%s2879 + $0x122] sm:$0xff]
        %v3807 = vld [vmem:[%s2879 + $0x12a] sm:$0xff]
        %v3808 = vld [vmem:[%s2879 + $0x13a] sm:$0xff]
        %v3809 = vld [vmem:[%s2879 + $0x142] sm:$0xff]
        %v3810 = vld [vmem:[%s2879 + $0x152] sm:$0xff]
        %v3811 = vld [vmem:[%s2879 + $0x15a] sm:$0xff]
        %v3812 = vld [vmem:[%s2879 + $0x16a] sm:$0xff]
        %v3813 = vld [vmem:[%s2879 + $0x172] sm:$0xff]
        %s3814 = scalar_lea.vmem %s3, 20
        %v3815 = vld [vmem:[%s3814] sm:$0xf]
        %v3817 = vsel %vm2823, %v3815, 0
        %v3820 = vsel %vm2823, %v3782, 0
        %v3823 = vsel %vm2823, %v3783, 0
        %v3826 = vsel %vm2823, %v3784, 0
        %v3829 = vsel %vm2823, %v3785, 0
        %v3832 = vsel %vm2823, %v3786, 0
        %v3835 = vsel %vm2823, %v3787, 0
        %v3838 = vsel %vm2823, %v3788, 0
        %v3841 = vsel %vm2823, %v3789, 0
        %v3844 = vsel %vm2823, %v3790, 0
        %v3847 = vsel %vm2823, %v3791, 0
        %v3850 = vsel %vm2823, %v3792, 0
        %v3853 = vsel %vm2823, %v3793, 0
        %v3856 = vsel %vm2823, %v3794, 0
        %v3859 = vsel %vm2823, %v3795, 0
        %v3862 = vsel %vm2823, %v3796, 0
        %v3865 = vsel %vm2823, %v3797, 0
        %v3868 = vsel %vm2823, %v3798, 0
        %v3871 = vsel %vm2823, %v3799, 0
        %v3874 = vsel %vm2823, %v3800, 0
        %v3877 = vsel %vm2823, %v3801, 0
        %v3880 = vsel %vm2823, %v3802, 0
        %v3883 = vsel %vm2823, %v3803, 0
        %v3886 = vsel %vm2823, %v3804, 0
        %v3889 = vsel %vm2823, %v3805, 0
        %v3892 = vsel %vm2823, %v3806, 0
        %v3895 = vsel %vm2823, %v3807, 0
        %v3898 = vsel %vm2823, %v3808, 0
        %v3901 = vsel %vm2823, %v3809, 0
        %v3904 = vsel %vm2823, %v3810, 0
        %v3907 = vsel %vm2823, %v3811, 0
        %v3910 = vsel %vm2823, %v3812, 0
        %v3913 = vsel %vm2823, %v3813, 0
        %3915 = vmatpush.xpose.msra.mxu0 %v3865
        %3916 = vmatpush.xpose.msra.mxu0 %v3862
        %3917 = vmatpush.xpose.msra.mxu0 %v3859
        %3918 = vmatpush.xpose.msra.mxu0 %v3856
        %3919 = vmatpush.xpose.msra.mxu0 %v3853
        %3920 = vmatpush.xpose.msra.mxu0 %v3850
        %3921 = vmatpush.xpose.msra.mxu0 %v3847
        %3922 = vmatpush.xpose.msra.mxu0 %v3844
        %3923 = vmatpush.xpose.msra.mxu0 %v3841
        %3924 = vmatpush.xpose.msra.mxu0 %v3838
        %3925 = vmatpush.xpose.msra.mxu0 %v3835
        %3926 = vmatpush.xpose.msra.mxu0 %v3832
        %3927 = vmatpush.xpose.msra.mxu0 %v3829
        %3928 = vmatpush.xpose.msra.mxu0 %v3826
        %3929 = vmatpush.xpose.msra.mxu0 %v3823
        %3930 = vmatpush.xpose.msra.mxu0 %v3820
        %3931 = vmatmul.f32.gmra.mxu0 %v3817
        %v3932 = vpop.f32.mrf.mxu0
        %v3933 = vadd.f32 0.0, %v3932
        %3934 = vdwg.mxu0
        %3935 = vmatpush.xpose.msra.mxu0 %v3913
        %3936 = vmatpush.xpose.msra.mxu0 %v3910
        %3937 = vmatpush.xpose.msra.mxu0 %v3907
        %3938 = vmatpush.xpose.msra.mxu0 %v3904
        %3939 = vmatpush.xpose.msra.mxu0 %v3901
        %3940 = vmatpush.xpose.msra.mxu0 %v3898
        %3941 = vmatpush.xpose.msra.mxu0 %v3895
        %3942 = vmatpush.xpose.msra.mxu0 %v3892
        %3943 = vmatpush.xpose.msra.mxu0 %v3889
        %3944 = vmatpush.xpose.msra.mxu0 %v3886
        %3945 = vmatpush.xpose.msra.mxu0 %v3883
        %3946 = vmatpush.xpose.msra.mxu0 %v3880
        %3947 = vmatpush.xpose.msra.mxu0 %v3877
        %3948 = vmatpush.xpose.msra.mxu0 %v3874
        %3949 = vmatpush.xpose.msra.mxu0 %v3871
        %3950 = vmatpush.xpose.msra.mxu0 %v3868
        %3951 = vmatmul.f32.gmra.mxu0 %v3817
        %v3952 = vpop.f32.mrf.mxu0
        %v3953 = vadd.f32 0.0, %v3952
        %3954 = vdwg.mxu0
        %v3955 = vadd.f32 %v3780, %v3933
        %v3956 = vadd.f32 %v3781, %v3953
        %s3957 = scalar_lea.vmem [#allocation3], 48
        %v3958 = vld [vmem:[%s3957] sm:$0xff]
        %v3959 = vld [vmem:[%s3957 + $0x8] sm:$0xff]
        %v3960 = vld [vmem:[%s3957 + $0x18] sm:$0xff]
        %v3961 = vld [vmem:[%s3957 + $0x20] sm:$0xff]
        %v3962 = vld [vmem:[%s3957 + $0x30] sm:$0xff]
        %v3963 = vld [vmem:[%s3957 + $0x38] sm:$0xff]
        %v3964 = vld [vmem:[%s3957 + $0x48] sm:$0xff]
        %v3965 = vld [vmem:[%s3957 + $0x50] sm:$0xff]
        %v3966 = vld [vmem:[%s3957 + $0x60] sm:$0xff]
        %v3967 = vld [vmem:[%s3957 + $0x68] sm:$0xff]
        %v3968 = vld [vmem:[%s3957 + $0x78] sm:$0xff]
        %v3969 = vld [vmem:[%s3957 + $0x80] sm:$0xff]
        %v3970 = vld [vmem:[%s3957 + $0x90] sm:$0xff]
        %v3971 = vld [vmem:[%s3957 + $0x98] sm:$0xff]
        %v3972 = vld [vmem:[%s3957 + $0xa8] sm:$0xff]
        %v3973 = vld [vmem:[%s3957 + $0xb0] sm:$0xff]
        %v3974 = vld [vmem:[%s3957 + $0xc0] sm:$0xff]
        %v3975 = vld [vmem:[%s3957 + $0xc8] sm:$0xff]
        %v3976 = vld [vmem:[%s3957 + $0xd8] sm:$0xff]
        %v3977 = vld [vmem:[%s3957 + $0xe0] sm:$0xff]
        %v3978 = vld [vmem:[%s3957 + $0xf0] sm:$0xff]
        %v3979 = vld [vmem:[%s3957 + $0xf8] sm:$0xff]
        %v3980 = vld [vmem:[%s3957 + $0x108] sm:$0xff]
        %v3981 = vld [vmem:[%s3957 + $0x110] sm:$0xff]
        %v3982 = vld [vmem:[%s3957 + $0x120] sm:$0xff]
        %v3983 = vld [vmem:[%s3957 + $0x128] sm:$0xff]
        %v3984 = vld [vmem:[%s3957 + $0x138] sm:$0xff]
        %v3985 = vld [vmem:[%s3957 + $0x140] sm:$0xff]
        %v3986 = vld [vmem:[%s3957 + $0x150] sm:$0xff]
        %v3987 = vld [vmem:[%s3957 + $0x158] sm:$0xff]
        %v3988 = vld [vmem:[%s3957 + $0x168] sm:$0xff]
        %v3989 = vld [vmem:[%s3957 + $0x170] sm:$0xff]
        %s3990 = scalar_lea.vmem %s3, 24
        %v3991 = vld [vmem:[%s3990] sm:$0xf]
        %v3993 = vsel %vm2823, %v3991, 0
        %v3996 = vsel %vm2823, %v3958, 0
        %v3999 = vsel %vm2823, %v3959, 0
        %v4002 = vsel %vm2823, %v3960, 0
        %v4005 = vsel %vm2823, %v3961, 0
        %v4008 = vsel %vm2823, %v3962, 0
        %v4011 = vsel %vm2823, %v3963, 0
        %v4014 = vsel %vm2823, %v3964, 0
        %v4017 = vsel %vm2823, %v3965, 0
        %v4020 = vsel %vm2823, %v3966, 0
        %v4023 = vsel %vm2823, %v3967, 0
        %v4026 = vsel %vm2823, %v3968, 0
        %v4029 = vsel %vm2823, %v3969, 0
        %v4032 = vsel %vm2823, %v3970, 0
        %v4035 = vsel %vm2823, %v3971, 0
        %v4038 = vsel %vm2823, %v3972, 0
        %v4041 = vsel %vm2823, %v3973, 0
        %v4044 = vsel %vm2823, %v3974, 0
        %v4047 = vsel %vm2823, %v3975, 0
        %v4050 = vsel %vm2823, %v3976, 0
        %v4053 = vsel %vm2823, %v3977, 0
        %v4056 = vsel %vm2823, %v3978, 0
        %v4059 = vsel %vm2823, %v3979, 0
        %v4062 = vsel %vm2823, %v3980, 0
        %v4065 = vsel %vm2823, %v3981, 0
        %v4068 = vsel %vm2823, %v3982, 0
        %v4071 = vsel %vm2823, %v3983, 0
        %v4074 = vsel %vm2823, %v3984, 0
        %v4077 = vsel %vm2823, %v3985, 0
        %v4080 = vsel %vm2823, %v3986, 0
        %v4083 = vsel %vm2823, %v3987, 0
        %v4086 = vsel %vm2823, %v3988, 0
        %v4089 = vsel %vm2823, %v3989, 0
        %4091 = vmatpush.xpose.msra.mxu0 %v4041
        %4092 = vmatpush.xpose.msra.mxu0 %v4038
        %4093 = vmatpush.xpose.msra.mxu0 %v4035
        %4094 = vmatpush.xpose.msra.mxu0 %v4032
        %4095 = vmatpush.xpose.msra.mxu0 %v4029
        %4096 = vmatpush.xpose.msra.mxu0 %v4026
        %4097 = vmatpush.xpose.msra.mxu0 %v4023
        %4098 = vmatpush.xpose.msra.mxu0 %v4020
        %4099 = vmatpush.xpose.msra.mxu0 %v4017
        %4100 = vmatpush.xpose.msra.mxu0 %v4014
        %4101 = vmatpush.xpose.msra.mxu0 %v4011
        %4102 = vmatpush.xpose.msra.mxu0 %v4008
        %4103 = vmatpush.xpose.msra.mxu0 %v4005
        %4104 = vmatpush.xpose.msra.mxu0 %v4002
        %4105 = vmatpush.xpose.msra.mxu0 %v3999
        %4106 = vmatpush.xpose.msra.mxu0 %v3996
        %4107 = vmatmul.f32.gmra.mxu0 %v3993
        %v4108 = vpop.f32.mrf.mxu0
        %v4109 = vadd.f32 0.0, %v4108
        %4110 = vdwg.mxu0
        %4111 = vmatpush.xpose.msra.mxu0 %v4089
        %4112 = vmatpush.xpose.msra.mxu0 %v4086
        %4113 = vmatpush.xpose.msra.mxu0 %v4083
        %4114 = vmatpush.xpose.msra.mxu0 %v4080
        %4115 = vmatpush.xpose.msra.mxu0 %v4077
        %4116 = vmatpush.xpose.msra.mxu0 %v4074
        %4117 = vmatpush.xpose.msra.mxu0 %v4071
        %4118 = vmatpush.xpose.msra.mxu0 %v4068
        %4119 = vmatpush.xpose.msra.mxu0 %v4065
        %4120 = vmatpush.xpose.msra.mxu0 %v4062
        %4121 = vmatpush.xpose.msra.mxu0 %v4059
        %4122 = vmatpush.xpose.msra.mxu0 %v4056
        %4123 = vmatpush.xpose.msra.mxu0 %v4053
        %4124 = vmatpush.xpose.msra.mxu0 %v4050
        %4125 = vmatpush.xpose.msra.mxu0 %v4047
        %4126 = vmatpush.xpose.msra.mxu0 %v4044
        %4127 = vmatmul.f32.gmra.mxu0 %v3993
        %v4128 = vpop.f32.mrf.mxu0
        %v4129 = vadd.f32 0.0, %v4128
        %4130 = vdwg.mxu0
        %v4131 = vadd.f32 %v3955, %v4109
        %v4132 = vadd.f32 %v3956, %v4129
        %v4133 = vld [vmem:[%s3957 + $0x1] sm:$0xff]
        %v4134 = vld [vmem:[%s3957 + $0x9] sm:$0xff]
        %v4135 = vld [vmem:[%s3957 + $0x19] sm:$0xff]
        %v4136 = vld [vmem:[%s3957 + $0x21] sm:$0xff]
        %v4137 = vld [vmem:[%s3957 + $0x31] sm:$0xff]
        %v4138 = vld [vmem:[%s3957 + $0x39] sm:$0xff]
        %v4139 = vld [vmem:[%s3957 + $0x49] sm:$0xff]
        %v4140 = vld [vmem:[%s3957 + $0x51] sm:$0xff]
        %v4141 = vld [vmem:[%s3957 + $0x61] sm:$0xff]
        %v4142 = vld [vmem:[%s3957 + $0x69] sm:$0xff]
        %v4143 = vld [vmem:[%s3957 + $0x79] sm:$0xff]
        %v4144 = vld [vmem:[%s3957 + $0x81] sm:$0xff]
        %v4145 = vld [vmem:[%s3957 + $0x91] sm:$0xff]
        %v4146 = vld [vmem:[%s3957 + $0x99] sm:$0xff]
        %v4147 = vld [vmem:[%s3957 + $0xa9] sm:$0xff]
        %v4148 = vld [vmem:[%s3957 + $0xb1] sm:$0xff]
        %v4149 = vld [vmem:[%s3957 + $0xc1] sm:$0xff]
        %v4150 = vld [vmem:[%s3957 + $0xc9] sm:$0xff]
        %v4151 = vld [vmem:[%s3957 + $0xd9] sm:$0xff]
        %v4152 = vld [vmem:[%s3957 + $0xe1] sm:$0xff]
        %v4153 = vld [vmem:[%s3957 + $0xf1] sm:$0xff]
        %v4154 = vld [vmem:[%s3957 + $0xf9] sm:$0xff]
        %v4155 = vld [vmem:[%s3957 + $0x109] sm:$0xff]
        %v4156 = vld [vmem:[%s3957 + $0x111] sm:$0xff]
        %v4157 = vld [vmem:[%s3957 + $0x121] sm:$0xff]
        %v4158 = vld [vmem:[%s3957 + $0x129] sm:$0xff]
        %v4159 = vld [vmem:[%s3957 + $0x139] sm:$0xff]
        %v4160 = vld [vmem:[%s3957 + $0x141] sm:$0xff]
        %v4161 = vld [vmem:[%s3957 + $0x151] sm:$0xff]
        %v4162 = vld [vmem:[%s3957 + $0x159] sm:$0xff]
        %v4163 = vld [vmem:[%s3957 + $0x169] sm:$0xff]
        %v4164 = vld [vmem:[%s3957 + $0x171] sm:$0xff]
        %s4165 = scalar_lea.vmem %s3, 28
        %v4166 = vld [vmem:[%s4165] sm:$0xf]
        %v4168 = vsel %vm2823, %v4166, 0
        %v4171 = vsel %vm2823, %v4133, 0
        %v4174 = vsel %vm2823, %v4134, 0
        %v4177 = vsel %vm2823, %v4135, 0
        %v4180 = vsel %vm2823, %v4136, 0
        %v4183 = vsel %vm2823, %v4137, 0
        %v4186 = vsel %vm2823, %v4138, 0
        %v4189 = vsel %vm2823, %v4139, 0
        %v4192 = vsel %vm2823, %v4140, 0
        %v4195 = vsel %vm2823, %v4141, 0
        %v4198 = vsel %vm2823, %v4142, 0
        %v4201 = vsel %vm2823, %v4143, 0
        %v4204 = vsel %vm2823, %v4144, 0
        %v4207 = vsel %vm2823, %v4145, 0
        %v4210 = vsel %vm2823, %v4146, 0
        %v4213 = vsel %vm2823, %v4147, 0
        %v4216 = vsel %vm2823, %v4148, 0
        %v4219 = vsel %vm2823, %v4149, 0
        %v4222 = vsel %vm2823, %v4150, 0
        %v4225 = vsel %vm2823, %v4151, 0
        %v4228 = vsel %vm2823, %v4152, 0
        %v4231 = vsel %vm2823, %v4153, 0
        %v4234 = vsel %vm2823, %v4154, 0
        %v4237 = vsel %vm2823, %v4155, 0
        %v4240 = vsel %vm2823, %v4156, 0
        %v4243 = vsel %vm2823, %v4157, 0
        %v4246 = vsel %vm2823, %v4158, 0
        %v4249 = vsel %vm2823, %v4159, 0
        %v4252 = vsel %vm2823, %v4160, 0
        %v4255 = vsel %vm2823, %v4161, 0
        %v4258 = vsel %vm2823, %v4162, 0
        %v4261 = vsel %vm2823, %v4163, 0
        %v4264 = vsel %vm2823, %v4164, 0
        %4266 = vmatpush.xpose.msra.mxu0 %v4216
        %4267 = vmatpush.xpose.msra.mxu0 %v4213
        %4268 = vmatpush.xpose.msra.mxu0 %v4210
        %4269 = vmatpush.xpose.msra.mxu0 %v4207
        %4270 = vmatpush.xpose.msra.mxu0 %v4204
        %4271 = vmatpush.xpose.msra.mxu0 %v4201
        %4272 = vmatpush.xpose.msra.mxu0 %v4198
        %4273 = vmatpush.xpose.msra.mxu0 %v4195
        %4274 = vmatpush.xpose.msra.mxu0 %v4192
        %4275 = vmatpush.xpose.msra.mxu0 %v4189
        %4276 = vmatpush.xpose.msra.mxu0 %v4186
        %4277 = vmatpush.xpose.msra.mxu0 %v4183
        %4278 = vmatpush.xpose.msra.mxu0 %v4180
        %4279 = vmatpush.xpose.msra.mxu0 %v4177
        %4280 = vmatpush.xpose.msra.mxu0 %v4174
        %4281 = vmatpush.xpose.msra.mxu0 %v4171
        %4282 = vmatmul.f32.gmra.mxu0 %v4168
        %v4283 = vpop.f32.mrf.mxu0
        %v4284 = vadd.f32 0.0, %v4283
        %4285 = vdwg.mxu0
        %4286 = vmatpush.xpose.msra.mxu0 %v4264
        %4287 = vmatpush.xpose.msra.mxu0 %v4261
        %4288 = vmatpush.xpose.msra.mxu0 %v4258
        %4289 = vmatpush.xpose.msra.mxu0 %v4255
        %4290 = vmatpush.xpose.msra.mxu0 %v4252
        %4291 = vmatpush.xpose.msra.mxu0 %v4249
        %4292 = vmatpush.xpose.msra.mxu0 %v4246
        %4293 = vmatpush.xpose.msra.mxu0 %v4243
        %4294 = vmatpush.xpose.msra.mxu0 %v4240
        %4295 = vmatpush.xpose.msra.mxu0 %v4237
        %4296 = vmatpush.xpose.msra.mxu0 %v4234
        %4297 = vmatpush.xpose.msra.mxu0 %v4231
        %4298 = vmatpush.xpose.msra.mxu0 %v4228
        %4299 = vmatpush.xpose.msra.mxu0 %v4225
        %4300 = vmatpush.xpose.msra.mxu0 %v4222
        %4301 = vmatpush.xpose.msra.mxu0 %v4219
        %4302 = vmatmul.f32.gmra.mxu0 %v4168
        %v4303 = vpop.f32.mrf.mxu0
        %v4304 = vadd.f32 0.0, %v4303
        %4305 = vdwg.mxu0
        %v4306 = vadd.f32 %v4131, %v4284
        %v4307 = vadd.f32 %v4132, %v4304
        %v4308 = vld [vmem:[%s3957 + $0x2] sm:$0xff]
        %v4309 = vld [vmem:[%s3957 + $0xa] sm:$0xff]
        %v4310 = vld [vmem:[%s3957 + $0x1a] sm:$0xff]
        %v4311 = vld [vmem:[%s3957 + $0x22] sm:$0xff]
        %v4312 = vld [vmem:[%s3957 + $0x32] sm:$0xff]
        %v4313 = vld [vmem:[%s3957 + $0x3a] sm:$0xff]
        %v4314 = vld [vmem:[%s3957 + $0x4a] sm:$0xff]
        %v4315 = vld [vmem:[%s3957 + $0x52] sm:$0xff]
        %v4316 = vld [vmem:[%s3957 + $0x62] sm:$0xff]
        %v4317 = vld [vmem:[%s3957 + $0x6a] sm:$0xff]
        %v4318 = vld [vmem:[%s3957 + $0x7a] sm:$0xff]
        %v4319 = vld [vmem:[%s3957 + $0x82] sm:$0xff]
        %v4320 = vld [vmem:[%s3957 + $0x92] sm:$0xff]
        %v4321 = vld [vmem:[%s3957 + $0x9a] sm:$0xff]
        %v4322 = vld [vmem:[%s3957 + $0xaa] sm:$0xff]
        %v4323 = vld [vmem:[%s3957 + $0xb2] sm:$0xff]
        %v4324 = vld [vmem:[%s3957 + $0xc2] sm:$0xff]
        %v4325 = vld [vmem:[%s3957 + $0xca] sm:$0xff]
        %v4326 = vld [vmem:[%s3957 + $0xda] sm:$0xff]
        %v4327 = vld [vmem:[%s3957 + $0xe2] sm:$0xff]
        %v4328 = vld [vmem:[%s3957 + $0xf2] sm:$0xff]
        %v4329 = vld [vmem:[%s3957 + $0xfa] sm:$0xff]
        %v4330 = vld [vmem:[%s3957 + $0x10a] sm:$0xff]
        %v4331 = vld [vmem:[%s3957 + $0x112] sm:$0xff]
        %v4332 = vld [vmem:[%s3957 + $0x122] sm:$0xff]
        %v4333 = vld [vmem:[%s3957 + $0x12a] sm:$0xff]
        %v4334 = vld [vmem:[%s3957 + $0x13a] sm:$0xff]
        %v4335 = vld [vmem:[%s3957 + $0x142] sm:$0xff]
        %v4336 = vld [vmem:[%s3957 + $0x152] sm:$0xff]
        %v4337 = vld [vmem:[%s3957 + $0x15a] sm:$0xff]
        %v4338 = vld [vmem:[%s3957 + $0x16a] sm:$0xff]
        %v4339 = vld [vmem:[%s3957 + $0x172] sm:$0xff]
        %s4340 = scalar_lea.vmem %s3, 32
        %v4341 = vld [vmem:[%s4340] sm:$0xf]
        %v4343 = vsel %vm2823, %v4341, 0
        %v4346 = vsel %vm2823, %v4308, 0
        %v4349 = vsel %vm2823, %v4309, 0
        %v4352 = vsel %vm2823, %v4310, 0
        %v4355 = vsel %vm2823, %v4311, 0
        %v4358 = vsel %vm2823, %v4312, 0
        %v4361 = vsel %vm2823, %v4313, 0
        %v4364 = vsel %vm2823, %v4314, 0
        %v4367 = vsel %vm2823, %v4315, 0
        %v4370 = vsel %vm2823, %v4316, 0
        %v4373 = vsel %vm2823, %v4317, 0
        %v4376 = vsel %vm2823, %v4318, 0
        %v4379 = vsel %vm2823, %v4319, 0
        %v4382 = vsel %vm2823, %v4320, 0
        %v4385 = vsel %vm2823, %v4321, 0
        %v4388 = vsel %vm2823, %v4322, 0
        %v4391 = vsel %vm2823, %v4323, 0
        %v4394 = vsel %vm2823, %v4324, 0
        %v4397 = vsel %vm2823, %v4325, 0
        %v4400 = vsel %vm2823, %v4326, 0
        %v4403 = vsel %vm2823, %v4327, 0
        %v4406 = vsel %vm2823, %v4328, 0
        %v4409 = vsel %vm2823, %v4329, 0
        %v4412 = vsel %vm2823, %v4330, 0
        %v4415 = vsel %vm2823, %v4331, 0
        %v4418 = vsel %vm2823, %v4332, 0
        %v4421 = vsel %vm2823, %v4333, 0
        %v4424 = vsel %vm2823, %v4334, 0
        %v4427 = vsel %vm2823, %v4335, 0
        %v4430 = vsel %vm2823, %v4336, 0
        %v4433 = vsel %vm2823, %v4337, 0
        %v4436 = vsel %vm2823, %v4338, 0
        %v4439 = vsel %vm2823, %v4339, 0
        %4441 = vmatpush.xpose.msra.mxu0 %v4391
        %4442 = vmatpush.xpose.msra.mxu0 %v4388
        %4443 = vmatpush.xpose.msra.mxu0 %v4385
        %4444 = vmatpush.xpose.msra.mxu0 %v4382
        %4445 = vmatpush.xpose.msra.mxu0 %v4379
        %4446 = vmatpush.xpose.msra.mxu0 %v4376
        %4447 = vmatpush.xpose.msra.mxu0 %v4373
        %4448 = vmatpush.xpose.msra.mxu0 %v4370
        %4449 = vmatpush.xpose.msra.mxu0 %v4367
        %4450 = vmatpush.xpose.msra.mxu0 %v4364
        %4451 = vmatpush.xpose.msra.mxu0 %v4361
        %4452 = vmatpush.xpose.msra.mxu0 %v4358
        %4453 = vmatpush.xpose.msra.mxu0 %v4355
        %4454 = vmatpush.xpose.msra.mxu0 %v4352
        %4455 = vmatpush.xpose.msra.mxu0 %v4349
        %4456 = vmatpush.xpose.msra.mxu0 %v4346
        %4457 = vmatmul.f32.gmra.mxu0 %v4343
        %v4458 = vpop.f32.mrf.mxu0
        %v4459 = vadd.f32 0.0, %v4458
        %4460 = vdwg.mxu0
        %4461 = vmatpush.xpose.msra.mxu0 %v4439
        %4462 = vmatpush.xpose.msra.mxu0 %v4436
        %4463 = vmatpush.xpose.msra.mxu0 %v4433
        %4464 = vmatpush.xpose.msra.mxu0 %v4430
        %4465 = vmatpush.xpose.msra.mxu0 %v4427
        %4466 = vmatpush.xpose.msra.mxu0 %v4424
        %4467 = vmatpush.xpose.msra.mxu0 %v4421
        %4468 = vmatpush.xpose.msra.mxu0 %v4418
        %4469 = vmatpush.xpose.msra.mxu0 %v4415
        %4470 = vmatpush.xpose.msra.mxu0 %v4412
        %4471 = vmatpush.xpose.msra.mxu0 %v4409
        %4472 = vmatpush.xpose.msra.mxu0 %v4406
        %4473 = vmatpush.xpose.msra.mxu0 %v4403
        %4474 = vmatpush.xpose.msra.mxu0 %v4400
        %4475 = vmatpush.xpose.msra.mxu0 %v4397
        %4476 = vmatpush.xpose.msra.mxu0 %v4394
        %4477 = vmatmul.f32.gmra.mxu0 %v4343
        %v4478 = vpop.f32.mrf.mxu0
        %v4479 = vadd.f32 0.0, %v4478
        %4480 = vdwg.mxu0
        %v4481 = vadd.f32 %v4306, %v4459
        %v4482 = vadd.f32 %v4307, %v4479
        %v4483 = vld [vmem:[%s4] sm:$0xf]
        %4485 = vset.pattern.permute.xlu0 0
        %4486 = vperm.xlu0 %4485, %v4483
        %v4487 = vpop.permute.xlu0 %4486
        %v4489 = vadd.f32 %v4481, %v4487
        %v4490 = vadd.f32 %v4482, %v4487
        %v4491 = vmax.f32 %v4489, 0.0
        %v4492 = vmax.f32 %v4490, 0.0
        %v4495 = vrot.slane %v4492, 4
        %vm4496 = vcmask 1043456
        %v4497 = vsel %vm4496, %v4491, %v4495
        %4499 = vst [vmem:[%s217] sm:$0xff] %v4497
        %s4500 = sand.u32 %s137, 1
        %s4501 = scalar_lea.sflag [#allocation5], %s4500
        %s4502 = sand.u32 %s137, 1
        %s4503 = smul.addr %s4502, 8
        %s4504 = scalar_lea.vmem [#allocation4], %s4503
        // Predicated region
        $region41: #{tpu_custom_call.1} parent=39 // pred_check
          %p4505 = pneg %p147
        $region42: #{tpu_custom_call.1} parent=39 // pred_check_branch
          %4507 = sbr.rel (%p4505) target = $region44
        $region43: #{tpu_custom_call.1} parent=39 // pred_region
          %4509 = vsyncadd %s4501, 0
          %s4510 = smul.addr %s19, 2
          %s4511 = smul.addr %s4510, 4
          %s4512 = scalar_lea.hbm %s5, %s4511
          %s4514 = sshll.u32 %s4504, 4
          %s4515 = int_to_ptr.vmem [resolvable:$true] %s4514
          %s4516 = sshll.u32 %s4512, 4
          %s4517 = int_to_ptr.hbm [resolvable:$true] %s4516
          %4519 = dma.vmem_to_hbm [thread:$0]  %s4515, 128, %s4517, %s4501
        $region44: #{tpu_custom_call.1} parent=39 // pred_fallthru
          _
      $region40: #{tpu_custom_call.1} parent=5 // pred_fallthru
        _
      %p4520 = scmp.le.s32.totalorder 2, %s14
      // Predicated region
      $region45: #{tpu_custom_call.1} parent=5 // pred_check
        %p4521 = pneg %p4520
      $region46: #{tpu_custom_call.1} parent=5 // pred_check_branch
        %4523 = sbr.rel (%p4521) target = $region48
      $region47: #{tpu_custom_call.1} parent=5 // pred_region
        %s4524 = ssub.s32 %s14, 2
        // Predicated region
        $region49: #{tpu_custom_call.1} parent=47 // pred_check
          %p4525 = pneg %p153
        $region50: #{tpu_custom_call.1} parent=47 // pred_check_branch
          %4527 = sbr.rel (%p4525) target = $region52
        $region51: #{tpu_custom_call.1} parent=47 // pred_region
          %s4528 = sand.u32 %s138, 1
          %s4529 = scalar_lea.sflag [#allocation5], %s4528
          %s4530 = sand.u32 %s138, 1
          %s4531 = smul.addr %s4530, 8
          %s4532 = scalar_lea.vmem [#allocation4], %s4531
          %4534 = dma.done %s4529, 128
        $region52: #{tpu_custom_call.1} parent=47 // pred_fallthru
          _
      $region48: #{tpu_custom_call.1} parent=5 // pred_fallthru
        _
    $region6: #{tpu_custom_call.1} parent=1 // loop_footer
      %s18 = sadd.s32 1, %s14
    $region7: #{tpu_custom_call.1} parent=1 // loop_footer_branch
      %13 = sbr.rel target = $region3
    $region8: #{tpu_custom_call.1} parent=1 // loop_exit
      _
    %4535 = vsyncpa [#allocation5], 1
    %s4536 = scalar_lea.sflag [#allocation5], 1
    %4537 = vsyncpa %s4536, 1

</llo_original>
